<compile_context>
chip_gen: v6e
topology: v6e:2x2x1
jax: 0.10.0
libtpu: 0.0.40
codegen_flags: <defaults>
</compile_context>

<pallas_src>
import functools

import jax
import jax.numpy as jnp
from jax.experimental import pallas as pl
from jax.experimental.pallas import tpu as pltpu


def _round_up(x, m):
    return (x + m - 1) // m * m


# Repack PyTorch's [i, f, g, o] to [i, f, o, g]: the three sigmoid gates become one
# contiguous (B, 3Hp) slab and tanh gets the trailing (B, Hp) slab.
_GATE_ORDER = (0, 1, 3, 2)


def _pad_packed_gates(w, H, Hp):
    """Repack a PyTorch gate-packed tensor (leading dim 4H) to [i,f,o,g] order with each
    gate zero-padded from H to Hp.  Padding is exact: padded hidden units stay 0."""
    tail = w.shape[1:]
    w4 = w.reshape((4, H) + tail)
    w4 = jnp.stack([w4[g] for g in _GATE_ORDER])
    w4 = jnp.pad(w4, ((0, 0), (0, Hp - H)) + ((0, 0),) * len(tail))
    return w4.reshape((4 * Hp,) + tail)


def _choose_t_block(T, t_block, xp_row_bytes):
    """Pick the time-block size: keep the double-buffered x block under a VMEM budget
    that is safe on v7x (64 MiB physical), and prefer a divisor of T so the per-step
    tail mask is never compiled in."""
    budget = 24 * 1024 * 1024              # streamed-x budget (2 buffers)
    tb = max(1, min(t_block, T))
    while tb > 1 and 2 * tb * xp_row_bytes > budget:
        tb //= 2
    for cand in range(tb, 0, -1):           # prefer divisors of T (no tail mask)
        if T % cand == 0:
            if cand >= max(1, tb // 4):
                return cand, False
            break
    return tb, True


def _lstm_kernel(xp_ref, whh_ref, wfc_ref, bfc_ref, out_ref, h_sc, c_sc, *,
                 hidden_dim, t_block, seq_len, mask_tail, unroll):
    """One grid step = t_block timesteps of the recurrence for one batch shard.

    grid = (batch_shards, Tp // t_block); axis 0 "parallel", axis 1 "arbitrary".
    xp_ref : (t_block, Bs, 4Hp)  precomputed x @ W_ih^T + b      (bf16 or f32)
    whh_ref: (Hp, 4Hp)           recurrent weight, [i,f,o,g]     (bf16 or f32)
    wfc_ref: (Hp, O), bfc_ref: (1, O)                            final linear
    h_sc/c_sc: (Bs, Hp) f32 state, persistent across the time axis.
    """
    tb = pl.program_id(1)
    H = hidden_dim

    @pl.when(tb == 0)
    def _():
        h_sc[...] = jnp.zeros_like(h_sc)
        c_sc[...] = jnp.zeros_like(c_sc)

    whh = whh_ref[...]          # hoisted out of the time loop; grid-invariant
    # TODO(synk): hold W_hh in the MXU across the unrolled loop via
    # pltpu.matmul_push_rhs / matmul_acc_lhs / matmul_pop so the (Hp x 4Hp) weights are
    # not re-streamed every timestep on the serial critical path.

    def step(tt, carry):
        h_prev, c_prev = carry
        # Serial critical path: (Bs, Hp) x (Hp, 4Hp) on the MXU, f32 accumulation.
        gates = (xp_ref[tt].astype(jnp.float32)
                 + jnp.dot(h_prev.astype(whh.dtype), whh,
                           preferred_element_type=jnp.float32))
        # Gates packed [i, f, o, g]: one sigmoid over the contiguous (Bs, 3Hp) slab,
        # one tanh over the trailing (Bs, Hp) slab keeps the EUP FIFO full.
        sig = jax.nn.sigmoid(gates[:, :3 * H])
        i_g = sig[:, 0 * H:1 * H]
        f_g = sig[:, 1 * H:2 * H]
        o_g = sig[:, 2 * H:3 * H]
        g_g = jnp.tanh(gates[:, 3 * H:4 * H])
        c_new = f_g * c_prev + i_g * g_g
        h_new = o_g * jnp.tanh(c_new)
        if mask_tail:
            # Only compiled in when T had to be padded up to a multiple of t_block.
            valid = (tb * t_block + tt) < seq_len
            h_new = jnp.where(valid, h_new, h_prev)
            c_new = jnp.where(valid, c_new, c_prev)
        return h_new, c_new

    h, c = jax.lax.fori_loop(0, t_block, step, (h_sc[...], c_sc[...]),
                             unroll=unroll)
    h_sc[...] = h
    c_sc[...] = c

    @pl.when(tb == pl.num_programs(1) - 1)
    def _():
        out_ref[...] = (jnp.dot(h, wfc_ref[...],
                                preferred_element_type=jnp.float32)
                        + bfc_ref[...]).astype(out_ref.dtype)


def lstm_model_forward(text, params, *, t_block=32, batch_shards=1,
                       whh_dtype=jnp.bfloat16, xp_dtype=jnp.bfloat16):
    """Equivalent of LSTM.forward(text).  text: (B, T) int32 token ids -> (B, O).

    batch_shards > 1 adds a leading "parallel" grid axis over batch so megacore parts
    (v7x: 2 TensorCores) each carry an independent h/c shard; keep 1 at small batch or
    on single-TC chips (v5e/v6e).
    """
    emb_tbl = params["embedding"]                        # (vocab, E)
    B, T = text.shape
    E = emb_tbl.shape[1]
    H = params["w_hh"].shape[1]
    O = params["w_fc"].shape[0]

    Hp = _round_up(max(H, 128), 128)                     # lane-aligned gate width
    Bs = _round_up(max(-(-B // batch_shards), 8), 8)     # rows per shard (f32 sublane)
    Bp = Bs * batch_shards
    xp_bytes = jnp.dtype(xp_dtype).itemsize
    TB, mask_tail = _choose_t_block(T, t_block, Bs * 4 * Hp * xp_bytes)
    Tp = _round_up(T, TB)

    # --- pad / repack PyTorch-layout weights ([i,f,g,o] -> [i,f,o,g], H -> Hp) ---
    w_ih_p = _pad_packed_gates(params["w_ih"], H, Hp)                    # (4Hp, E)
    b_p = _pad_packed_gates(params["b_ih"] + params["b_hh"], H, Hp)      # (4Hp,)
    w_hh_p = _pad_packed_gates(params["w_hh"], H, Hp)                    # (4Hp, H)
    w_hh_p = jnp.pad(w_hh_p, ((0, 0), (0, Hp - H)))                      # (4Hp, Hp)
    w_fc_p = jnp.pad(params["w_fc"], ((0, 0), (0, Hp - H)))              # (O, Hp)

    # --- hoisted input projection: one big matmul, bias folded in (plain XLA glue).
    # Stored in xp_dtype (bf16 by default) to halve the streamed operand; accumulation
    # stays f32 and the kernel upcasts before the gate math.
    prec = jax.lax.Precision.HIGHEST if xp_dtype == jnp.float32 else None
    embedded = jnp.take(emb_tbl, text, axis=0)           # (B, T, E) embedding gather
    tbe = jnp.transpose(embedded, (1, 0, 2))             # (T, B, E) time-major
    x2d = tbe.reshape(T * B, E).astype(xp_dtype)
    x_proj = (jnp.dot(x2d, w_ih_p.T.astype(xp_dtype),
                      preferred_element_type=jnp.float32, precision=prec)
              + b_p).astype(xp_dtype).reshape(T, B, 4 * Hp)
    x_proj = jnp.pad(x_proj, ((0, Tp - T), (0, Bp - B), (0, 0)))         # (Tp, Bp, 4Hp)
    # TODO(synk): for H >> E, move this projection into the kernel at (TB, Bs, E) block
    # granularity to cut HBM traffic from 4Hp*2B to E*2B per element (biggest on v5e).

    kernel = functools.partial(
        _lstm_kernel, hidden_dim=Hp, t_block=TB, seq_len=T,
        mask_tail=mask_tail, unroll=min(8, TB))

    # Explicit VMEM budget (default scoped limit is only 16 MiB on v5e / 32 MiB on v6e+).
    whh_bytes = jnp.dtype(whh_dtype).itemsize
    vmem_need = (2 * TB * Bs * 4 * Hp * xp_bytes           # double-buffered x block
                 + 2 * Hp * 4 * Hp * whh_bytes              # W_hh (worst case 2 bufs)
                 + 2 * (Hp * O * 4 + O * 4)                 # W_fc, b_fc
                 + 2 * Bs * Hp * 4                          # h/c scratch
                 + 2 * Bs * O * 4)                          # output
    vmem_limit = int(min(max(32 * 1024 * 1024, 1.5 * vmem_need), 96 * 1024 * 1024))

    operands = (x_proj, w_hh_p.T.astype(whh_dtype), w_fc_p.T,
                params["b_fc"][None, :])

    def build(single_buffer_weights):
        const_kw = dict(pipeline_mode=pl.Buffered(1)) if single_buffer_weights else {}
        return pl.pallas_call(
            kernel,
            out_shape=jax.ShapeDtypeStruct((Bp, O), jnp.float32),
            grid_spec=pltpu.PrefetchScalarGridSpec(
                num_scalar_prefetch=0,
                grid=(batch_shards, Tp // TB),
                in_specs=[
                    pl.BlockSpec((TB, Bs, 4 * Hp), lambda s, t: (t, s, 0)),   # x proj
                    pl.BlockSpec((Hp, 4 * Hp), lambda s, t: (0, 0), **const_kw),  # W_hh^T
                    pl.BlockSpec((Hp, O), lambda s, t: (0, 0), **const_kw),       # W_fc^T
                    pl.BlockSpec((1, O), lambda s, t: (0, 0), **const_kw),        # b_fc
                ],
                out_specs=pl.BlockSpec((Bs, O), lambda s, t: (s, 0)),
                scratch_shapes=[
                    pltpu.VMEM((Bs, Hp), jnp.float32),                     # h state
                    pltpu.VMEM((Bs, Hp), jnp.float32),                     # c state
                ],
            ),
            compiler_params=pltpu.CompilerParams(
                dimension_semantics=("parallel", "arbitrary"),
                vmem_limit_bytes=vmem_limit),
        )

    try:
        out = build(True)(*operands)     # single-buffer the grid-invariant weights
    except Exception:
        out = build(False)(*operands)    # graceful fallback if pl.Buffered(1) is rejected
    return out[:B]                        # padded batch rows are appended at the end


def _reference_forward(text, params, *, whh_dtype=jnp.bfloat16, xp_dtype=jnp.bfloat16):
    """Pure-JAX reference mirroring the kernel's precision choices (pass jnp.float32 for
    the exact-module-math path)."""
    emb = jnp.take(params["embedding"], text, axis=0)      # (B, T, E)
    B, T, _ = emb.shape
    H = params["w_hh"].shape[1]
    prec = jax.lax.Precision.HIGHEST if xp_dtype == jnp.float32 else None
    b = params["b_ih"] + params["b_hh"]
    xw = (jnp.dot(emb.astype(xp_dtype), params["w_ih"].T.astype(xp_dtype),
                  preferred_element_type=jnp.float32, precision=prec)
          + b).astype(xp_dtype).astype(jnp.float32)        # (B, T, 4H)
    w_hh_t = params["w_hh"].T.astype(whh_dtype)

    def step(carry, x_t):
        h, c = carry
        gates = x_t + jnp.dot(h.astype(whh_dtype), w_hh_t,
                              preferred_element_type=jnp.float32)
        i = jax.nn.sigmoid(gates[:, 0 * H:1 * H])
        f = jax.nn.sigmoid(gates[:, 1 * H:2 * H])
        g = jnp.tanh(gates[:, 2 * H:3 * H])
        o = jax.nn.sigmoid(gates[:, 3 * H:4 * H])
        c = f * c + i * g
        h = o * jnp.tanh(c)
        return (h, c), None

    h0 = jnp.zeros((B, H), jnp.float32)
    c0 = jnp.zeros((B, H), jnp.float32)
    (h_last, _), _ = jax.lax.scan(step, (h0, c0), jnp.transpose(xw, (1, 0, 2)))
    return h_last @ params["w_fc"].T + params["b_fc"]


def init_params(key, input_dim, embedding_dim, hidden_dim, output_dim):
    ks = jax.random.split(key, 7)
    s = 1.0 / jnp.sqrt(hidden_dim)
    return {
        "embedding": jax.random.normal(ks[0], (input_dim, embedding_dim), jnp.float32),
        "w_ih": jax.random.uniform(ks[1], (4 * hidden_dim, embedding_dim), jnp.float32, -s, s),
        "w_hh": jax.random.uniform(ks[2], (4 * hidden_dim, hidden_dim), jnp.float32, -s, s),
        "b_ih": jax.random.uniform(ks[3], (4 * hidden_dim,), jnp.float32, -s, s),
        "b_hh": jax.random.uniform(ks[4], (4 * hidden_dim,), jnp.float32, -s, s),
        "w_fc": jax.random.uniform(ks[5], (output_dim, hidden_dim), jnp.float32, -s, s),
        "b_fc": jax.random.uniform(ks[6], (output_dim,), jnp.float32, -s, s),
    }


if __name__ == "__main__":
    # Small, module-consistent shapes.
    INPUT_DIM = 50      # vocab size
    EMBED_DIM = 32
    HIDDEN_DIM = 32
    OUTPUT_DIM = 8
    BATCH = 2
    SEQ = 8

    key = jax.random.PRNGKey(0)
    k_param, k_text = jax.random.split(key)
    params = init_params(k_param, INPUT_DIM, EMBED_DIM, HIDDEN_DIM, OUTPUT_DIM)
    text = jax.random.randint(k_text, (BATCH, SEQ), 0, INPUT_DIM, dtype=jnp.int32)

    # Fast path: bf16 W_hh + bf16 x_proj, checked against a precision-matched reference.
    out = jax.block_until_ready(lstm_model_forward(text, params))
    ref = jax.block_until_ready(_reference_forward(text, params))
    assert out.shape == (BATCH, OUTPUT_DIM)
    assert jnp.allclose(out, ref, atol=5e-3, rtol=5e-3), "Pallas/ref mismatch (bf16)"

    # Exact-precision path: f32 everywhere, checked against the pure-f32 module math.
    out32 = jax.block_until_ready(
        lstm_model_forward(text, params, whh_dtype=jnp.float32, xp_dtype=jnp.float32))
    ref32 = jax.block_until_ready(
        _reference_forward(text, params, whh_dtype=jnp.float32, xp_dtype=jnp.float32))
    assert jnp.allclose(out32, ref32, atol=2e-4, rtol=2e-4), "Pallas/ref mismatch (f32)"

    print("KERNEL_OK")
</pallas_src>

<mosaic_0001>
module attributes {stable_mosaic.version = 11 : i64} {
  func.func @_lstm_kernel(%arg0: i32, %arg1: i32, %arg2: memref<8x8x512xbf16, #tpu.memory_space<vmem>>, %arg3: memref<128x512xbf16, #tpu.memory_space<vmem>>, %arg4: memref<128x8xf32, #tpu.memory_space<vmem>>, %arg5: memref<1x8xf32, #tpu.memory_space<vmem>>, %arg6: memref<8x8xf32, #tpu.memory_space<vmem>>, %arg7: memref<8x128xf32, #tpu.memory_space<vmem>>, %arg8: memref<8x128xf32, #tpu.memory_space<vmem>>) attributes {dimension_semantics = [#tpu.dimension_semantics<parallel>, #tpu.dimension_semantics<arbitrary>], iteration_bounds = array<i64: 1, 1>, scalar_prefetch = 0 : i64, scratch_operands = 2 : i64, tpu.core_type = #tpu.core_type<tc>, window_params = [{transform_indices = @transform_0, window_bounds = array<i64: 8, 8, 512>}, {pipeline_mode = #tpu.pipeline_mode<synchronous>, transform_indices = @transform_1, window_bounds = array<i64: 128, 512>}, {pipeline_mode = #tpu.pipeline_mode<synchronous>, transform_indices = @transform_2, window_bounds = array<i64: 128, 8>}, {pipeline_mode = #tpu.pipeline_mode<synchronous>, transform_indices = @transform_3, window_bounds = array<i64: 1, 8>}, {transform_indices = @transform_4, window_bounds = array<i64: 8, 8>}]} {
    %c0_i32 = arith.constant 0 : i32
    %0 = arith.cmpi eq, %arg1, %c0_i32 : i32
    %1 = arith.extui %0 : i1 to i32
    %c0_i32_0 = arith.constant 0 : i32
    %2 = arith.cmpi ne, %1, %c0_i32_0 : i32
    scf.if %2 {
      %cst_44 = arith.constant 0.000000e+00 : f32
      %195 = vector.broadcast %cst_44 : f32 to vector<8x128xf32>
      %c0_45 = arith.constant 0 : index
      %c0_46 = arith.constant 0 : index
      %196 = vector.load %arg7[%c0_45, %c0_46] : memref<8x128xf32, #tpu.memory_space<vmem>>, vector<8x128xf32>
      tpu.vector_store %arg7[%c0_45, %c0_46], %195 {strides = array<i32>} : memref<8x128xf32, #tpu.memory_space<vmem>>, vector<8x128xf32>,
      %cst_47 = arith.constant 0.000000e+00 : f32
      %197 = vector.broadcast %cst_47 : f32 to vector<8x128xf32>
      %c0_48 = arith.constant 0 : index
      %c0_49 = arith.constant 0 : index
      %198 = vector.load %arg8[%c0_48, %c0_49] : memref<8x128xf32, #tpu.memory_space<vmem>>, vector<8x128xf32>
      tpu.vector_store %arg8[%c0_48, %c0_49], %197 {strides = array<i32>} : memref<8x128xf32, #tpu.memory_space<vmem>>, vector<8x128xf32>,
    } else {
    }
    %c0 = arith.constant 0 : index
    %c0_1 = arith.constant 0 : index
    %3 = vector.load %arg3[%c0, %c0_1] : memref<128x512xbf16, #tpu.memory_space<vmem>>, vector<128x512xbf16>
    %c0_2 = arith.constant 0 : index
    %c0_3 = arith.constant 0 : index
    %4 = vector.load %arg7[%c0_2, %c0_3] : memref<8x128xf32, #tpu.memory_space<vmem>>, vector<8x128xf32>
    %c0_4 = arith.constant 0 : index
    %c0_5 = arith.constant 0 : index
    %5 = vector.load %arg8[%c0_4, %c0_5] : memref<8x128xf32, #tpu.memory_space<vmem>>, vector<8x128xf32>
    %c0_i32_6 = arith.constant 0 : i32
    %6 = arith.index_cast %c0_i32_6 : i32 to index
    %c0_7 = arith.constant 0 : index
    %c0_8 = arith.constant 0 : index
    %7 = vector.load %arg2[%6, %c0_7, %c0_8] : memref<8x8x512xbf16, #tpu.memory_space<vmem>>, vector<1x8x512xbf16>
    %8 = vector.shape_cast %7 : vector<1x8x512xbf16> to vector<8x512xbf16>
    %9 = arith.extf %8 : vector<8x512xbf16> to vector<8x512xf32>
    %10 = arith.truncf %4 : vector<8x128xf32> to vector<8x128xbf16>
    %cst = arith.constant dense<0.000000e+00> : vector<8x512xf32>
    %11 = tpu.matmul %10, %3, %cst {dimension_numbers = #tpu.dot_dimension_numbers<[1], [0], [0], [1], [0, 0, 1, 1], [], []>} : vector<8x128xbf16>, vector<128x512xbf16>, vector<8x512xf32> -> vector<8x512xf32>
    %12 = arith.addf %9, %11 : vector<8x512xf32>
    %13 = vector.extract_strided_slice %12 {offsets = [0, 0], sizes = [8, 384], strides = [1, 1]} : vector<8x512xf32> to vector<8x384xf32>
    %14 = arith.negf %13 : vector<8x384xf32>
    %15 = math.exp %14 : vector<8x384xf32>
    %cst_9 = arith.constant 1.000000e+00 : f32
    %16 = vector.broadcast %cst_9 : f32 to vector<8x384xf32>
    %17 = arith.addf %16, %15 : vector<8x384xf32>
    %18 = arith.divf %16, %17 : vector<8x384xf32>
    %19 = vector.extract_strided_slice %18 {offsets = [0, 0], sizes = [8, 128], strides = [1, 1]} : vector<8x384xf32> to vector<8x128xf32>
    %20 = vector.extract_strided_slice %18 {offsets = [0, 128], sizes = [8, 128], strides = [1, 1]} : vector<8x384xf32> to vector<8x128xf32>
    %21 = vector.extract_strided_slice %18 {offsets = [0, 256], sizes = [8, 128], strides = [1, 1]} : vector<8x384xf32> to vector<8x128xf32>
    %22 = vector.extract_strided_slice %12 {offsets = [0, 384], sizes = [8, 128], strides = [1, 1]} : vector<8x512xf32> to vector<8x128xf32>
    %23 = math.tanh %22 : vector<8x128xf32>
    %24 = arith.mulf %20, %5 : vector<8x128xf32>
    %25 = arith.mulf %19, %23 : vector<8x128xf32>
    %26 = arith.addf %24, %25 : vector<8x128xf32>
    %27 = math.tanh %26 : vector<8x128xf32>
    %28 = arith.mulf %21, %27 : vector<8x128xf32>
    %c1_i32 = arith.constant 1 : i32
    %29 = arith.index_cast %c1_i32 : i32 to index
    %c0_10 = arith.constant 0 : index
    %c0_11 = arith.constant 0 : index
    %30 = vector.load %arg2[%29, %c0_10, %c0_11] : memref<8x8x512xbf16, #tpu.memory_space<vmem>>, vector<1x8x512xbf16>
    %31 = vector.shape_cast %30 : vector<1x8x512xbf16> to vector<8x512xbf16>
    %32 = arith.extf %31 : vector<8x512xbf16> to vector<8x512xf32>
    %33 = arith.truncf %28 : vector<8x128xf32> to vector<8x128xbf16>
    %cst_12 = arith.constant dense<0.000000e+00> : vector<8x512xf32>
    %34 = tpu.matmul %33, %3, %cst_12 {dimension_numbers = #tpu.dot_dimension_numbers<[1], [0], [0], [1], [0, 0, 1, 1], [], []>} : vector<8x128xbf16>, vector<128x512xbf16>, vector<8x512xf32> -> vector<8x512xf32>
    %35 = arith.addf %32, %34 : vector<8x512xf32>
    %36 = vector.extract_strided_slice %35 {offsets = [0, 0], sizes = [8, 384], strides = [1, 1]} : vector<8x512xf32> to vector<8x384xf32>
    %37 = arith.negf %36 : vector<8x384xf32>
    %38 = math.exp %37 : vector<8x384xf32>
    %cst_13 = arith.constant 1.000000e+00 : f32
    %39 = vector.broadcast %cst_13 : f32 to vector<8x384xf32>
    %40 = arith.addf %39, %38 : vector<8x384xf32>
    %41 = arith.divf %39, %40 : vector<8x384xf32>
    %42 = vector.extract_strided_slice %41 {offsets = [0, 0], sizes = [8, 128], strides = [1, 1]} : vector<8x384xf32> to vector<8x128xf32>
    %43 = vector.extract_strided_slice %41 {offsets = [0, 128], sizes = [8, 128], strides = [1, 1]} : vector<8x384xf32> to vector<8x128xf32>
    %44 = vector.extract_strided_slice %41 {offsets = [0, 256], sizes = [8, 128], strides = [1, 1]} : vector<8x384xf32> to vector<8x128xf32>
    %45 = vector.extract_strided_slice %35 {offsets = [0, 384], sizes = [8, 128], strides = [1, 1]} : vector<8x512xf32> to vector<8x128xf32>
    %46 = math.tanh %45 : vector<8x128xf32>
    %47 = arith.mulf %43, %26 : vector<8x128xf32>
    %48 = arith.mulf %42, %46 : vector<8x128xf32>
    %49 = arith.addf %47, %48 : vector<8x128xf32>
    %50 = math.tanh %49 : vector<8x128xf32>
    %51 = arith.mulf %44, %50 : vector<8x128xf32>
    %c2_i32 = arith.constant 2 : i32
    %52 = arith.index_cast %c2_i32 : i32 to index
    %c0_14 = arith.constant 0 : index
    %c0_15 = arith.constant 0 : index
    %53 = vector.load %arg2[%52, %c0_14, %c0_15] : memref<8x8x512xbf16, #tpu.memory_space<vmem>>, vector<1x8x512xbf16>
    %54 = vector.shape_cast %53 : vector<1x8x512xbf16> to vector<8x512xbf16>
    %55 = arith.extf %54 : vector<8x512xbf16> to vector<8x512xf32>
    %56 = arith.truncf %51 : vector<8x128xf32> to vector<8x128xbf16>
    %cst_16 = arith.constant dense<0.000000e+00> : vector<8x512xf32>
    %57 = tpu.matmul %56, %3, %cst_16 {dimension_numbers = #tpu.dot_dimension_numbers<[1], [0], [0], [1], [0, 0, 1, 1], [], []>} : vector<8x128xbf16>, vector<128x512xbf16>, vector<8x512xf32> -> vector<8x512xf32>
    %58 = arith.addf %55, %57 : vector<8x512xf32>
    %59 = vector.extract_strided_slice %58 {offsets = [0, 0], sizes = [8, 384], strides = [1, 1]} : vector<8x512xf32> to vector<8x384xf32>
    %60 = arith.negf %59 : vector<8x384xf32>
    %61 = math.exp %60 : vector<8x384xf32>
    %cst_17 = arith.constant 1.000000e+00 : f32
    %62 = vector.broadcast %cst_17 : f32 to vector<8x384xf32>
    %63 = arith.addf %62, %61 : vector<8x384xf32>
    %64 = arith.divf %62, %63 : vector<8x384xf32>
    %65 = vector.extract_strided_slice %64 {offsets = [0, 0], sizes = [8, 128], strides = [1, 1]} : vector<8x384xf32> to vector<8x128xf32>
    %66 = vector.extract_strided_slice %64 {offsets = [0, 128], sizes = [8, 128], strides = [1, 1]} : vector<8x384xf32> to vector<8x128xf32>
    %67 = vector.extract_strided_slice %64 {offsets = [0, 256], sizes = [8, 128], strides = [1, 1]} : vector<8x384xf32> to vector<8x128xf32>
    %68 = vector.extract_strided_slice %58 {offsets = [0, 384], sizes = [8, 128], strides = [1, 1]} : vector<8x512xf32> to vector<8x128xf32>
    %69 = math.tanh %68 : vector<8x128xf32>
    %70 = arith.mulf %66, %49 : vector<8x128xf32>
    %71 = arith.mulf %65, %69 : vector<8x128xf32>
    %72 = arith.addf %70, %71 : vector<8x128xf32>
    %73 = math.tanh %72 : vector<8x128xf32>
    %74 = arith.mulf %67, %73 : vector<8x128xf32>
    %c3_i32 = arith.constant 3 : i32
    %75 = arith.index_cast %c3_i32 : i32 to index
    %c0_18 = arith.constant 0 : index
    %c0_19 = arith.constant 0 : index
    %76 = vector.load %arg2[%75, %c0_18, %c0_19] : memref<8x8x512xbf16, #tpu.memory_space<vmem>>, vector<1x8x512xbf16>
    %77 = vector.shape_cast %76 : vector<1x8x512xbf16> to vector<8x512xbf16>
    %78 = arith.extf %77 : vector<8x512xbf16> to vector<8x512xf32>
    %79 = arith.truncf %74 : vector<8x128xf32> to vector<8x128xbf16>
    %cst_20 = arith.constant dense<0.000000e+00> : vector<8x512xf32>
    %80 = tpu.matmul %79, %3, %cst_20 {dimension_numbers = #tpu.dot_dimension_numbers<[1], [0], [0], [1], [0, 0, 1, 1], [], []>} : vector<8x128xbf16>, vector<128x512xbf16>, vector<8x512xf32> -> vector<8x512xf32>
    %81 = arith.addf %78, %80 : vector<8x512xf32>
    %82 = vector.extract_strided_slice %81 {offsets = [0, 0], sizes = [8, 384], strides = [1, 1]} : vector<8x512xf32> to vector<8x384xf32>
    %83 = arith.negf %82 : vector<8x384xf32>
    %84 = math.exp %83 : vector<8x384xf32>
    %cst_21 = arith.constant 1.000000e+00 : f32
    %85 = vector.broadcast %cst_21 : f32 to vector<8x384xf32>
    %86 = arith.addf %85, %84 : vector<8x384xf32>
    %87 = arith.divf %85, %86 : vector<8x384xf32>
    %88 = vector.extract_strided_slice %87 {offsets = [0, 0], sizes = [8, 128], strides = [1, 1]} : vector<8x384xf32> to vector<8x128xf32>
    %89 = vector.extract_strided_slice %87 {offsets = [0, 128], sizes = [8, 128], strides = [1, 1]} : vector<8x384xf32> to vector<8x128xf32>
    %90 = vector.extract_strided_slice %87 {offsets = [0, 256], sizes = [8, 128], strides = [1, 1]} : vector<8x384xf32> to vector<8x128xf32>
    %91 = vector.extract_strided_slice %81 {offsets = [0, 384], sizes = [8, 128], strides = [1, 1]} : vector<8x512xf32> to vector<8x128xf32>
    %92 = math.tanh %91 : vector<8x128xf32>
    %93 = arith.mulf %89, %72 : vector<8x128xf32>
    %94 = arith.mulf %88, %92 : vector<8x128xf32>
    %95 = arith.addf %93, %94 : vector<8x128xf32>
    %96 = math.tanh %95 : vector<8x128xf32>
    %97 = arith.mulf %90, %96 : vector<8x128xf32>
    %c4_i32 = arith.constant 4 : i32
    %98 = arith.index_cast %c4_i32 : i32 to index
    %c0_22 = arith.constant 0 : index
    %c0_23 = arith.constant 0 : index
    %99 = vector.load %arg2[%98, %c0_22, %c0_23] : memref<8x8x512xbf16, #tpu.memory_space<vmem>>, vector<1x8x512xbf16>
    %100 = vector.shape_cast %99 : vector<1x8x512xbf16> to vector<8x512xbf16>
    %101 = arith.extf %100 : vector<8x512xbf16> to vector<8x512xf32>
    %102 = arith.truncf %97 : vector<8x128xf32> to vector<8x128xbf16>
    %cst_24 = arith.constant dense<0.000000e+00> : vector<8x512xf32>
    %103 = tpu.matmul %102, %3, %cst_24 {dimension_numbers = #tpu.dot_dimension_numbers<[1], [0], [0], [1], [0, 0, 1, 1], [], []>} : vector<8x128xbf16>, vector<128x512xbf16>, vector<8x512xf32> -> vector<8x512xf32>
    %104 = arith.addf %101, %103 : vector<8x512xf32>
    %105 = vector.extract_strided_slice %104 {offsets = [0, 0], sizes = [8, 384], strides = [1, 1]} : vector<8x512xf32> to vector<8x384xf32>
    %106 = arith.negf %105 : vector<8x384xf32>
    %107 = math.exp %106 : vector<8x384xf32>
    %cst_25 = arith.constant 1.000000e+00 : f32
    %108 = vector.broadcast %cst_25 : f32 to vector<8x384xf32>
    %109 = arith.addf %108, %107 : vector<8x384xf32>
    %110 = arith.divf %108, %109 : vector<8x384xf32>
    %111 = vector.extract_strided_slice %110 {offsets = [0, 0], sizes = [8, 128], strides = [1, 1]} : vector<8x384xf32> to vector<8x128xf32>
    %112 = vector.extract_strided_slice %110 {offsets = [0, 128], sizes = [8, 128], strides = [1, 1]} : vector<8x384xf32> to vector<8x128xf32>
    %113 = vector.extract_strided_slice %110 {offsets = [0, 256], sizes = [8, 128], strides = [1, 1]} : vector<8x384xf32> to vector<8x128xf32>
    %114 = vector.extract_strided_slice %104 {offsets = [0, 384], sizes = [8, 128], strides = [1, 1]} : vector<8x512xf32> to vector<8x128xf32>
    %115 = math.tanh %114 : vector<8x128xf32>
    %116 = arith.mulf %112, %95 : vector<8x128xf32>
    %117 = arith.mulf %111, %115 : vector<8x128xf32>
    %118 = arith.addf %116, %117 : vector<8x128xf32>
    %119 = math.tanh %118 : vector<8x128xf32>
    %120 = arith.mulf %113, %119 : vector<8x128xf32>
    %c5_i32 = arith.constant 5 : i32
    %121 = arith.index_cast %c5_i32 : i32 to index
    %c0_26 = arith.constant 0 : index
    %c0_27 = arith.constant 0 : index
    %122 = vector.load %arg2[%121, %c0_26, %c0_27] : memref<8x8x512xbf16, #tpu.memory_space<vmem>>, vector<1x8x512xbf16>
    %123 = vector.shape_cast %122 : vector<1x8x512xbf16> to vector<8x512xbf16>
    %124 = arith.extf %123 : vector<8x512xbf16> to vector<8x512xf32>
    %125 = arith.truncf %120 : vector<8x128xf32> to vector<8x128xbf16>
    %cst_28 = arith.constant dense<0.000000e+00> : vector<8x512xf32>
    %126 = tpu.matmul %125, %3, %cst_28 {dimension_numbers = #tpu.dot_dimension_numbers<[1], [0], [0], [1], [0, 0, 1, 1], [], []>} : vector<8x128xbf16>, vector<128x512xbf16>, vector<8x512xf32> -> vector<8x512xf32>
    %127 = arith.addf %124, %126 : vector<8x512xf32>
    %128 = vector.extract_strided_slice %127 {offsets = [0, 0], sizes = [8, 384], strides = [1, 1]} : vector<8x512xf32> to vector<8x384xf32>
    %129 = arith.negf %128 : vector<8x384xf32>
    %130 = math.exp %129 : vector<8x384xf32>
    %cst_29 = arith.constant 1.000000e+00 : f32
    %131 = vector.broadcast %cst_29 : f32 to vector<8x384xf32>
    %132 = arith.addf %131, %130 : vector<8x384xf32>
    %133 = arith.divf %131, %132 : vector<8x384xf32>
    %134 = vector.extract_strided_slice %133 {offsets = [0, 0], sizes = [8, 128], strides = [1, 1]} : vector<8x384xf32> to vector<8x128xf32>
    %135 = vector.extract_strided_slice %133 {offsets = [0, 128], sizes = [8, 128], strides = [1, 1]} : vector<8x384xf32> to vector<8x128xf32>
    %136 = vector.extract_strided_slice %133 {offsets = [0, 256], sizes = [8, 128], strides = [1, 1]} : vector<8x384xf32> to vector<8x128xf32>
    %137 = vector.extract_strided_slice %127 {offsets = [0, 384], sizes = [8, 128], strides = [1, 1]} : vector<8x512xf32> to vector<8x128xf32>
    %138 = math.tanh %137 : vector<8x128xf32>
    %139 = arith.mulf %135, %118 : vector<8x128xf32>
    %140 = arith.mulf %134, %138 : vector<8x128xf32>
    %141 = arith.addf %139, %140 : vector<8x128xf32>
    %142 = math.tanh %141 : vector<8x128xf32>
    %143 = arith.mulf %136, %142 : vector<8x128xf32>
    %c6_i32 = arith.constant 6 : i32
    %144 = arith.index_cast %c6_i32 : i32 to index
    %c0_30 = arith.constant 0 : index
    %c0_31 = arith.constant 0 : index
    %145 = vector.load %arg2[%144, %c0_30, %c0_31] : memref<8x8x512xbf16, #tpu.memory_space<vmem>>, vector<1x8x512xbf16>
    %146 = vector.shape_cast %145 : vector<1x8x512xbf16> to vector<8x512xbf16>
    %147 = arith.extf %146 : vector<8x512xbf16> to vector<8x512xf32>
    %148 = arith.truncf %143 : vector<8x128xf32> to vector<8x128xbf16>
    %cst_32 = arith.constant dense<0.000000e+00> : vector<8x512xf32>
    %149 = tpu.matmul %148, %3, %cst_32 {dimension_numbers = #tpu.dot_dimension_numbers<[1], [0], [0], [1], [0, 0, 1, 1], [], []>} : vector<8x128xbf16>, vector<128x512xbf16>, vector<8x512xf32> -> vector<8x512xf32>
    %150 = arith.addf %147, %149 : vector<8x512xf32>
    %151 = vector.extract_strided_slice %150 {offsets = [0, 0], sizes = [8, 384], strides = [1, 1]} : vector<8x512xf32> to vector<8x384xf32>
    %152 = arith.negf %151 : vector<8x384xf32>
    %153 = math.exp %152 : vector<8x384xf32>
    %cst_33 = arith.constant 1.000000e+00 : f32
    %154 = vector.broadcast %cst_33 : f32 to vector<8x384xf32>
    %155 = arith.addf %154, %153 : vector<8x384xf32>
    %156 = arith.divf %154, %155 : vector<8x384xf32>
    %157 = vector.extract_strided_slice %156 {offsets = [0, 0], sizes = [8, 128], strides = [1, 1]} : vector<8x384xf32> to vector<8x128xf32>
    %158 = vector.extract_strided_slice %156 {offsets = [0, 128], sizes = [8, 128], strides = [1, 1]} : vector<8x384xf32> to vector<8x128xf32>
    %159 = vector.extract_strided_slice %156 {offsets = [0, 256], sizes = [8, 128], strides = [1, 1]} : vector<8x384xf32> to vector<8x128xf32>
    %160 = vector.extract_strided_slice %150 {offsets = [0, 384], sizes = [8, 128], strides = [1, 1]} : vector<8x512xf32> to vector<8x128xf32>
    %161 = math.tanh %160 : vector<8x128xf32>
    %162 = arith.mulf %158, %141 : vector<8x128xf32>
    %163 = arith.mulf %157, %161 : vector<8x128xf32>
    %164 = arith.addf %162, %163 : vector<8x128xf32>
    %165 = math.tanh %164 : vector<8x128xf32>
    %166 = arith.mulf %159, %165 : vector<8x128xf32>
    %c7_i32 = arith.constant 7 : i32
    %167 = arith.index_cast %c7_i32 : i32 to index
    %c0_34 = arith.constant 0 : index
    %c0_35 = arith.constant 0 : index
    %168 = vector.load %arg2[%167, %c0_34, %c0_35] : memref<8x8x512xbf16, #tpu.memory_space<vmem>>, vector<1x8x512xbf16>
    %169 = vector.shape_cast %168 : vector<1x8x512xbf16> to vector<8x512xbf16>
    %170 = arith.extf %169 : vector<8x512xbf16> to vector<8x512xf32>
    %171 = arith.truncf %166 : vector<8x128xf32> to vector<8x128xbf16>
    %cst_36 = arith.constant dense<0.000000e+00> : vector<8x512xf32>
    %172 = tpu.matmul %171, %3, %cst_36 {dimension_numbers = #tpu.dot_dimension_numbers<[1], [0], [0], [1], [0, 0, 1, 1], [], []>} : vector<8x128xbf16>, vector<128x512xbf16>, vector<8x512xf32> -> vector<8x512xf32>
    %173 = arith.addf %170, %172 : vector<8x512xf32>
    %174 = vector.extract_strided_slice %173 {offsets = [0, 0], sizes = [8, 384], strides = [1, 1]} : vector<8x512xf32> to vector<8x384xf32>
    %175 = arith.negf %174 : vector<8x384xf32>
    %176 = math.exp %175 : vector<8x384xf32>
    %cst_37 = arith.constant 1.000000e+00 : f32
    %177 = vector.broadcast %cst_37 : f32 to vector<8x384xf32>
    %178 = arith.addf %177, %176 : vector<8x384xf32>
    %179 = arith.divf %177, %178 : vector<8x384xf32>
    %180 = vector.extract_strided_slice %179 {offsets = [0, 0], sizes = [8, 128], strides = [1, 1]} : vector<8x384xf32> to vector<8x128xf32>
    %181 = vector.extract_strided_slice %179 {offsets = [0, 128], sizes = [8, 128], strides = [1, 1]} : vector<8x384xf32> to vector<8x128xf32>
    %182 = vector.extract_strided_slice %179 {offsets = [0, 256], sizes = [8, 128], strides = [1, 1]} : vector<8x384xf32> to vector<8x128xf32>
    %183 = vector.extract_strided_slice %173 {offsets = [0, 384], sizes = [8, 128], strides = [1, 1]} : vector<8x512xf32> to vector<8x128xf32>
    %184 = math.tanh %183 : vector<8x128xf32>
    %185 = arith.mulf %181, %164 : vector<8x128xf32>
    %186 = arith.mulf %180, %184 : vector<8x128xf32>
    %187 = arith.addf %185, %186 : vector<8x128xf32>
    %188 = math.tanh %187 : vector<8x128xf32>
    %189 = arith.mulf %182, %188 : vector<8x128xf32>
    %c8_i32 = arith.constant 8 : i32
    %c0_38 = arith.constant 0 : index
    %c0_39 = arith.constant 0 : index
    %190 = vector.load %arg7[%c0_38, %c0_39] : memref<8x128xf32, #tpu.memory_space<vmem>>, vector<8x128xf32>
    tpu.vector_store %arg7[%c0_38, %c0_39], %189 {strides = array<i32>} : memref<8x128xf32, #tpu.memory_space<vmem>>, vector<8x128xf32>,
    %c0_40 = arith.constant 0 : index
    %c0_41 = arith.constant 0 : index
    %191 = vector.load %arg8[%c0_40, %c0_41] : memref<8x128xf32, #tpu.memory_space<vmem>>, vector<8x128xf32>
    tpu.vector_store %arg8[%c0_40, %c0_41], %187 {strides = array<i32>} : memref<8x128xf32, #tpu.memory_space<vmem>>, vector<8x128xf32>,
    %c0_i32_42 = arith.constant 0 : i32
    %192 = arith.cmpi eq, %arg1, %c0_i32_42 : i32
    %193 = arith.extui %192 : i1 to i32
    %c0_i32_43 = arith.constant 0 : i32
    %194 = arith.cmpi ne, %193, %c0_i32_43 : i32
    scf.if %194 {
      %c0_44 = arith.constant 0 : index
      %c0_45 = arith.constant 0 : index
      %195 = vector.load %arg4[%c0_44, %c0_45] : memref<128x8xf32, #tpu.memory_space<vmem>>, vector<128x8xf32>
      %cst_46 = arith.constant dense<0.000000e+00> : vector<8x8xf32>
      %196 = tpu.matmul %189, %195, %cst_46 {dimension_numbers = #tpu.dot_dimension_numbers<[1], [0], [0], [1], [0, 0, 1, 1], [], []>} : vector<8x128xf32>, vector<128x8xf32>, vector<8x8xf32> -> vector<8x8xf32>
      %c0_47 = arith.constant 0 : index
      %c0_48 = arith.constant 0 : index
      %197 = vector.load %arg5[%c0_47, %c0_48] : memref<1x8xf32, #tpu.memory_space<vmem>>, vector<1x8xf32>
      %198 = vector.broadcast %197 : vector<1x8xf32> to vector<8x8xf32>
      %199 = arith.addf %196, %198 : vector<8x8xf32>
      %c0_49 = arith.constant 0 : index
      %c0_50 = arith.constant 0 : index
      %200 = vector.load %arg6[%c0_49, %c0_50] : memref<8x8xf32, #tpu.memory_space<vmem>>, vector<8x8xf32>
      tpu.vector_store %arg6[%c0_49, %c0_50], %199 {strides = array<i32>} : memref<8x8xf32, #tpu.memory_space<vmem>>, vector<8x8xf32>,
    } else {
    }
    return
  }
  func.func @transform_0(%arg0: i32, %arg1: i32) -> (i32, i32, i32) {
    %c0_i32 = arith.constant 0 : i32
    %c0_i32_0 = arith.constant 0 : i32
    return %arg1, %arg0, %c0_i32 : i32, i32, i32
  }
  func.func @transform_1(%arg0: i32, %arg1: i32) -> (i32, i32) {
    %c0_i32 = arith.constant 0 : i32
    %c0_i32_0 = arith.constant 0 : i32
    %c0_i32_1 = arith.constant 0 : i32
    return %c0_i32, %c0_i32_0 : i32, i32
  }
  func.func @transform_2(%arg0: i32, %arg1: i32) -> (i32, i32) {
    %c0_i32 = arith.constant 0 : i32
    %c0_i32_0 = arith.constant 0 : i32
    %c0_i32_1 = arith.constant 0 : i32
    return %c0_i32, %c0_i32_0 : i32, i32
  }
  func.func @transform_3(%arg0: i32, %arg1: i32) -> (i32, i32) {
    %c0_i32 = arith.constant 0 : i32
    %c0_i32_0 = arith.constant 0 : i32
    %c0_i32_1 = arith.constant 0 : i32
    return %c0_i32, %c0_i32_0 : i32, i32
  }
  func.func @transform_4(%arg0: i32, %arg1: i32) -> (i32, i32) {
    %c0_i32 = arith.constant 0 : i32
    %c0_i32_0 = arith.constant 0 : i32
    return %arg0, %c0_i32 : i32, i32
  }
}

module attributes {stable_mosaic.version = 11 : i64} {
  func.func @_lstm_kernel(%arg0: i32, %arg1: i32, %arg2: memref<8x8x512xbf16, #tpu.memory_space<vmem>>, %arg3: memref<128x512xbf16, #tpu.memory_space<vmem>>, %arg4: memref<128x8xf32, #tpu.memory_space<vmem>>, %arg5: memref<1x8xf32, #tpu.memory_space<vmem>>, %arg6: memref<8x8xf32, #tpu.memory_space<vmem>>, %arg7: memref<8x128xf32, #tpu.memory_space<vmem>>, %arg8: memref<8x128xf32, #tpu.memory_space<vmem>>) attributes {dimension_semantics = [#tpu.dimension_semantics<parallel>, #tpu.dimension_semantics<arbitrary>], iteration_bounds = array<i64: 1, 1>, scalar_prefetch = 0 : i64, scratch_operands = 2 : i64, tpu.core_type = #tpu.core_type<tc>, window_params = [{transform_indices = @transform_0, window_bounds = array<i64: 8, 8, 512>}, {pipeline_mode = #tpu.pipeline_mode<synchronous>, transform_indices = @transform_1, window_bounds = array<i64: 128, 512>}, {pipeline_mode = #tpu.pipeline_mode<synchronous>, transform_indices = @transform_2, window_bounds = array<i64: 128, 8>}, {pipeline_mode = #tpu.pipeline_mode<synchronous>, transform_indices = @transform_3, window_bounds = array<i64: 1, 8>}, {transform_indices = @transform_4, window_bounds = array<i64: 8, 8>}]} {
    %c0_i32 = arith.constant 0 : i32
    %0 = arith.cmpi eq, %arg1, %c0_i32 : i32
    %1 = arith.extui %0 : i1 to i32
    %c0_i32_0 = arith.constant 0 : i32
    %2 = arith.cmpi ne, %1, %c0_i32_0 : i32
    scf.if %2 {
      %cst_44 = arith.constant 0.000000e+00 : f32
      %195 = vector.broadcast %cst_44 : f32 to vector<8x128xf32>
      %c0_45 = arith.constant 0 : index
      %c0_46 = arith.constant 0 : index
      %196 = vector.load %arg7[%c0_45, %c0_46] : memref<8x128xf32, #tpu.memory_space<vmem>>, vector<8x128xf32>
      tpu.vector_store %arg7[%c0_45, %c0_46], %195 {strides = array<i32>} : memref<8x128xf32, #tpu.memory_space<vmem>>, vector<8x128xf32>,
      %cst_47 = arith.constant 0.000000e+00 : f32
      %197 = vector.broadcast %cst_47 : f32 to vector<8x128xf32>
      %c0_48 = arith.constant 0 : index
      %c0_49 = arith.constant 0 : index
      %198 = vector.load %arg8[%c0_48, %c0_49] : memref<8x128xf32, #tpu.memory_space<vmem>>, vector<8x128xf32>
      tpu.vector_store %arg8[%c0_48, %c0_49], %197 {strides = array<i32>} : memref<8x128xf32, #tpu.memory_space<vmem>>, vector<8x128xf32>,
    } else {
    }
    %c0 = arith.constant 0 : index
    %c0_1 = arith.constant 0 : index
    %3 = vector.load %arg3[%c0, %c0_1] : memref<128x512xbf16, #tpu.memory_space<vmem>>, vector<128x512xbf16>
    %c0_2 = arith.constant 0 : index
    %c0_3 = arith.constant 0 : index
    %4 = vector.load %arg7[%c0_2, %c0_3] : memref<8x128xf32, #tpu.memory_space<vmem>>, vector<8x128xf32>
    %c0_4 = arith.constant 0 : index
    %c0_5 = arith.constant 0 : index
    %5 = vector.load %arg8[%c0_4, %c0_5] : memref<8x128xf32, #tpu.memory_space<vmem>>, vector<8x128xf32>
    %c0_i32_6 = arith.constant 0 : i32
    %6 = arith.index_cast %c0_i32_6 : i32 to index
    %c0_7 = arith.constant 0 : index
    %c0_8 = arith.constant 0 : index
    %7 = vector.load %arg2[%6, %c0_7, %c0_8] : memref<8x8x512xbf16, #tpu.memory_space<vmem>>, vector<1x8x512xbf16>
    %8 = vector.shape_cast %7 : vector<1x8x512xbf16> to vector<8x512xbf16>
    %9 = arith.extf %8 : vector<8x512xbf16> to vector<8x512xf32>
    %10 = arith.truncf %4 : vector<8x128xf32> to vector<8x128xbf16>
    %cst = arith.constant dense<0.000000e+00> : vector<8x512xf32>
    %11 = tpu.matmul %10, %3, %cst {dimension_numbers = #tpu.dot_dimension_numbers<[1], [0], [0], [1], [0, 0, 1, 1], [], []>} : vector<8x128xbf16>, vector<128x512xbf16>, vector<8x512xf32> -> vector<8x512xf32>
    %12 = arith.addf %9, %11 : vector<8x512xf32>
    %13 = vector.extract_strided_slice %12 {offsets = [0, 0], sizes = [8, 384], strides = [1, 1]} : vector<8x512xf32> to vector<8x384xf32>
    %14 = arith.negf %13 : vector<8x384xf32>
    %15 = math.exp %14 : vector<8x384xf32>
    %cst_9 = arith.constant 1.000000e+00 : f32
    %16 = vector.broadcast %cst_9 : f32 to vector<8x384xf32>
    %17 = arith.addf %16, %15 : vector<8x384xf32>
    %18 = arith.divf %16, %17 : vector<8x384xf32>
    %19 = vector.extract_strided_slice %18 {offsets = [0, 0], sizes = [8, 128], strides = [1, 1]} : vector<8x384xf32> to vector<8x128xf32>
    %20 = vector.extract_strided_slice %18 {offsets = [0, 128], sizes = [8, 128], strides = [1, 1]} : vector<8x384xf32> to vector<8x128xf32>
    %21 = vector.extract_strided_slice %18 {offsets = [0, 256], sizes = [8, 128], strides = [1, 1]} : vector<8x384xf32> to vector<8x128xf32>
    %22 = vector.extract_strided_slice %12 {offsets = [0, 384], sizes = [8, 128], strides = [1, 1]} : vector<8x512xf32> to vector<8x128xf32>
    %23 = math.tanh %22 : vector<8x128xf32>
    %24 = arith.mulf %20, %5 : vector<8x128xf32>
    %25 = arith.mulf %19, %23 : vector<8x128xf32>
    %26 = arith.addf %24, %25 : vector<8x128xf32>
    %27 = math.tanh %26 : vector<8x128xf32>
    %28 = arith.mulf %21, %27 : vector<8x128xf32>
    %c1_i32 = arith.constant 1 : i32
    %29 = arith.index_cast %c1_i32 : i32 to index
    %c0_10 = arith.constant 0 : index
    %c0_11 = arith.constant 0 : index
    %30 = vector.load %arg2[%29, %c0_10, %c0_11] : memref<8x8x512xbf16, #tpu.memory_space<vmem>>, vector<1x8x512xbf16>
    %31 = vector.shape_cast %30 : vector<1x8x512xbf16> to vector<8x512xbf16>
    %32 = arith.extf %31 : vector<8x512xbf16> to vector<8x512xf32>
    %33 = arith.truncf %28 : vector<8x128xf32> to vector<8x128xbf16>
    %cst_12 = arith.constant dense<0.000000e+00> : vector<8x512xf32>
    %34 = tpu.matmul %33, %3, %cst_12 {dimension_numbers = #tpu.dot_dimension_numbers<[1], [0], [0], [1], [0, 0, 1, 1], [], []>} : vector<8x128xbf16>, vector<128x512xbf16>, vector<8x512xf32> -> vector<8x512xf32>
    %35 = arith.addf %32, %34 : vector<8x512xf32>
    %36 = vector.extract_strided_slice %35 {offsets = [0, 0], sizes = [8, 384], strides = [1, 1]} : vector<8x512xf32> to vector<8x384xf32>
    %37 = arith.negf %36 : vector<8x384xf32>
    %38 = math.exp %37 : vector<8x384xf32>
    %cst_13 = arith.constant 1.000000e+00 : f32
    %39 = vector.broadcast %cst_13 : f32 to vector<8x384xf32>
    %40 = arith.addf %39, %38 : vector<8x384xf32>
    %41 = arith.divf %39, %40 : vector<8x384xf32>
    %42 = vector.extract_strided_slice %41 {offsets = [0, 0], sizes = [8, 128], strides = [1, 1]} : vector<8x384xf32> to vector<8x128xf32>
    %43 = vector.extract_strided_slice %41 {offsets = [0, 128], sizes = [8, 128], strides = [1, 1]} : vector<8x384xf32> to vector<8x128xf32>
    %44 = vector.extract_strided_slice %41 {offsets = [0, 256], sizes = [8, 128], strides = [1, 1]} : vector<8x384xf32> to vector<8x128xf32>
    %45 = vector.extract_strided_slice %35 {offsets = [0, 384], sizes = [8, 128], strides = [1, 1]} : vector<8x512xf32> to vector<8x128xf32>
    %46 = math.tanh %45 : vector<8x128xf32>
    %47 = arith.mulf %43, %26 : vector<8x128xf32>
    %48 = arith.mulf %42, %46 : vector<8x128xf32>
    %49 = arith.addf %47, %48 : vector<8x128xf32>
    %50 = math.tanh %49 : vector<8x128xf32>
    %51 = arith.mulf %44, %50 : vector<8x128xf32>
    %c2_i32 = arith.constant 2 : i32
    %52 = arith.index_cast %c2_i32 : i32 to index
    %c0_14 = arith.constant 0 : index
    %c0_15 = arith.constant 0 : index
    %53 = vector.load %arg2[%52, %c0_14, %c0_15] : memref<8x8x512xbf16, #tpu.memory_space<vmem>>, vector<1x8x512xbf16>
    %54 = vector.shape_cast %53 : vector<1x8x512xbf16> to vector<8x512xbf16>
    %55 = arith.extf %54 : vector<8x512xbf16> to vector<8x512xf32>
    %56 = arith.truncf %51 : vector<8x128xf32> to vector<8x128xbf16>
    %cst_16 = arith.constant dense<0.000000e+00> : vector<8x512xf32>
    %57 = tpu.matmul %56, %3, %cst_16 {dimension_numbers = #tpu.dot_dimension_numbers<[1], [0], [0], [1], [0, 0, 1, 1], [], []>} : vector<8x128xbf16>, vector<128x512xbf16>, vector<8x512xf32> -> vector<8x512xf32>
    %58 = arith.addf %55, %57 : vector<8x512xf32>
    %59 = vector.extract_strided_slice %58 {offsets = [0, 0], sizes = [8, 384], strides = [1, 1]} : vector<8x512xf32> to vector<8x384xf32>
    %60 = arith.negf %59 : vector<8x384xf32>
    %61 = math.exp %60 : vector<8x384xf32>
    %cst_17 = arith.constant 1.000000e+00 : f32
    %62 = vector.broadcast %cst_17 : f32 to vector<8x384xf32>
    %63 = arith.addf %62, %61 : vector<8x384xf32>
    %64 = arith.divf %62, %63 : vector<8x384xf32>
    %65 = vector.extract_strided_slice %64 {offsets = [0, 0], sizes = [8, 128], strides = [1, 1]} : vector<8x384xf32> to vector<8x128xf32>
    %66 = vector.extract_strided_slice %64 {offsets = [0, 128], sizes = [8, 128], strides = [1, 1]} : vector<8x384xf32> to vector<8x128xf32>
    %67 = vector.extract_strided_slice %64 {offsets = [0, 256], sizes = [8, 128], strides = [1, 1]} : vector<8x384xf32> to vector<8x128xf32>
    %68 = vector.extract_strided_slice %58 {offsets = [0, 384], sizes = [8, 128], strides = [1, 1]} : vector<8x512xf32> to vector<8x128xf32>
    %69 = math.tanh %68 : vector<8x128xf32>
    %70 = arith.mulf %66, %49 : vector<8x128xf32>
    %71 = arith.mulf %65, %69 : vector<8x128xf32>
    %72 = arith.addf %70, %71 : vector<8x128xf32>
    %73 = math.tanh %72 : vector<8x128xf32>
    %74 = arith.mulf %67, %73 : vector<8x128xf32>
    %c3_i32 = arith.constant 3 : i32
    %75 = arith.index_cast %c3_i32 : i32 to index
    %c0_18 = arith.constant 0 : index
    %c0_19 = arith.constant 0 : index
    %76 = vector.load %arg2[%75, %c0_18, %c0_19] : memref<8x8x512xbf16, #tpu.memory_space<vmem>>, vector<1x8x512xbf16>
    %77 = vector.shape_cast %76 : vector<1x8x512xbf16> to vector<8x512xbf16>
    %78 = arith.extf %77 : vector<8x512xbf16> to vector<8x512xf32>
    %79 = arith.truncf %74 : vector<8x128xf32> to vector<8x128xbf16>
    %cst_20 = arith.constant dense<0.000000e+00> : vector<8x512xf32>
    %80 = tpu.matmul %79, %3, %cst_20 {dimension_numbers = #tpu.dot_dimension_numbers<[1], [0], [0], [1], [0, 0, 1, 1], [], []>} : vector<8x128xbf16>, vector<128x512xbf16>, vector<8x512xf32> -> vector<8x512xf32>
    %81 = arith.addf %78, %80 : vector<8x512xf32>
    %82 = vector.extract_strided_slice %81 {offsets = [0, 0], sizes = [8, 384], strides = [1, 1]} : vector<8x512xf32> to vector<8x384xf32>
    %83 = arith.negf %82 : vector<8x384xf32>
    %84 = math.exp %83 : vector<8x384xf32>
    %cst_21 = arith.constant 1.000000e+00 : f32
    %85 = vector.broadcast %cst_21 : f32 to vector<8x384xf32>
    %86 = arith.addf %85, %84 : vector<8x384xf32>
    %87 = arith.divf %85, %86 : vector<8x384xf32>
    %88 = vector.extract_strided_slice %87 {offsets = [0, 0], sizes = [8, 128], strides = [1, 1]} : vector<8x384xf32> to vector<8x128xf32>
    %89 = vector.extract_strided_slice %87 {offsets = [0, 128], sizes = [8, 128], strides = [1, 1]} : vector<8x384xf32> to vector<8x128xf32>
    %90 = vector.extract_strided_slice %87 {offsets = [0, 256], sizes = [8, 128], strides = [1, 1]} : vector<8x384xf32> to vector<8x128xf32>
    %91 = vector.extract_strided_slice %81 {offsets = [0, 384], sizes = [8, 128], strides = [1, 1]} : vector<8x512xf32> to vector<8x128xf32>
    %92 = math.tanh %91 : vector<8x128xf32>
    %93 = arith.mulf %89, %72 : vector<8x128xf32>
    %94 = arith.mulf %88, %92 : vector<8x128xf32>
    %95 = arith.addf %93, %94 : vector<8x128xf32>
    %96 = math.tanh %95 : vector<8x128xf32>
    %97 = arith.mulf %90, %96 : vector<8x128xf32>
    %c4_i32 = arith.constant 4 : i32
    %98 = arith.index_cast %c4_i32 : i32 to index
    %c0_22 = arith.constant 0 : index
    %c0_23 = arith.constant 0 : index
    %99 = vector.load %arg2[%98, %c0_22, %c0_23] : memref<8x8x512xbf16, #tpu.memory_space<vmem>>, vector<1x8x512xbf16>
    %100 = vector.shape_cast %99 : vector<1x8x512xbf16> to vector<8x512xbf16>
    %101 = arith.extf %100 : vector<8x512xbf16> to vector<8x512xf32>
    %102 = arith.truncf %97 : vector<8x128xf32> to vector<8x128xbf16>
    %cst_24 = arith.constant dense<0.000000e+00> : vector<8x512xf32>
    %103 = tpu.matmul %102, %3, %cst_24 {dimension_numbers = #tpu.dot_dimension_numbers<[1], [0], [0], [1], [0, 0, 1, 1], [], []>} : vector<8x128xbf16>, vector<128x512xbf16>, vector<8x512xf32> -> vector<8x512xf32>
    %104 = arith.addf %101, %103 : vector<8x512xf32>
    %105 = vector.extract_strided_slice %104 {offsets = [0, 0], sizes = [8, 384], strides = [1, 1]} : vector<8x512xf32> to vector<8x384xf32>
    %106 = arith.negf %105 : vector<8x384xf32>
    %107 = math.exp %106 : vector<8x384xf32>
    %cst_25 = arith.constant 1.000000e+00 : f32
    %108 = vector.broadcast %cst_25 : f32 to vector<8x384xf32>
    %109 = arith.addf %108, %107 : vector<8x384xf32>
    %110 = arith.divf %108, %109 : vector<8x384xf32>
    %111 = vector.extract_strided_slice %110 {offsets = [0, 0], sizes = [8, 128], strides = [1, 1]} : vector<8x384xf32> to vector<8x128xf32>
    %112 = vector.extract_strided_slice %110 {offsets = [0, 128], sizes = [8, 128], strides = [1, 1]} : vector<8x384xf32> to vector<8x128xf32>
    %113 = vector.extract_strided_slice %110 {offsets = [0, 256], sizes = [8, 128], strides = [1, 1]} : vector<8x384xf32> to vector<8x128xf32>
    %114 = vector.extract_strided_slice %104 {offsets = [0, 384], sizes = [8, 128], strides = [1, 1]} : vector<8x512xf32> to vector<8x128xf32>
    %115 = math.tanh %114 : vector<8x128xf32>
    %116 = arith.mulf %112, %95 : vector<8x128xf32>
    %117 = arith.mulf %111, %115 : vector<8x128xf32>
    %118 = arith.addf %116, %117 : vector<8x128xf32>
    %119 = math.tanh %118 : vector<8x128xf32>
    %120 = arith.mulf %113, %119 : vector<8x128xf32>
    %c5_i32 = arith.constant 5 : i32
    %121 = arith.index_cast %c5_i32 : i32 to index
    %c0_26 = arith.constant 0 : index
    %c0_27 = arith.constant 0 : index
    %122 = vector.load %arg2[%121, %c0_26, %c0_27] : memref<8x8x512xbf16, #tpu.memory_space<vmem>>, vector<1x8x512xbf16>
    %123 = vector.shape_cast %122 : vector<1x8x512xbf16> to vector<8x512xbf16>
    %124 = arith.extf %123 : vector<8x512xbf16> to vector<8x512xf32>
    %125 = arith.truncf %120 : vector<8x128xf32> to vector<8x128xbf16>
    %cst_28 = arith.constant dense<0.000000e+00> : vector<8x512xf32>
    %126 = tpu.matmul %125, %3, %cst_28 {dimension_numbers = #tpu.dot_dimension_numbers<[1], [0], [0], [1], [0, 0, 1, 1], [], []>} : vector<8x128xbf16>, vector<128x512xbf16>, vector<8x512xf32> -> vector<8x512xf32>
    %127 = arith.addf %124, %126 : vector<8x512xf32>
    %128 = vector.extract_strided_slice %127 {offsets = [0, 0], sizes = [8, 384], strides = [1, 1]} : vector<8x512xf32> to vector<8x384xf32>
    %129 = arith.negf %128 : vector<8x384xf32>
    %130 = math.exp %129 : vector<8x384xf32>
    %cst_29 = arith.constant 1.000000e+00 : f32
    %131 = vector.broadcast %cst_29 : f32 to vector<8x384xf32>
    %132 = arith.addf %131, %130 : vector<8x384xf32>
    %133 = arith.divf %131, %132 : vector<8x384xf32>
    %134 = vector.extract_strided_slice %133 {offsets = [0, 0], sizes = [8, 128], strides = [1, 1]} : vector<8x384xf32> to vector<8x128xf32>
    %135 = vector.extract_strided_slice %133 {offsets = [0, 128], sizes = [8, 128], strides = [1, 1]} : vector<8x384xf32> to vector<8x128xf32>
    %136 = vector.extract_strided_slice %133 {offsets = [0, 256], sizes = [8, 128], strides = [1, 1]} : vector<8x384xf32> to vector<8x128xf32>
    %137 = vector.extract_strided_slice %127 {offsets = [0, 384], sizes = [8, 128], strides = [1, 1]} : vector<8x512xf32> to vector<8x128xf32>
    %138 = math.tanh %137 : vector<8x128xf32>
    %139 = arith.mulf %135, %118 : vector<8x128xf32>
    %140 = arith.mulf %134, %138 : vector<8x128xf32>
    %141 = arith.addf %139, %140 : vector<8x128xf32>
    %142 = math.tanh %141 : vector<8x128xf32>
    %143 = arith.mulf %136, %142 : vector<8x128xf32>
    %c6_i32 = arith.constant 6 : i32
    %144 = arith.index_cast %c6_i32 : i32 to index
    %c0_30 = arith.constant 0 : index
    %c0_31 = arith.constant 0 : index
    %145 = vector.load %arg2[%144, %c0_30, %c0_31] : memref<8x8x512xbf16, #tpu.memory_space<vmem>>, vector<1x8x512xbf16>
    %146 = vector.shape_cast %145 : vector<1x8x512xbf16> to vector<8x512xbf16>
    %147 = arith.extf %146 : vector<8x512xbf16> to vector<8x512xf32>
    %148 = arith.truncf %143 : vector<8x128xf32> to vector<8x128xbf16>
    %cst_32 = arith.constant dense<0.000000e+00> : vector<8x512xf32>
    %149 = tpu.matmul %148, %3, %cst_32 {dimension_numbers = #tpu.dot_dimension_numbers<[1], [0], [0], [1], [0, 0, 1, 1], [], []>} : vector<8x128xbf16>, vector<128x512xbf16>, vector<8x512xf32> -> vector<8x512xf32>
    %150 = arith.addf %147, %149 : vector<8x512xf32>
    %151 = vector.extract_strided_slice %150 {offsets = [0, 0], sizes = [8, 384], strides = [1, 1]} : vector<8x512xf32> to vector<8x384xf32>
    %152 = arith.negf %151 : vector<8x384xf32>
    %153 = math.exp %152 : vector<8x384xf32>
    %cst_33 = arith.constant 1.000000e+00 : f32
    %154 = vector.broadcast %cst_33 : f32 to vector<8x384xf32>
    %155 = arith.addf %154, %153 : vector<8x384xf32>
    %156 = arith.divf %154, %155 : vector<8x384xf32>
    %157 = vector.extract_strided_slice %156 {offsets = [0, 0], sizes = [8, 128], strides = [1, 1]} : vector<8x384xf32> to vector<8x128xf32>
    %158 = vector.extract_strided_slice %156 {offsets = [0, 128], sizes = [8, 128], strides = [1, 1]} : vector<8x384xf32> to vector<8x128xf32>
    %159 = vector.extract_strided_slice %156 {offsets = [0, 256], sizes = [8, 128], strides = [1, 1]} : vector<8x384xf32> to vector<8x128xf32>
    %160 = vector.extract_strided_slice %150 {offsets = [0, 384], sizes = [8, 128], strides = [1, 1]} : vector<8x512xf32> to vector<8x128xf32>
    %161 = math.tanh %160 : vector<8x128xf32>
    %162 = arith.mulf %158, %141 : vector<8x128xf32>
    %163 = arith.mulf %157, %161 : vector<8x128xf32>
    %164 = arith.addf %162, %163 : vector<8x128xf32>
    %165 = math.tanh %164 : vector<8x128xf32>
    %166 = arith.mulf %159, %165 : vector<8x128xf32>
    %c7_i32 = arith.constant 7 : i32
    %167 = arith.index_cast %c7_i32 : i32 to index
    %c0_34 = arith.constant 0 : index
    %c0_35 = arith.constant 0 : index
    %168 = vector.load %arg2[%167, %c0_34, %c0_35] : memref<8x8x512xbf16, #tpu.memory_space<vmem>>, vector<1x8x512xbf16>
    %169 = vector.shape_cast %168 : vector<1x8x512xbf16> to vector<8x512xbf16>
    %170 = arith.extf %169 : vector<8x512xbf16> to vector<8x512xf32>
    %171 = arith.truncf %166 : vector<8x128xf32> to vector<8x128xbf16>
    %cst_36 = arith.constant dense<0.000000e+00> : vector<8x512xf32>
    %172 = tpu.matmul %171, %3, %cst_36 {dimension_numbers = #tpu.dot_dimension_numbers<[1], [0], [0], [1], [0, 0, 1, 1], [], []>} : vector<8x128xbf16>, vector<128x512xbf16>, vector<8x512xf32> -> vector<8x512xf32>
    %173 = arith.addf %170, %172 : vector<8x512xf32>
    %174 = vector.extract_strided_slice %173 {offsets = [0, 0], sizes = [8, 384], strides = [1, 1]} : vector<8x512xf32> to vector<8x384xf32>
    %175 = arith.negf %174 : vector<8x384xf32>
    %176 = math.exp %175 : vector<8x384xf32>
    %cst_37 = arith.constant 1.000000e+00 : f32
    %177 = vector.broadcast %cst_37 : f32 to vector<8x384xf32>
    %178 = arith.addf %177, %176 : vector<8x384xf32>
    %179 = arith.divf %177, %178 : vector<8x384xf32>
    %180 = vector.extract_strided_slice %179 {offsets = [0, 0], sizes = [8, 128], strides = [1, 1]} : vector<8x384xf32> to vector<8x128xf32>
    %181 = vector.extract_strided_slice %179 {offsets = [0, 128], sizes = [8, 128], strides = [1, 1]} : vector<8x384xf32> to vector<8x128xf32>
    %182 = vector.extract_strided_slice %179 {offsets = [0, 256], sizes = [8, 128], strides = [1, 1]} : vector<8x384xf32> to vector<8x128xf32>
    %183 = vector.extract_strided_slice %173 {offsets = [0, 384], sizes = [8, 128], strides = [1, 1]} : vector<8x512xf32> to vector<8x128xf32>
    %184 = math.tanh %183 : vector<8x128xf32>
    %185 = arith.mulf %181, %164 : vector<8x128xf32>
    %186 = arith.mulf %180, %184 : vector<8x128xf32>
    %187 = arith.addf %185, %186 : vector<8x128xf32>
    %188 = math.tanh %187 : vector<8x128xf32>
    %189 = arith.mulf %182, %188 : vector<8x128xf32>
    %c8_i32 = arith.constant 8 : i32
    %c0_38 = arith.constant 0 : index
    %c0_39 = arith.constant 0 : index
    %190 = vector.load %arg7[%c0_38, %c0_39] : memref<8x128xf32, #tpu.memory_space<vmem>>, vector<8x128xf32>
    tpu.vector_store %arg7[%c0_38, %c0_39], %189 {strides = array<i32>} : memref<8x128xf32, #tpu.memory_space<vmem>>, vector<8x128xf32>,
    %c0_40 = arith.constant 0 : index
    %c0_41 = arith.constant 0 : index
    %191 = vector.load %arg8[%c0_40, %c0_41] : memref<8x128xf32, #tpu.memory_space<vmem>>, vector<8x128xf32>
    tpu.vector_store %arg8[%c0_40, %c0_41], %187 {strides = array<i32>} : memref<8x128xf32, #tpu.memory_space<vmem>>, vector<8x128xf32>,
    %c0_i32_42 = arith.constant 0 : i32
    %192 = arith.cmpi eq, %arg1, %c0_i32_42 : i32
    %193 = arith.extui %192 : i1 to i32
    %c0_i32_43 = arith.constant 0 : i32
    %194 = arith.cmpi ne, %193, %c0_i32_43 : i32
    scf.if %194 {
      %c0_44 = arith.constant 0 : index
      %c0_45 = arith.constant 0 : index
      %195 = vector.load %arg4[%c0_44, %c0_45] : memref<128x8xf32, #tpu.memory_space<vmem>>, vector<128x8xf32>
      %cst_46 = arith.constant dense<0.000000e+00> : vector<8x8xf32>
      %196 = tpu.matmul %189, %195, %cst_46 {dimension_numbers = #tpu.dot_dimension_numbers<[1], [0], [0], [1], [0, 0, 1, 1], [], []>} : vector<8x128xf32>, vector<128x8xf32>, vector<8x8xf32> -> vector<8x8xf32>
      %c0_47 = arith.constant 0 : index
      %c0_48 = arith.constant 0 : index
      %197 = vector.load %arg5[%c0_47, %c0_48] : memref<1x8xf32, #tpu.memory_space<vmem>>, vector<1x8xf32>
      %198 = vector.broadcast %197 : vector<1x8xf32> to vector<8x8xf32>
      %199 = arith.addf %196, %198 : vector<8x8xf32>
      %c0_49 = arith.constant 0 : index
      %c0_50 = arith.constant 0 : index
      %200 = vector.load %arg6[%c0_49, %c0_50] : memref<8x8xf32, #tpu.memory_space<vmem>>, vector<8x8xf32>
      tpu.vector_store %arg6[%c0_49, %c0_50], %199 {strides = array<i32>} : memref<8x8xf32, #tpu.memory_space<vmem>>, vector<8x8xf32>,
    } else {
    }
    return
  }
  func.func @transform_0(%arg0: i32, %arg1: i32) -> (i32, i32, i32) {
    %c0_i32 = arith.constant 0 : i32
    %c0_i32_0 = arith.constant 0 : i32
    return %arg1, %arg0, %c0_i32 : i32, i32, i32
  }
  func.func @transform_1(%arg0: i32, %arg1: i32) -> (i32, i32) {
    %c0_i32 = arith.constant 0 : i32
    %c0_i32_0 = arith.constant 0 : i32
    %c0_i32_1 = arith.constant 0 : i32
    return %c0_i32, %c0_i32_0 : i32, i32
  }
  func.func @transform_2(%arg0: i32, %arg1: i32) -> (i32, i32) {
    %c0_i32 = arith.constant 0 : i32
    %c0_i32_0 = arith.constant 0 : i32
    %c0_i32_1 = arith.constant 0 : i32
    return %c0_i32, %c0_i32_0 : i32, i32
  }
  func.func @transform_3(%arg0: i32, %arg1: i32) -> (i32, i32) {
    %c0_i32 = arith.constant 0 : i32
    %c0_i32_0 = arith.constant 0 : i32
    %c0_i32_1 = arith.constant 0 : i32
    return %c0_i32, %c0_i32_0 : i32, i32
  }
  func.func @transform_4(%arg0: i32, %arg1: i32) -> (i32, i32) {
    %c0_i32 = arith.constant 0 : i32
    %c0_i32_0 = arith.constant 0 : i32
    return %arg0, %c0_i32 : i32, i32
  }
}

</mosaic_0001>

<llo_original>
// kernel: tpu_custom_call.1
$region0: #{tpu_custom_call.1}
  #allocation0 [shape = 'u32[]', space=smem, size = 0x4, offset = 0x4, fixed_abs, tag = 'smem constant byte address 0x4 - core index']
  #allocation1 [shape = 'u32[144,128]{1,0:T(1,128)}', space=vmem, size = 0x12000, scoped, tag = 'internal scratch']
  #allocation2 [shape = 'f32[8,128]{1,0:T(8,128)}', space=vmem, size = 0x1000, scoped, tag = 'scratch operand']
  #allocation3 [shape = 'f32[8,128]{1,0:T(8,128)}', space=vmem, size = 0x1000, scoped, tag = 'scratch operand']
  %s0 = inlined_call_operand.vmem [shape: bf16[8,8,512], index: 0, kind: input, shape index: {}]
  %s1 = inlined_call_operand.hbm [shape: bf16[128,512], index: 1, kind: input, shape index: {}]
  %s2 = inlined_call_operand.vmem [shape: f32[128,8], index: 2, kind: input, shape index: {}]
  %s3 = inlined_call_operand.vmem [shape: f32[1,8], index: 3, kind: input, shape index: {}]
  %s4 = inlined_call_operand.hbm [shape: f32[8,8], index: 4, kind: output, shape index: {}]
  %s5 = sld [smem:[#allocation0]]
  $region38: #{tpu_custom_call.1} parent=0
    _
  %s7 = ssub.s32 1, %s5
  %s8 = scalar_select 0, %s7, %s5
  $region1: #{tpu_custom_call.1} parent=0
    #allocation4 [shape = 'u8[131072]{0}', space=vmem, size = 0x20000, scoped, tag = 'input window, operand 1, single buffered']
    #allocation5 [shape = 's32[1]{0}', space=sflag, size = 0x4, scoped, tag = 'scoped memory for tpu_custom_call.1']
    #allocation6 [shape = 's32[1]{0}', space=sflag, size = 0x4, scoped, tag = 'scoped memory for tpu_custom_call.1']
    #allocation7 [shape = 'u8[4096]{0}', space=vmem, size = 0x1000, scoped, tag = 'output window, operand 0, single buffered']
    %9 = vsyncpa [#allocation5], 0
    %10 = vsyncpa [#allocation6], 0
    // Predicated region
    $region2: #{tpu_custom_call.1} parent=1 // pred_check
      _
    $region3: #{tpu_custom_call.1} parent=1 // pred_check_branch
      %12 = sbr.rel (0) target = $region5
    $region4: #{tpu_custom_call.1} parent=1 // pred_region
      _
    $region5: #{tpu_custom_call.1} parent=1 // pred_fallthru
      _
    // Predicated region
    $region6: #{tpu_custom_call.1} parent=1 // pred_check
      _
    $region7: #{tpu_custom_call.1} parent=1 // pred_check_branch
      %14 = sbr.rel (0) target = $region9
    $region8: #{tpu_custom_call.1} parent=1 // pred_region
      %s16 = ssub.s32 4096, 4096
      %17 = vsyncadd [#allocation5], %s16
      %s18 = sshll.u32 [#allocation4], 4
      %s19 = int_to_ptr.vmem [resolvable:$true] %s18
      %24 = dma.hbm_to_vmem [thread:$0]  %s1, 4096, %s19, [#allocation5], 256, 256, 16
    $region9: #{tpu_custom_call.1} parent=1 // pred_fallthru
      _
    // Predicated region
    $region10: #{tpu_custom_call.1} parent=1 // pred_check
      _
    $region11: #{tpu_custom_call.1} parent=1 // pred_check_branch
      %26 = sbr.rel (0) target = $region13
    $region12: #{tpu_custom_call.1} parent=1 // pred_region
      _
    $region13: #{tpu_custom_call.1} parent=1 // pred_fallthru
      _
    // Predicated region
    $region14: #{tpu_custom_call.1} parent=1 // pred_check
      _
    $region15: #{tpu_custom_call.1} parent=1 // pred_check_branch
      %28 = sbr.rel (0) target = $region17
    $region16: #{tpu_custom_call.1} parent=1 // pred_region
      _
    $region17: #{tpu_custom_call.1} parent=1 // pred_fallthru
      _
    // Predicated region
    $region18: #{tpu_custom_call.1} parent=1 // pred_check
      _
    $region19: #{tpu_custom_call.1} parent=1 // pred_check_branch
      %30 = sbr.rel (0) target = $region21
    $region20: #{tpu_custom_call.1} parent=1 // pred_region
      %31 = dma.done [#allocation5], 4096
    $region21: #{tpu_custom_call.1} parent=1 // pred_fallthru
      _
    %p33 = scmp.eq.s32.totalorder 0, 0
    // Predicated region
    $region22: #{tpu_custom_call.1} parent=1 // pred_check
      %p34 = pneg %p33
    $region23: #{tpu_custom_call.1} parent=1 // pred_check_branch
      %36 = sbr.rel (%p34) target = $region25
    $region24: #{tpu_custom_call.1} parent=1 // pred_region
      %37 = vst [vmem:[#allocation2] sm:$0xff] 0.0
      %38 = vst [vmem:[#allocation3] sm:$0xff] 0.0
    $region25: #{tpu_custom_call.1} parent=1 // pred_fallthru
      _
    %v39 = vld [vmem:[#allocation4] sm:$0xff]
    %v40 = vld [vmem:[#allocation4 + $0x8] sm:$0xff]
    %v41 = vld [vmem:[#allocation4 + $0x10] sm:$0xff]
    %v42 = vld [vmem:[#allocation4 + $0x18] sm:$0xff]
    %v43 = vld [vmem:[#allocation4 + $0x20] sm:$0xff]
    %v44 = vld [vmem:[#allocation4 + $0x28] sm:$0xff]
    %v45 = vld [vmem:[#allocation4 + $0x30] sm:$0xff]
    %v46 = vld [vmem:[#allocation4 + $0x38] sm:$0xff]
    %v47 = vld [vmem:[#allocation4 + $0x40] sm:$0xff]
    %v48 = vld [vmem:[#allocation4 + $0x48] sm:$0xff]
    %v49 = vld [vmem:[#allocation4 + $0x50] sm:$0xff]
    %v50 = vld [vmem:[#allocation4 + $0x58] sm:$0xff]
    %v51 = vld [vmem:[#allocation4 + $0x60] sm:$0xff]
    %v52 = vld [vmem:[#allocation4 + $0x68] sm:$0xff]
    %v53 = vld [vmem:[#allocation4 + $0x70] sm:$0xff]
    %v54 = vld [vmem:[#allocation4 + $0x78] sm:$0xff]
    %v55 = vld [vmem:[#allocation4 + $0x80] sm:$0xff]
    %v56 = vld [vmem:[#allocation4 + $0x88] sm:$0xff]
    %v57 = vld [vmem:[#allocation4 + $0x90] sm:$0xff]
    %v58 = vld [vmem:[#allocation4 + $0x98] sm:$0xff]
    %v59 = vld [vmem:[#allocation4 + $0xa0] sm:$0xff]
    %v60 = vld [vmem:[#allocation4 + $0xa8] sm:$0xff]
    %v61 = vld [vmem:[#allocation4 + $0xb0] sm:$0xff]
    %v62 = vld [vmem:[#allocation4 + $0xb8] sm:$0xff]
    %v63 = vld [vmem:[#allocation4 + $0xc0] sm:$0xff]
    %v64 = vld [vmem:[#allocation4 + $0xc8] sm:$0xff]
    %v65 = vld [vmem:[#allocation4 + $0xd0] sm:$0xff]
    %v66 = vld [vmem:[#allocation4 + $0xd8] sm:$0xff]
    %v67 = vld [vmem:[#allocation4 + $0xe0] sm:$0xff]
    %v68 = vld [vmem:[#allocation4 + $0xe8] sm:$0xff]
    %v69 = vld [vmem:[#allocation4 + $0xf0] sm:$0xff]
    %v70 = vld [vmem:[#allocation4 + $0xf8] sm:$0xff]
    %v71 = vld [vmem:[#allocation2] sm:$0xff]
    %v72 = vld [vmem:[#allocation3] sm:$0xff]
    %v73 = vld [vmem:[%s0] sm:$0xff]
    %v74 = vld [vmem:[%s0 + $0x8] sm:$0xff]
    %v75 = vunpack.c.l.bf16 %v73
    %v76 = vunpack.c.h.bf16 %v73
    %v77 = vunpack.c.l.bf16 %v74
    %v78 = vunpack.c.h.bf16 %v74
    %v79 = vpack.c.bf16 %v71, %v71
    %v112 = vunpack.c.l.b16 %v39
    %v113 = vunpack.c.h.b16 %v39
    %v114 = vunpack.c.l.b16 %v40
    %v115 = vunpack.c.h.b16 %v40
    %v116 = vunpack.c.l.b16 %v41
    %v117 = vunpack.c.h.b16 %v41
    %v118 = vunpack.c.l.b16 %v42
    %v119 = vunpack.c.h.b16 %v42
    %v120 = vunpack.c.l.b16 %v43
    %v121 = vunpack.c.h.b16 %v43
    %v122 = vunpack.c.l.b16 %v44
    %v123 = vunpack.c.h.b16 %v44
    %v124 = vunpack.c.l.b16 %v45
    %v125 = vunpack.c.h.b16 %v45
    %v126 = vunpack.c.l.b16 %v46
    %v127 = vunpack.c.h.b16 %v46
    %v128 = vunpack.c.l.b16 %v47
    %v129 = vunpack.c.h.b16 %v47
    %v130 = vunpack.c.l.b16 %v48
    %v131 = vunpack.c.h.b16 %v48
    %v132 = vunpack.c.l.b16 %v49
    %v133 = vunpack.c.h.b16 %v49
    %v134 = vunpack.c.l.b16 %v50
    %v135 = vunpack.c.h.b16 %v50
    %v136 = vunpack.c.l.b16 %v51
    %v137 = vunpack.c.h.b16 %v51
    %v138 = vunpack.c.l.b16 %v52
    %v139 = vunpack.c.h.b16 %v52
    %v140 = vunpack.c.l.b16 %v53
    %v141 = vunpack.c.h.b16 %v53
    %v142 = vunpack.c.l.b16 %v54
    %v143 = vunpack.c.h.b16 %v54
    %v144 = vunpack.c.l.b16 %v55
    %v145 = vunpack.c.h.b16 %v55
    %v146 = vunpack.c.l.b16 %v56
    %v147 = vunpack.c.h.b16 %v56
    %v148 = vunpack.c.l.b16 %v57
    %v149 = vunpack.c.h.b16 %v57
    %v150 = vunpack.c.l.b16 %v58
    %v151 = vunpack.c.h.b16 %v58
    %v152 = vunpack.c.l.b16 %v59
    %v153 = vunpack.c.h.b16 %v59
    %v154 = vunpack.c.l.b16 %v60
    %v155 = vunpack.c.h.b16 %v60
    %v156 = vunpack.c.l.b16 %v61
    %v157 = vunpack.c.h.b16 %v61
    %v158 = vunpack.c.l.b16 %v62
    %v159 = vunpack.c.h.b16 %v62
    %v160 = vunpack.c.l.b16 %v63
    %v161 = vunpack.c.h.b16 %v63
    %v162 = vunpack.c.l.b16 %v64
    %v163 = vunpack.c.h.b16 %v64
    %v164 = vunpack.c.l.b16 %v65
    %v165 = vunpack.c.h.b16 %v65
    %v166 = vunpack.c.l.b16 %v66
    %v167 = vunpack.c.h.b16 %v66
    %v168 = vunpack.c.l.b16 %v67
    %v169 = vunpack.c.h.b16 %v67
    %v170 = vunpack.c.l.b16 %v68
    %v171 = vunpack.c.h.b16 %v68
    %v172 = vunpack.c.l.b16 %v69
    %v173 = vunpack.c.h.b16 %v69
    %v174 = vunpack.c.l.b16 %v70
    %v175 = vunpack.c.h.b16 %v70
    %v176 = vpack.c.b16 %v116, %v112
    %v177 = vpack.c.b16 %v117, %v113
    %v178 = vpack.c.b16 %v118, %v114
    %v179 = vpack.c.b16 %v119, %v115
    %v180 = vpack.c.b16 %v124, %v120
    %v181 = vpack.c.b16 %v125, %v121
    %v182 = vpack.c.b16 %v126, %v122
    %v183 = vpack.c.b16 %v127, %v123
    %v184 = vpack.c.b16 %v132, %v128
    %v185 = vpack.c.b16 %v133, %v129
    %v186 = vpack.c.b16 %v134, %v130
    %v187 = vpack.c.b16 %v135, %v131
    %v188 = vpack.c.b16 %v140, %v136
    %v189 = vpack.c.b16 %v141, %v137
    %v190 = vpack.c.b16 %v142, %v138
    %v191 = vpack.c.b16 %v143, %v139
    %v192 = vpack.c.b16 %v148, %v144
    %v193 = vpack.c.b16 %v149, %v145
    %v194 = vpack.c.b16 %v150, %v146
    %v195 = vpack.c.b16 %v151, %v147
    %v196 = vpack.c.b16 %v156, %v152
    %v197 = vpack.c.b16 %v157, %v153
    %v198 = vpack.c.b16 %v158, %v154
    %v199 = vpack.c.b16 %v159, %v155
    %v200 = vpack.c.b16 %v164, %v160
    %v201 = vpack.c.b16 %v165, %v161
    %v202 = vpack.c.b16 %v166, %v162
    %v203 = vpack.c.b16 %v167, %v163
    %v204 = vpack.c.b16 %v172, %v168
    %v205 = vpack.c.b16 %v173, %v169
    %v206 = vpack.c.b16 %v174, %v170
    %v207 = vpack.c.b16 %v175, %v171
    %240 = vmatprep.subr.bf16.mxu0 %v205
    %241 = vmatpush1.bf16.msra.mxu0 %v204
    %242 = vmatprep.subr.bf16.mxu0 %v201
    %243 = vmatpush1.bf16.msra.mxu0 %v200
    %244 = vmatprep.subr.bf16.mxu0 %v197
    %245 = vmatpush1.bf16.msra.mxu0 %v196
    %246 = vmatprep.subr.bf16.mxu0 %v193
    %247 = vmatpush1.bf16.msra.mxu0 %v192
    %248 = vmatprep.subr.bf16.mxu0 %v189
    %249 = vmatpush1.bf16.msra.mxu0 %v188
    %250 = vmatprep.subr.bf16.mxu0 %v185
    %251 = vmatpush1.bf16.msra.mxu0 %v184
    %252 = vmatprep.subr.bf16.mxu0 %v181
    %253 = vmatpush1.bf16.msra.mxu0 %v180
    %254 = vmatprep.subr.bf16.mxu0 %v177
    %255 = vmatpush1.bf16.msra.mxu0 %v176
    %256 = vmatprep.subr.bf16.mxu0 0
    %257 = vmatpush2.bf16.msra.mxu0 0
    %258 = vmatprep.subr.bf16.mxu0 0
    %259 = vmatpush2.bf16.msra.mxu0 0
    %260 = vmatprep.subr.bf16.mxu0 0
    %261 = vmatpush2.bf16.msra.mxu0 0
    %262 = vmatprep.subr.bf16.mxu0 0
    %263 = vmatpush2.bf16.msra.mxu0 0
    %264 = vmatprep.subr.bf16.mxu0 0
    %265 = vmatpush2.bf16.msra.mxu0 0
    %266 = vmatprep.subr.bf16.mxu0 0
    %267 = vmatpush2.bf16.msra.mxu0 0
    %268 = vmatprep.subr.bf16.mxu0 0
    %269 = vmatpush2.bf16.msra.mxu0 0
    %270 = vmatprep.subr.bf16.mxu0 0
    %271 = vmatpush2.bf16.msra.mxu0 0
    %272 = vmatprep.mubr.bf16.mxu0 0
    %273 = vmatmul.mubr.bf16.gmra.mxu0 %v79
    %v274 = vpop.f32.mrf.mxu0
    %v275 = vadd.f32 0.0, %v274
    %v276 = vpop.f32.mrf.mxu0
    %v277 = vadd.f32 0.0, %v276
    %v278 = vpop.f32.mrf.mxu0
    %v279 = vpop.f32.mrf.mxu0
    %280 = vdwg.mxu0
    %281 = vmatprep.subr.bf16.mxu0 %v207
    %282 = vmatpush1.bf16.msra.mxu0 %v206
    %283 = vmatprep.subr.bf16.mxu0 %v203
    %284 = vmatpush1.bf16.msra.mxu0 %v202
    %285 = vmatprep.subr.bf16.mxu0 %v199
    %286 = vmatpush1.bf16.msra.mxu0 %v198
    %287 = vmatprep.subr.bf16.mxu0 %v195
    %288 = vmatpush1.bf16.msra.mxu0 %v194
    %289 = vmatprep.subr.bf16.mxu0 %v191
    %290 = vmatpush1.bf16.msra.mxu0 %v190
    %291 = vmatprep.subr.bf16.mxu0 %v187
    %292 = vmatpush1.bf16.msra.mxu0 %v186
    %293 = vmatprep.subr.bf16.mxu0 %v183
    %294 = vmatpush1.bf16.msra.mxu0 %v182
    %295 = vmatprep.subr.bf16.mxu0 %v179
    %296 = vmatpush1.bf16.msra.mxu0 %v178
    %297 = vmatprep.subr.bf16.mxu0 0
    %298 = vmatpush2.bf16.msra.mxu0 0
    %299 = vmatprep.subr.bf16.mxu0 0
    %300 = vmatpush2.bf16.msra.mxu0 0
    %301 = vmatprep.subr.bf16.mxu0 0
    %302 = vmatpush2.bf16.msra.mxu0 0
    %303 = vmatprep.subr.bf16.mxu0 0
    %304 = vmatpush2.bf16.msra.mxu0 0
    %305 = vmatprep.subr.bf16.mxu0 0
    %306 = vmatpush2.bf16.msra.mxu0 0
    %307 = vmatprep.subr.bf16.mxu0 0
    %308 = vmatpush2.bf16.msra.mxu0 0
    %309 = vmatprep.subr.bf16.mxu0 0
    %310 = vmatpush2.bf16.msra.mxu0 0
    %311 = vmatprep.subr.bf16.mxu0 0
    %312 = vmatpush2.bf16.msra.mxu0 0
    %313 = vmatprep.mubr.bf16.mxu0 0
    %314 = vmatmul.mubr.bf16.gmra.mxu0 %v79
    %v315 = vpop.f32.mrf.mxu0
    %v316 = vadd.f32 0.0, %v315
    %v317 = vpop.f32.mrf.mxu0
    %v318 = vadd.f32 0.0, %v317
    %v319 = vpop.f32.mrf.mxu0
    %v320 = vpop.f32.mrf.mxu0
    %321 = vdwg.mxu0
    %v322 = vadd.f32 %v75, %v275
    %v323 = vadd.f32 %v76, %v277
    %v324 = vadd.f32 %v77, %v316
    %v325 = vadd.f32 %v78, %v318
    %v326 = vxor.u32 %v322, 2147483648
    %v327 = vxor.u32 %v323, 2147483648
    %v328 = vxor.u32 %v324, 2147483648
    %v329 = vmul.f32 %v326, 1.442695
    %v330 = vpow.pop %v329
    %v331 = vmul.f32 %v327, 1.442695
    %v332 = vpow.pop %v331
    %v333 = vmul.f32 %v328, 1.442695
    %v334 = vpow.pop %v333
    %v335 = vadd.f32 %v330, 1.0
    %v336 = vadd.f32 %v332, 1.0
    %v337 = vadd.f32 %v334, 1.0
    %v338 = vrcp.pop %v335
    %v339 = vmul.f32 1.0, %v338
    %v340 = vrcp.pop %v336
    %v341 = vmul.f32 1.0, %v340
    %v342 = vrcp.pop %v337
    %v343 = vmul.f32 1.0, %v342
    %v344 = vtanh.pop %v325
    %v345 = vmul.f32 %v341, %v72
    %v346 = vmul.f32 %v339, %v344
    %v347 = vadd.f32 %v345, %v346
    %v348 = vtanh.pop %v347
    %v349 = vmul.f32 %v343, %v348
    %s350 = scalar_lea.vmem %s0, 16
    %v351 = vld [vmem:[%s350] sm:$0xff]
    %v352 = vld [vmem:[%s350 + $0x8] sm:$0xff]
    %v353 = vunpack.c.l.bf16 %v351
    %v354 = vunpack.c.h.bf16 %v351
    %v355 = vunpack.c.l.bf16 %v352
    %v356 = vunpack.c.h.bf16 %v352
    %v357 = vpack.c.bf16 %v349, %v349
    %358 = vmatprep.subr.bf16.mxu0 %v205
    %359 = vmatpush1.bf16.msra.mxu0 %v204
    %360 = vmatprep.subr.bf16.mxu0 %v201
    %361 = vmatpush1.bf16.msra.mxu0 %v200
    %362 = vmatprep.subr.bf16.mxu0 %v197
    %363 = vmatpush1.bf16.msra.mxu0 %v196
    %364 = vmatprep.subr.bf16.mxu0 %v193
    %365 = vmatpush1.bf16.msra.mxu0 %v192
    %366 = vmatprep.subr.bf16.mxu0 %v189
    %367 = vmatpush1.bf16.msra.mxu0 %v188
    %368 = vmatprep.subr.bf16.mxu0 %v185
    %369 = vmatpush1.bf16.msra.mxu0 %v184
    %370 = vmatprep.subr.bf16.mxu0 %v181
    %371 = vmatpush1.bf16.msra.mxu0 %v180
    %372 = vmatprep.subr.bf16.mxu0 %v177
    %373 = vmatpush1.bf16.msra.mxu0 %v176
    %374 = vmatprep.subr.bf16.mxu0 0
    %375 = vmatpush2.bf16.msra.mxu0 0
    %376 = vmatprep.subr.bf16.mxu0 0
    %377 = vmatpush2.bf16.msra.mxu0 0
    %378 = vmatprep.subr.bf16.mxu0 0
    %379 = vmatpush2.bf16.msra.mxu0 0
    %380 = vmatprep.subr.bf16.mxu0 0
    %381 = vmatpush2.bf16.msra.mxu0 0
    %382 = vmatprep.subr.bf16.mxu0 0
    %383 = vmatpush2.bf16.msra.mxu0 0
    %384 = vmatprep.subr.bf16.mxu0 0
    %385 = vmatpush2.bf16.msra.mxu0 0
    %386 = vmatprep.subr.bf16.mxu0 0
    %387 = vmatpush2.bf16.msra.mxu0 0
    %388 = vmatprep.subr.bf16.mxu0 0
    %389 = vmatpush2.bf16.msra.mxu0 0
    %390 = vmatprep.mubr.bf16.mxu0 0
    %391 = vmatmul.mubr.bf16.gmra.mxu0 %v357
    %v392 = vpop.f32.mrf.mxu0
    %v393 = vadd.f32 0.0, %v392
    %v394 = vpop.f32.mrf.mxu0
    %v395 = vadd.f32 0.0, %v394
    %v396 = vpop.f32.mrf.mxu0
    %v397 = vpop.f32.mrf.mxu0
    %398 = vdwg.mxu0
    %399 = vmatprep.subr.bf16.mxu0 %v207
    %400 = vmatpush1.bf16.msra.mxu0 %v206
    %401 = vmatprep.subr.bf16.mxu0 %v203
    %402 = vmatpush1.bf16.msra.mxu0 %v202
    %403 = vmatprep.subr.bf16.mxu0 %v199
    %404 = vmatpush1.bf16.msra.mxu0 %v198
    %405 = vmatprep.subr.bf16.mxu0 %v195
    %406 = vmatpush1.bf16.msra.mxu0 %v194
    %407 = vmatprep.subr.bf16.mxu0 %v191
    %408 = vmatpush1.bf16.msra.mxu0 %v190
    %409 = vmatprep.subr.bf16.mxu0 %v187
    %410 = vmatpush1.bf16.msra.mxu0 %v186
    %411 = vmatprep.subr.bf16.mxu0 %v183
    %412 = vmatpush1.bf16.msra.mxu0 %v182
    %413 = vmatprep.subr.bf16.mxu0 %v179
    %414 = vmatpush1.bf16.msra.mxu0 %v178
    %415 = vmatprep.subr.bf16.mxu0 0
    %416 = vmatpush2.bf16.msra.mxu0 0
    %417 = vmatprep.subr.bf16.mxu0 0
    %418 = vmatpush2.bf16.msra.mxu0 0
    %419 = vmatprep.subr.bf16.mxu0 0
    %420 = vmatpush2.bf16.msra.mxu0 0
    %421 = vmatprep.subr.bf16.mxu0 0
    %422 = vmatpush2.bf16.msra.mxu0 0
    %423 = vmatprep.subr.bf16.mxu0 0
    %424 = vmatpush2.bf16.msra.mxu0 0
    %425 = vmatprep.subr.bf16.mxu0 0
    %426 = vmatpush2.bf16.msra.mxu0 0
    %427 = vmatprep.subr.bf16.mxu0 0
    %428 = vmatpush2.bf16.msra.mxu0 0
    %429 = vmatprep.subr.bf16.mxu0 0
    %430 = vmatpush2.bf16.msra.mxu0 0
    %431 = vmatprep.mubr.bf16.mxu0 0
    %432 = vmatmul.mubr.bf16.gmra.mxu0 %v357
    %v433 = vpop.f32.mrf.mxu0
    %v434 = vadd.f32 0.0, %v433
    %v435 = vpop.f32.mrf.mxu0
    %v436 = vadd.f32 0.0, %v435
    %v437 = vpop.f32.mrf.mxu0
    %v438 = vpop.f32.mrf.mxu0
    %439 = vdwg.mxu0
    %v440 = vadd.f32 %v353, %v393
    %v441 = vadd.f32 %v354, %v395
    %v442 = vadd.f32 %v355, %v434
    %v443 = vadd.f32 %v356, %v436
    %v444 = vxor.u32 %v440, 2147483648
    %v445 = vxor.u32 %v441, 2147483648
    %v446 = vxor.u32 %v442, 2147483648
    %v447 = vmul.f32 %v444, 1.442695
    %v448 = vpow.pop %v447
    %v449 = vmul.f32 %v445, 1.442695
    %v450 = vpow.pop %v449
    %v451 = vmul.f32 %v446, 1.442695
    %v452 = vpow.pop %v451
    %v453 = vadd.f32 %v448, 1.0
    %v454 = vadd.f32 %v450, 1.0
    %v455 = vadd.f32 %v452, 1.0
    %v456 = vrcp.pop %v453
    %v457 = vmul.f32 1.0, %v456
    %v458 = vrcp.pop %v454
    %v459 = vmul.f32 1.0, %v458
    %v460 = vrcp.pop %v455
    %v461 = vmul.f32 1.0, %v460
    %v462 = vtanh.pop %v443
    %v463 = vmul.f32 %v459, %v347
    %v464 = vmul.f32 %v457, %v462
    %v465 = vadd.f32 %v463, %v464
    %v466 = vtanh.pop %v465
    %v467 = vmul.f32 %v461, %v466
    %s468 = scalar_lea.vmem %s0, 32
    %v469 = vld [vmem:[%s468] sm:$0xff]
    %v470 = vld [vmem:[%s468 + $0x8] sm:$0xff]
    %v471 = vunpack.c.l.bf16 %v469
    %v472 = vunpack.c.h.bf16 %v469
    %v473 = vunpack.c.l.bf16 %v470
    %v474 = vunpack.c.h.bf16 %v470
    %v475 = vpack.c.bf16 %v467, %v467
    %476 = vmatprep.subr.bf16.mxu0 %v205
    %477 = vmatpush1.bf16.msra.mxu0 %v204
    %478 = vmatprep.subr.bf16.mxu0 %v201
    %479 = vmatpush1.bf16.msra.mxu0 %v200
    %480 = vmatprep.subr.bf16.mxu0 %v197
    %481 = vmatpush1.bf16.msra.mxu0 %v196
    %482 = vmatprep.subr.bf16.mxu0 %v193
    %483 = vmatpush1.bf16.msra.mxu0 %v192
    %484 = vmatprep.subr.bf16.mxu0 %v189
    %485 = vmatpush1.bf16.msra.mxu0 %v188
    %486 = vmatprep.subr.bf16.mxu0 %v185
    %487 = vmatpush1.bf16.msra.mxu0 %v184
    %488 = vmatprep.subr.bf16.mxu0 %v181
    %489 = vmatpush1.bf16.msra.mxu0 %v180
    %490 = vmatprep.subr.bf16.mxu0 %v177
    %491 = vmatpush1.bf16.msra.mxu0 %v176
    %492 = vmatprep.subr.bf16.mxu0 0
    %493 = vmatpush2.bf16.msra.mxu0 0
    %494 = vmatprep.subr.bf16.mxu0 0
    %495 = vmatpush2.bf16.msra.mxu0 0
    %496 = vmatprep.subr.bf16.mxu0 0
    %497 = vmatpush2.bf16.msra.mxu0 0
    %498 = vmatprep.subr.bf16.mxu0 0
    %499 = vmatpush2.bf16.msra.mxu0 0
    %500 = vmatprep.subr.bf16.mxu0 0
    %501 = vmatpush2.bf16.msra.mxu0 0
    %502 = vmatprep.subr.bf16.mxu0 0
    %503 = vmatpush2.bf16.msra.mxu0 0
    %504 = vmatprep.subr.bf16.mxu0 0
    %505 = vmatpush2.bf16.msra.mxu0 0
    %506 = vmatprep.subr.bf16.mxu0 0
    %507 = vmatpush2.bf16.msra.mxu0 0
    %508 = vmatprep.mubr.bf16.mxu0 0
    %509 = vmatmul.mubr.bf16.gmra.mxu0 %v475
    %v510 = vpop.f32.mrf.mxu0
    %v511 = vadd.f32 0.0, %v510
    %v512 = vpop.f32.mrf.mxu0
    %v513 = vadd.f32 0.0, %v512
    %v514 = vpop.f32.mrf.mxu0
    %v515 = vpop.f32.mrf.mxu0
    %516 = vdwg.mxu0
    %517 = vmatprep.subr.bf16.mxu0 %v207
    %518 = vmatpush1.bf16.msra.mxu0 %v206
    %519 = vmatprep.subr.bf16.mxu0 %v203
    %520 = vmatpush1.bf16.msra.mxu0 %v202
    %521 = vmatprep.subr.bf16.mxu0 %v199
    %522 = vmatpush1.bf16.msra.mxu0 %v198
    %523 = vmatprep.subr.bf16.mxu0 %v195
    %524 = vmatpush1.bf16.msra.mxu0 %v194
    %525 = vmatprep.subr.bf16.mxu0 %v191
    %526 = vmatpush1.bf16.msra.mxu0 %v190
    %527 = vmatprep.subr.bf16.mxu0 %v187
    %528 = vmatpush1.bf16.msra.mxu0 %v186
    %529 = vmatprep.subr.bf16.mxu0 %v183
    %530 = vmatpush1.bf16.msra.mxu0 %v182
    %531 = vmatprep.subr.bf16.mxu0 %v179
    %532 = vmatpush1.bf16.msra.mxu0 %v178
    %533 = vmatprep.subr.bf16.mxu0 0
    %534 = vmatpush2.bf16.msra.mxu0 0
    %535 = vmatprep.subr.bf16.mxu0 0
    %536 = vmatpush2.bf16.msra.mxu0 0
    %537 = vmatprep.subr.bf16.mxu0 0
    %538 = vmatpush2.bf16.msra.mxu0 0
    %539 = vmatprep.subr.bf16.mxu0 0
    %540 = vmatpush2.bf16.msra.mxu0 0
    %541 = vmatprep.subr.bf16.mxu0 0
    %542 = vmatpush2.bf16.msra.mxu0 0
    %543 = vmatprep.subr.bf16.mxu0 0
    %544 = vmatpush2.bf16.msra.mxu0 0
    %545 = vmatprep.subr.bf16.mxu0 0
    %546 = vmatpush2.bf16.msra.mxu0 0
    %547 = vmatprep.subr.bf16.mxu0 0
    %548 = vmatpush2.bf16.msra.mxu0 0
    %549 = vmatprep.mubr.bf16.mxu0 0
    %550 = vmatmul.mubr.bf16.gmra.mxu0 %v475
    %v551 = vpop.f32.mrf.mxu0
    %v552 = vadd.f32 0.0, %v551
    %v553 = vpop.f32.mrf.mxu0
    %v554 = vadd.f32 0.0, %v553
    %v555 = vpop.f32.mrf.mxu0
    %v556 = vpop.f32.mrf.mxu0
    %557 = vdwg.mxu0
    %v558 = vadd.f32 %v471, %v511
    %v559 = vadd.f32 %v472, %v513
    %v560 = vadd.f32 %v473, %v552
    %v561 = vadd.f32 %v474, %v554
    %v562 = vxor.u32 %v558, 2147483648
    %v563 = vxor.u32 %v559, 2147483648
    %v564 = vxor.u32 %v560, 2147483648
    %v565 = vmul.f32 %v562, 1.442695
    %v566 = vpow.pop %v565
    %v567 = vmul.f32 %v563, 1.442695
    %v568 = vpow.pop %v567
    %v569 = vmul.f32 %v564, 1.442695
    %v570 = vpow.pop %v569
    %v571 = vadd.f32 %v566, 1.0
    %v572 = vadd.f32 %v568, 1.0
    %v573 = vadd.f32 %v570, 1.0
    %v574 = vrcp.pop %v571
    %v575 = vmul.f32 1.0, %v574
    %v576 = vrcp.pop %v572
    %v577 = vmul.f32 1.0, %v576
    %v578 = vrcp.pop %v573
    %v579 = vmul.f32 1.0, %v578
    %v580 = vtanh.pop %v561
    %v581 = vmul.f32 %v577, %v465
    %v582 = vmul.f32 %v575, %v580
    %v583 = vadd.f32 %v581, %v582
    %v584 = vtanh.pop %v583
    %v585 = vmul.f32 %v579, %v584
    %s586 = scalar_lea.vmem %s0, 48
    %v587 = vld [vmem:[%s586] sm:$0xff]
    %v588 = vld [vmem:[%s586 + $0x8] sm:$0xff]
    %v589 = vunpack.c.l.bf16 %v587
    %v590 = vunpack.c.h.bf16 %v587
    %v591 = vunpack.c.l.bf16 %v588
    %v592 = vunpack.c.h.bf16 %v588
    %v593 = vpack.c.bf16 %v585, %v585
    %594 = vmatprep.subr.bf16.mxu0 %v205
    %595 = vmatpush1.bf16.msra.mxu0 %v204
    %596 = vmatprep.subr.bf16.mxu0 %v201
    %597 = vmatpush1.bf16.msra.mxu0 %v200
    %598 = vmatprep.subr.bf16.mxu0 %v197
    %599 = vmatpush1.bf16.msra.mxu0 %v196
    %600 = vmatprep.subr.bf16.mxu0 %v193
    %601 = vmatpush1.bf16.msra.mxu0 %v192
    %602 = vmatprep.subr.bf16.mxu0 %v189
    %603 = vmatpush1.bf16.msra.mxu0 %v188
    %604 = vmatprep.subr.bf16.mxu0 %v185
    %605 = vmatpush1.bf16.msra.mxu0 %v184
    %606 = vmatprep.subr.bf16.mxu0 %v181
    %607 = vmatpush1.bf16.msra.mxu0 %v180
    %608 = vmatprep.subr.bf16.mxu0 %v177
    %609 = vmatpush1.bf16.msra.mxu0 %v176
    %610 = vmatprep.subr.bf16.mxu0 0
    %611 = vmatpush2.bf16.msra.mxu0 0
    %612 = vmatprep.subr.bf16.mxu0 0
    %613 = vmatpush2.bf16.msra.mxu0 0
    %614 = vmatprep.subr.bf16.mxu0 0
    %615 = vmatpush2.bf16.msra.mxu0 0
    %616 = vmatprep.subr.bf16.mxu0 0
    %617 = vmatpush2.bf16.msra.mxu0 0
    %618 = vmatprep.subr.bf16.mxu0 0
    %619 = vmatpush2.bf16.msra.mxu0 0
    %620 = vmatprep.subr.bf16.mxu0 0
    %621 = vmatpush2.bf16.msra.mxu0 0
    %622 = vmatprep.subr.bf16.mxu0 0
    %623 = vmatpush2.bf16.msra.mxu0 0
    %624 = vmatprep.subr.bf16.mxu0 0
    %625 = vmatpush2.bf16.msra.mxu0 0
    %626 = vmatprep.mubr.bf16.mxu0 0
    %627 = vmatmul.mubr.bf16.gmra.mxu0 %v593
    %v628 = vpop.f32.mrf.mxu0
    %v629 = vadd.f32 0.0, %v628
    %v630 = vpop.f32.mrf.mxu0
    %v631 = vadd.f32 0.0, %v630
    %v632 = vpop.f32.mrf.mxu0
    %v633 = vpop.f32.mrf.mxu0
    %634 = vdwg.mxu0
    %635 = vmatprep.subr.bf16.mxu0 %v207
    %636 = vmatpush1.bf16.msra.mxu0 %v206
    %637 = vmatprep.subr.bf16.mxu0 %v203
    %638 = vmatpush1.bf16.msra.mxu0 %v202
    %639 = vmatprep.subr.bf16.mxu0 %v199
    %640 = vmatpush1.bf16.msra.mxu0 %v198
    %641 = vmatprep.subr.bf16.mxu0 %v195
    %642 = vmatpush1.bf16.msra.mxu0 %v194
    %643 = vmatprep.subr.bf16.mxu0 %v191
    %644 = vmatpush1.bf16.msra.mxu0 %v190
    %645 = vmatprep.subr.bf16.mxu0 %v187
    %646 = vmatpush1.bf16.msra.mxu0 %v186
    %647 = vmatprep.subr.bf16.mxu0 %v183
    %648 = vmatpush1.bf16.msra.mxu0 %v182
    %649 = vmatprep.subr.bf16.mxu0 %v179
    %650 = vmatpush1.bf16.msra.mxu0 %v178
    %651 = vmatprep.subr.bf16.mxu0 0
    %652 = vmatpush2.bf16.msra.mxu0 0
    %653 = vmatprep.subr.bf16.mxu0 0
    %654 = vmatpush2.bf16.msra.mxu0 0
    %655 = vmatprep.subr.bf16.mxu0 0
    %656 = vmatpush2.bf16.msra.mxu0 0
    %657 = vmatprep.subr.bf16.mxu0 0
    %658 = vmatpush2.bf16.msra.mxu0 0
    %659 = vmatprep.subr.bf16.mxu0 0
    %660 = vmatpush2.bf16.msra.mxu0 0
    %661 = vmatprep.subr.bf16.mxu0 0
    %662 = vmatpush2.bf16.msra.mxu0 0
    %663 = vmatprep.subr.bf16.mxu0 0
    %664 = vmatpush2.bf16.msra.mxu0 0
    %665 = vmatprep.subr.bf16.mxu0 0
    %666 = vmatpush2.bf16.msra.mxu0 0
    %667 = vmatprep.mubr.bf16.mxu0 0
    %668 = vmatmul.mubr.bf16.gmra.mxu0 %v593
    %v669 = vpop.f32.mrf.mxu0
    %v670 = vadd.f32 0.0, %v669
    %v671 = vpop.f32.mrf.mxu0
    %v672 = vadd.f32 0.0, %v671
    %v673 = vpop.f32.mrf.mxu0
    %v674 = vpop.f32.mrf.mxu0
    %675 = vdwg.mxu0
    %v676 = vadd.f32 %v589, %v629
    %v677 = vadd.f32 %v590, %v631
    %v678 = vadd.f32 %v591, %v670
    %v679 = vadd.f32 %v592, %v672
    %v680 = vxor.u32 %v676, 2147483648
    %v681 = vxor.u32 %v677, 2147483648
    %v682 = vxor.u32 %v678, 2147483648
    %v683 = vmul.f32 %v680, 1.442695
    %v684 = vpow.pop %v683
    %v685 = vmul.f32 %v681, 1.442695
    %v686 = vpow.pop %v685
    %v687 = vmul.f32 %v682, 1.442695
    %v688 = vpow.pop %v687
    %v689 = vadd.f32 %v684, 1.0
    %v690 = vadd.f32 %v686, 1.0
    %v691 = vadd.f32 %v688, 1.0
    %v692 = vrcp.pop %v689
    %v693 = vmul.f32 1.0, %v692
    %v694 = vrcp.pop %v690
    %v695 = vmul.f32 1.0, %v694
    %v696 = vrcp.pop %v691
    %v697 = vmul.f32 1.0, %v696
    %v698 = vtanh.pop %v679
    %v699 = vmul.f32 %v695, %v583
    %v700 = vmul.f32 %v693, %v698
    %v701 = vadd.f32 %v699, %v700
    %v702 = vtanh.pop %v701
    %v703 = vmul.f32 %v697, %v702
    %s704 = scalar_lea.vmem %s0, 64
    %v705 = vld [vmem:[%s704] sm:$0xff]
    %v706 = vld [vmem:[%s704 + $0x8] sm:$0xff]
    %v707 = vunpack.c.l.bf16 %v705
    %v708 = vunpack.c.h.bf16 %v705
    %v709 = vunpack.c.l.bf16 %v706
    %v710 = vunpack.c.h.bf16 %v706
    %v711 = vpack.c.bf16 %v703, %v703
    %712 = vmatprep.subr.bf16.mxu0 %v205
    %713 = vmatpush1.bf16.msra.mxu0 %v204
    %714 = vmatprep.subr.bf16.mxu0 %v201
    %715 = vmatpush1.bf16.msra.mxu0 %v200
    %716 = vmatprep.subr.bf16.mxu0 %v197
    %717 = vmatpush1.bf16.msra.mxu0 %v196
    %718 = vmatprep.subr.bf16.mxu0 %v193
    %719 = vmatpush1.bf16.msra.mxu0 %v192
    %720 = vmatprep.subr.bf16.mxu0 %v189
    %721 = vmatpush1.bf16.msra.mxu0 %v188
    %722 = vmatprep.subr.bf16.mxu0 %v185
    %723 = vmatpush1.bf16.msra.mxu0 %v184
    %724 = vmatprep.subr.bf16.mxu0 %v181
    %725 = vmatpush1.bf16.msra.mxu0 %v180
    %726 = vmatprep.subr.bf16.mxu0 %v177
    %727 = vmatpush1.bf16.msra.mxu0 %v176
    %728 = vmatprep.subr.bf16.mxu0 0
    %729 = vmatpush2.bf16.msra.mxu0 0
    %730 = vmatprep.subr.bf16.mxu0 0
    %731 = vmatpush2.bf16.msra.mxu0 0
    %732 = vmatprep.subr.bf16.mxu0 0
    %733 = vmatpush2.bf16.msra.mxu0 0
    %734 = vmatprep.subr.bf16.mxu0 0
    %735 = vmatpush2.bf16.msra.mxu0 0
    %736 = vmatprep.subr.bf16.mxu0 0
    %737 = vmatpush2.bf16.msra.mxu0 0
    %738 = vmatprep.subr.bf16.mxu0 0
    %739 = vmatpush2.bf16.msra.mxu0 0
    %740 = vmatprep.subr.bf16.mxu0 0
    %741 = vmatpush2.bf16.msra.mxu0 0
    %742 = vmatprep.subr.bf16.mxu0 0
    %743 = vmatpush2.bf16.msra.mxu0 0
    %744 = vmatprep.mubr.bf16.mxu0 0
    %745 = vmatmul.mubr.bf16.gmra.mxu0 %v711
    %v746 = vpop.f32.mrf.mxu0
    %v747 = vadd.f32 0.0, %v746
    %v748 = vpop.f32.mrf.mxu0
    %v749 = vadd.f32 0.0, %v748
    %v750 = vpop.f32.mrf.mxu0
    %v751 = vpop.f32.mrf.mxu0
    %752 = vdwg.mxu0
    %753 = vmatprep.subr.bf16.mxu0 %v207
    %754 = vmatpush1.bf16.msra.mxu0 %v206
    %755 = vmatprep.subr.bf16.mxu0 %v203
    %756 = vmatpush1.bf16.msra.mxu0 %v202
    %757 = vmatprep.subr.bf16.mxu0 %v199
    %758 = vmatpush1.bf16.msra.mxu0 %v198
    %759 = vmatprep.subr.bf16.mxu0 %v195
    %760 = vmatpush1.bf16.msra.mxu0 %v194
    %761 = vmatprep.subr.bf16.mxu0 %v191
    %762 = vmatpush1.bf16.msra.mxu0 %v190
    %763 = vmatprep.subr.bf16.mxu0 %v187
    %764 = vmatpush1.bf16.msra.mxu0 %v186
    %765 = vmatprep.subr.bf16.mxu0 %v183
    %766 = vmatpush1.bf16.msra.mxu0 %v182
    %767 = vmatprep.subr.bf16.mxu0 %v179
    %768 = vmatpush1.bf16.msra.mxu0 %v178
    %769 = vmatprep.subr.bf16.mxu0 0
    %770 = vmatpush2.bf16.msra.mxu0 0
    %771 = vmatprep.subr.bf16.mxu0 0
    %772 = vmatpush2.bf16.msra.mxu0 0
    %773 = vmatprep.subr.bf16.mxu0 0
    %774 = vmatpush2.bf16.msra.mxu0 0
    %775 = vmatprep.subr.bf16.mxu0 0
    %776 = vmatpush2.bf16.msra.mxu0 0
    %777 = vmatprep.subr.bf16.mxu0 0
    %778 = vmatpush2.bf16.msra.mxu0 0
    %779 = vmatprep.subr.bf16.mxu0 0
    %780 = vmatpush2.bf16.msra.mxu0 0
    %781 = vmatprep.subr.bf16.mxu0 0
    %782 = vmatpush2.bf16.msra.mxu0 0
    %783 = vmatprep.subr.bf16.mxu0 0
    %784 = vmatpush2.bf16.msra.mxu0 0
    %785 = vmatprep.mubr.bf16.mxu0 0
    %786 = vmatmul.mubr.bf16.gmra.mxu0 %v711
    %v787 = vpop.f32.mrf.mxu0
    %v788 = vadd.f32 0.0, %v787
    %v789 = vpop.f32.mrf.mxu0
    %v790 = vadd.f32 0.0, %v789
    %v791 = vpop.f32.mrf.mxu0
    %v792 = vpop.f32.mrf.mxu0
    %793 = vdwg.mxu0
    %v794 = vadd.f32 %v707, %v747
    %v795 = vadd.f32 %v708, %v749
    %v796 = vadd.f32 %v709, %v788
    %v797 = vadd.f32 %v710, %v790
    %v798 = vxor.u32 %v794, 2147483648
    %v799 = vxor.u32 %v795, 2147483648
    %v800 = vxor.u32 %v796, 2147483648
    %v801 = vmul.f32 %v798, 1.442695
    %v802 = vpow.pop %v801
    %v803 = vmul.f32 %v799, 1.442695
    %v804 = vpow.pop %v803
    %v805 = vmul.f32 %v800, 1.442695
    %v806 = vpow.pop %v805
    %v807 = vadd.f32 %v802, 1.0
    %v808 = vadd.f32 %v804, 1.0
    %v809 = vadd.f32 %v806, 1.0
    %v810 = vrcp.pop %v807
    %v811 = vmul.f32 1.0, %v810
    %v812 = vrcp.pop %v808
    %v813 = vmul.f32 1.0, %v812
    %v814 = vrcp.pop %v809
    %v815 = vmul.f32 1.0, %v814
    %v816 = vtanh.pop %v797
    %v817 = vmul.f32 %v813, %v701
    %v818 = vmul.f32 %v811, %v816
    %v819 = vadd.f32 %v817, %v818
    %v820 = vtanh.pop %v819
    %v821 = vmul.f32 %v815, %v820
    %s822 = scalar_lea.vmem %s0, 80
    %v823 = vld [vmem:[%s822] sm:$0xff]
    %v824 = vld [vmem:[%s822 + $0x8] sm:$0xff]
    %v825 = vunpack.c.l.bf16 %v823
    %v826 = vunpack.c.h.bf16 %v823
    %v827 = vunpack.c.l.bf16 %v824
    %v828 = vunpack.c.h.bf16 %v824
    %v829 = vpack.c.bf16 %v821, %v821
    %830 = vmatprep.subr.bf16.mxu0 %v205
    %831 = vmatpush1.bf16.msra.mxu0 %v204
    %832 = vmatprep.subr.bf16.mxu0 %v201
    %833 = vmatpush1.bf16.msra.mxu0 %v200
    %834 = vmatprep.subr.bf16.mxu0 %v197
    %835 = vmatpush1.bf16.msra.mxu0 %v196
    %836 = vmatprep.subr.bf16.mxu0 %v193
    %837 = vmatpush1.bf16.msra.mxu0 %v192
    %838 = vmatprep.subr.bf16.mxu0 %v189
    %839 = vmatpush1.bf16.msra.mxu0 %v188
    %840 = vmatprep.subr.bf16.mxu0 %v185
    %841 = vmatpush1.bf16.msra.mxu0 %v184
    %842 = vmatprep.subr.bf16.mxu0 %v181
    %843 = vmatpush1.bf16.msra.mxu0 %v180
    %844 = vmatprep.subr.bf16.mxu0 %v177
    %845 = vmatpush1.bf16.msra.mxu0 %v176
    %846 = vmatprep.subr.bf16.mxu0 0
    %847 = vmatpush2.bf16.msra.mxu0 0
    %848 = vmatprep.subr.bf16.mxu0 0
    %849 = vmatpush2.bf16.msra.mxu0 0
    %850 = vmatprep.subr.bf16.mxu0 0
    %851 = vmatpush2.bf16.msra.mxu0 0
    %852 = vmatprep.subr.bf16.mxu0 0
    %853 = vmatpush2.bf16.msra.mxu0 0
    %854 = vmatprep.subr.bf16.mxu0 0
    %855 = vmatpush2.bf16.msra.mxu0 0
    %856 = vmatprep.subr.bf16.mxu0 0
    %857 = vmatpush2.bf16.msra.mxu0 0
    %858 = vmatprep.subr.bf16.mxu0 0
    %859 = vmatpush2.bf16.msra.mxu0 0
    %860 = vmatprep.subr.bf16.mxu0 0
    %861 = vmatpush2.bf16.msra.mxu0 0
    %862 = vmatprep.mubr.bf16.mxu0 0
    %863 = vmatmul.mubr.bf16.gmra.mxu0 %v829
    %v864 = vpop.f32.mrf.mxu0
    %v865 = vadd.f32 0.0, %v864
    %v866 = vpop.f32.mrf.mxu0
    %v867 = vadd.f32 0.0, %v866
    %v868 = vpop.f32.mrf.mxu0
    %v869 = vpop.f32.mrf.mxu0
    %870 = vdwg.mxu0
    %871 = vmatprep.subr.bf16.mxu0 %v207
    %872 = vmatpush1.bf16.msra.mxu0 %v206
    %873 = vmatprep.subr.bf16.mxu0 %v203
    %874 = vmatpush1.bf16.msra.mxu0 %v202
    %875 = vmatprep.subr.bf16.mxu0 %v199
    %876 = vmatpush1.bf16.msra.mxu0 %v198
    %877 = vmatprep.subr.bf16.mxu0 %v195
    %878 = vmatpush1.bf16.msra.mxu0 %v194
    %879 = vmatprep.subr.bf16.mxu0 %v191
    %880 = vmatpush1.bf16.msra.mxu0 %v190
    %881 = vmatprep.subr.bf16.mxu0 %v187
    %882 = vmatpush1.bf16.msra.mxu0 %v186
    %883 = vmatprep.subr.bf16.mxu0 %v183
    %884 = vmatpush1.bf16.msra.mxu0 %v182
    %885 = vmatprep.subr.bf16.mxu0 %v179
    %886 = vmatpush1.bf16.msra.mxu0 %v178
    %887 = vmatprep.subr.bf16.mxu0 0
    %888 = vmatpush2.bf16.msra.mxu0 0
    %889 = vmatprep.subr.bf16.mxu0 0
    %890 = vmatpush2.bf16.msra.mxu0 0
    %891 = vmatprep.subr.bf16.mxu0 0
    %892 = vmatpush2.bf16.msra.mxu0 0
    %893 = vmatprep.subr.bf16.mxu0 0
    %894 = vmatpush2.bf16.msra.mxu0 0
    %895 = vmatprep.subr.bf16.mxu0 0
    %896 = vmatpush2.bf16.msra.mxu0 0
    %897 = vmatprep.subr.bf16.mxu0 0
    %898 = vmatpush2.bf16.msra.mxu0 0
    %899 = vmatprep.subr.bf16.mxu0 0
    %900 = vmatpush2.bf16.msra.mxu0 0
    %901 = vmatprep.subr.bf16.mxu0 0
    %902 = vmatpush2.bf16.msra.mxu0 0
    %903 = vmatprep.mubr.bf16.mxu0 0
    %904 = vmatmul.mubr.bf16.gmra.mxu0 %v829
    %v905 = vpop.f32.mrf.mxu0
    %v906 = vadd.f32 0.0, %v905
    %v907 = vpop.f32.mrf.mxu0
    %v908 = vadd.f32 0.0, %v907
    %v909 = vpop.f32.mrf.mxu0
    %v910 = vpop.f32.mrf.mxu0
    %911 = vdwg.mxu0
    %v912 = vadd.f32 %v825, %v865
    %v913 = vadd.f32 %v826, %v867
    %v914 = vadd.f32 %v827, %v906
    %v915 = vadd.f32 %v828, %v908
    %v916 = vxor.u32 %v912, 2147483648
    %v917 = vxor.u32 %v913, 2147483648
    %v918 = vxor.u32 %v914, 2147483648
    %v919 = vmul.f32 %v916, 1.442695
    %v920 = vpow.pop %v919
    %v921 = vmul.f32 %v917, 1.442695
    %v922 = vpow.pop %v921
    %v923 = vmul.f32 %v918, 1.442695
    %v924 = vpow.pop %v923
    %v925 = vadd.f32 %v920, 1.0
    %v926 = vadd.f32 %v922, 1.0
    %v927 = vadd.f32 %v924, 1.0
    %v928 = vrcp.pop %v925
    %v929 = vmul.f32 1.0, %v928
    %v930 = vrcp.pop %v926
    %v931 = vmul.f32 1.0, %v930
    %v932 = vrcp.pop %v927
    %v933 = vmul.f32 1.0, %v932
    %v934 = vtanh.pop %v915
    %v935 = vmul.f32 %v931, %v819
    %v936 = vmul.f32 %v929, %v934
    %v937 = vadd.f32 %v935, %v936
    %v938 = vtanh.pop %v937
    %v939 = vmul.f32 %v933, %v938
    %s940 = scalar_lea.vmem %s0, 96
    %v941 = vld [vmem:[%s940] sm:$0xff]
    %v942 = vld [vmem:[%s940 + $0x8] sm:$0xff]
    %v943 = vunpack.c.l.bf16 %v941
    %v944 = vunpack.c.h.bf16 %v941
    %v945 = vunpack.c.l.bf16 %v942
    %v946 = vunpack.c.h.bf16 %v942
    %v947 = vpack.c.bf16 %v939, %v939
    %948 = vmatprep.subr.bf16.mxu0 %v205
    %949 = vmatpush1.bf16.msra.mxu0 %v204
    %950 = vmatprep.subr.bf16.mxu0 %v201
    %951 = vmatpush1.bf16.msra.mxu0 %v200
    %952 = vmatprep.subr.bf16.mxu0 %v197
    %953 = vmatpush1.bf16.msra.mxu0 %v196
    %954 = vmatprep.subr.bf16.mxu0 %v193
    %955 = vmatpush1.bf16.msra.mxu0 %v192
    %956 = vmatprep.subr.bf16.mxu0 %v189
    %957 = vmatpush1.bf16.msra.mxu0 %v188
    %958 = vmatprep.subr.bf16.mxu0 %v185
    %959 = vmatpush1.bf16.msra.mxu0 %v184
    %960 = vmatprep.subr.bf16.mxu0 %v181
    %961 = vmatpush1.bf16.msra.mxu0 %v180
    %962 = vmatprep.subr.bf16.mxu0 %v177
    %963 = vmatpush1.bf16.msra.mxu0 %v176
    %964 = vmatprep.subr.bf16.mxu0 0
    %965 = vmatpush2.bf16.msra.mxu0 0
    %966 = vmatprep.subr.bf16.mxu0 0
    %967 = vmatpush2.bf16.msra.mxu0 0
    %968 = vmatprep.subr.bf16.mxu0 0
    %969 = vmatpush2.bf16.msra.mxu0 0
    %970 = vmatprep.subr.bf16.mxu0 0
    %971 = vmatpush2.bf16.msra.mxu0 0
    %972 = vmatprep.subr.bf16.mxu0 0
    %973 = vmatpush2.bf16.msra.mxu0 0
    %974 = vmatprep.subr.bf16.mxu0 0
    %975 = vmatpush2.bf16.msra.mxu0 0
    %976 = vmatprep.subr.bf16.mxu0 0
    %977 = vmatpush2.bf16.msra.mxu0 0
    %978 = vmatprep.subr.bf16.mxu0 0
    %979 = vmatpush2.bf16.msra.mxu0 0
    %980 = vmatprep.mubr.bf16.mxu0 0
    %981 = vmatmul.mubr.bf16.gmra.mxu0 %v947
    %v982 = vpop.f32.mrf.mxu0
    %v983 = vadd.f32 0.0, %v982
    %v984 = vpop.f32.mrf.mxu0
    %v985 = vadd.f32 0.0, %v984
    %v986 = vpop.f32.mrf.mxu0
    %v987 = vpop.f32.mrf.mxu0
    %988 = vdwg.mxu0
    %989 = vmatprep.subr.bf16.mxu0 %v207
    %990 = vmatpush1.bf16.msra.mxu0 %v206
    %991 = vmatprep.subr.bf16.mxu0 %v203
    %992 = vmatpush1.bf16.msra.mxu0 %v202
    %993 = vmatprep.subr.bf16.mxu0 %v199
    %994 = vmatpush1.bf16.msra.mxu0 %v198
    %995 = vmatprep.subr.bf16.mxu0 %v195
    %996 = vmatpush1.bf16.msra.mxu0 %v194
    %997 = vmatprep.subr.bf16.mxu0 %v191
    %998 = vmatpush1.bf16.msra.mxu0 %v190
    %999 = vmatprep.subr.bf16.mxu0 %v187
    %1000 = vmatpush1.bf16.msra.mxu0 %v186
    %1001 = vmatprep.subr.bf16.mxu0 %v183
    %1002 = vmatpush1.bf16.msra.mxu0 %v182
    %1003 = vmatprep.subr.bf16.mxu0 %v179
    %1004 = vmatpush1.bf16.msra.mxu0 %v178
    %1005 = vmatprep.subr.bf16.mxu0 0
    %1006 = vmatpush2.bf16.msra.mxu0 0
    %1007 = vmatprep.subr.bf16.mxu0 0
    %1008 = vmatpush2.bf16.msra.mxu0 0
    %1009 = vmatprep.subr.bf16.mxu0 0
    %1010 = vmatpush2.bf16.msra.mxu0 0
    %1011 = vmatprep.subr.bf16.mxu0 0
    %1012 = vmatpush2.bf16.msra.mxu0 0
    %1013 = vmatprep.subr.bf16.mxu0 0
    %1014 = vmatpush2.bf16.msra.mxu0 0
    %1015 = vmatprep.subr.bf16.mxu0 0
    %1016 = vmatpush2.bf16.msra.mxu0 0
    %1017 = vmatprep.subr.bf16.mxu0 0
    %1018 = vmatpush2.bf16.msra.mxu0 0
    %1019 = vmatprep.subr.bf16.mxu0 0
    %1020 = vmatpush2.bf16.msra.mxu0 0
    %1021 = vmatprep.mubr.bf16.mxu0 0
    %1022 = vmatmul.mubr.bf16.gmra.mxu0 %v947
    %v1023 = vpop.f32.mrf.mxu0
    %v1024 = vadd.f32 0.0, %v1023
    %v1025 = vpop.f32.mrf.mxu0
    %v1026 = vadd.f32 0.0, %v1025
    %v1027 = vpop.f32.mrf.mxu0
    %v1028 = vpop.f32.mrf.mxu0
    %1029 = vdwg.mxu0
    %v1030 = vadd.f32 %v943, %v983
    %v1031 = vadd.f32 %v944, %v985
    %v1032 = vadd.f32 %v945, %v1024
    %v1033 = vadd.f32 %v946, %v1026
    %v1034 = vxor.u32 %v1030, 2147483648
    %v1035 = vxor.u32 %v1031, 2147483648
    %v1036 = vxor.u32 %v1032, 2147483648
    %v1037 = vmul.f32 %v1034, 1.442695
    %v1038 = vpow.pop %v1037
    %v1039 = vmul.f32 %v1035, 1.442695
    %v1040 = vpow.pop %v1039
    %v1041 = vmul.f32 %v1036, 1.442695
    %v1042 = vpow.pop %v1041
    %v1043 = vadd.f32 %v1038, 1.0
    %v1044 = vadd.f32 %v1040, 1.0
    %v1045 = vadd.f32 %v1042, 1.0
    %v1046 = vrcp.pop %v1043
    %v1047 = vmul.f32 1.0, %v1046
    %v1048 = vrcp.pop %v1044
    %v1049 = vmul.f32 1.0, %v1048
    %v1050 = vrcp.pop %v1045
    %v1051 = vmul.f32 1.0, %v1050
    %v1052 = vtanh.pop %v1033
    %v1053 = vmul.f32 %v1049, %v937
    %v1054 = vmul.f32 %v1047, %v1052
    %v1055 = vadd.f32 %v1053, %v1054
    %v1056 = vtanh.pop %v1055
    %v1057 = vmul.f32 %v1051, %v1056
    %s1058 = scalar_lea.vmem %s0, 112
    %v1059 = vld [vmem:[%s1058] sm:$0xff]
    %v1060 = vld [vmem:[%s1058 + $0x8] sm:$0xff]
    %v1061 = vunpack.c.l.bf16 %v1059
    %v1062 = vunpack.c.h.bf16 %v1059
    %v1063 = vunpack.c.l.bf16 %v1060
    %v1064 = vunpack.c.h.bf16 %v1060
    %v1065 = vpack.c.bf16 %v1057, %v1057
    %1066 = vmatprep.subr.bf16.mxu0 %v205
    %1067 = vmatpush1.bf16.msra.mxu0 %v204
    %1068 = vmatprep.subr.bf16.mxu0 %v201
    %1069 = vmatpush1.bf16.msra.mxu0 %v200
    %1070 = vmatprep.subr.bf16.mxu0 %v197
    %1071 = vmatpush1.bf16.msra.mxu0 %v196
    %1072 = vmatprep.subr.bf16.mxu0 %v193
    %1073 = vmatpush1.bf16.msra.mxu0 %v192
    %1074 = vmatprep.subr.bf16.mxu0 %v189
    %1075 = vmatpush1.bf16.msra.mxu0 %v188
    %1076 = vmatprep.subr.bf16.mxu0 %v185
    %1077 = vmatpush1.bf16.msra.mxu0 %v184
    %1078 = vmatprep.subr.bf16.mxu0 %v181
    %1079 = vmatpush1.bf16.msra.mxu0 %v180
    %1080 = vmatprep.subr.bf16.mxu0 %v177
    %1081 = vmatpush1.bf16.msra.mxu0 %v176
    %1082 = vmatprep.subr.bf16.mxu0 0
    %1083 = vmatpush2.bf16.msra.mxu0 0
    %1084 = vmatprep.subr.bf16.mxu0 0
    %1085 = vmatpush2.bf16.msra.mxu0 0
    %1086 = vmatprep.subr.bf16.mxu0 0
    %1087 = vmatpush2.bf16.msra.mxu0 0
    %1088 = vmatprep.subr.bf16.mxu0 0
    %1089 = vmatpush2.bf16.msra.mxu0 0
    %1090 = vmatprep.subr.bf16.mxu0 0
    %1091 = vmatpush2.bf16.msra.mxu0 0
    %1092 = vmatprep.subr.bf16.mxu0 0
    %1093 = vmatpush2.bf16.msra.mxu0 0
    %1094 = vmatprep.subr.bf16.mxu0 0
    %1095 = vmatpush2.bf16.msra.mxu0 0
    %1096 = vmatprep.subr.bf16.mxu0 0
    %1097 = vmatpush2.bf16.msra.mxu0 0
    %1098 = vmatprep.mubr.bf16.mxu0 0
    %1099 = vmatmul.mubr.bf16.gmra.mxu0 %v1065
    %v1100 = vpop.f32.mrf.mxu0
    %v1101 = vadd.f32 0.0, %v1100
    %v1102 = vpop.f32.mrf.mxu0
    %v1103 = vadd.f32 0.0, %v1102
    %v1104 = vpop.f32.mrf.mxu0
    %v1105 = vpop.f32.mrf.mxu0
    %1106 = vdwg.mxu0
    %1107 = vmatprep.subr.bf16.mxu0 %v207
    %1108 = vmatpush1.bf16.msra.mxu0 %v206
    %1109 = vmatprep.subr.bf16.mxu0 %v203
    %1110 = vmatpush1.bf16.msra.mxu0 %v202
    %1111 = vmatprep.subr.bf16.mxu0 %v199
    %1112 = vmatpush1.bf16.msra.mxu0 %v198
    %1113 = vmatprep.subr.bf16.mxu0 %v195
    %1114 = vmatpush1.bf16.msra.mxu0 %v194
    %1115 = vmatprep.subr.bf16.mxu0 %v191
    %1116 = vmatpush1.bf16.msra.mxu0 %v190
    %1117 = vmatprep.subr.bf16.mxu0 %v187
    %1118 = vmatpush1.bf16.msra.mxu0 %v186
    %1119 = vmatprep.subr.bf16.mxu0 %v183
    %1120 = vmatpush1.bf16.msra.mxu0 %v182
    %1121 = vmatprep.subr.bf16.mxu0 %v179
    %1122 = vmatpush1.bf16.msra.mxu0 %v178
    %1123 = vmatprep.subr.bf16.mxu0 0
    %1124 = vmatpush2.bf16.msra.mxu0 0
    %1125 = vmatprep.subr.bf16.mxu0 0
    %1126 = vmatpush2.bf16.msra.mxu0 0
    %1127 = vmatprep.subr.bf16.mxu0 0
    %1128 = vmatpush2.bf16.msra.mxu0 0
    %1129 = vmatprep.subr.bf16.mxu0 0
    %1130 = vmatpush2.bf16.msra.mxu0 0
    %1131 = vmatprep.subr.bf16.mxu0 0
    %1132 = vmatpush2.bf16.msra.mxu0 0
    %1133 = vmatprep.subr.bf16.mxu0 0
    %1134 = vmatpush2.bf16.msra.mxu0 0
    %1135 = vmatprep.subr.bf16.mxu0 0
    %1136 = vmatpush2.bf16.msra.mxu0 0
    %1137 = vmatprep.subr.bf16.mxu0 0
    %1138 = vmatpush2.bf16.msra.mxu0 0
    %1139 = vmatprep.mubr.bf16.mxu0 0
    %1140 = vmatmul.mubr.bf16.gmra.mxu0 %v1065
    %v1141 = vpop.f32.mrf.mxu0
    %v1142 = vadd.f32 0.0, %v1141
    %v1143 = vpop.f32.mrf.mxu0
    %v1144 = vadd.f32 0.0, %v1143
    %v1145 = vpop.f32.mrf.mxu0
    %v1146 = vpop.f32.mrf.mxu0
    %1147 = vdwg.mxu0
    %v1148 = vadd.f32 %v1061, %v1101
    %v1149 = vadd.f32 %v1062, %v1103
    %v1150 = vadd.f32 %v1063, %v1142
    %v1151 = vadd.f32 %v1064, %v1144
    %v1152 = vxor.u32 %v1148, 2147483648
    %v1153 = vxor.u32 %v1149, 2147483648
    %v1154 = vxor.u32 %v1150, 2147483648
    %v1155 = vmul.f32 %v1152, 1.442695
    %v1156 = vpow.pop %v1155
    %v1157 = vmul.f32 %v1153, 1.442695
    %v1158 = vpow.pop %v1157
    %v1159 = vmul.f32 %v1154, 1.442695
    %v1160 = vpow.pop %v1159
    %v1161 = vadd.f32 %v1156, 1.0
    %v1162 = vadd.f32 %v1158, 1.0
    %v1163 = vadd.f32 %v1160, 1.0
    %v1164 = vrcp.pop %v1161
    %v1165 = vmul.f32 1.0, %v1164
    %v1166 = vrcp.pop %v1162
    %v1167 = vmul.f32 1.0, %v1166
    %v1168 = vrcp.pop %v1163
    %v1169 = vmul.f32 1.0, %v1168
    %v1170 = vtanh.pop %v1151
    %v1171 = vmul.f32 %v1167, %v1055
    %v1172 = vmul.f32 %v1165, %v1170
    %v1173 = vadd.f32 %v1171, %v1172
    %v1174 = vtanh.pop %v1173
    %v1175 = vmul.f32 %v1169, %v1174
    %1176 = vst [vmem:[#allocation2] sm:$0xff] %v1175
    %1177 = vst [vmem:[#allocation3] sm:$0xff] %v1173
    // Predicated region
    $region26: #{tpu_custom_call.1} parent=1 // pred_check
      %p1178 = pneg %p33
    $region27: #{tpu_custom_call.1} parent=1 // pred_check_branch
      %1180 = sbr.rel (%p1178) target = $region29
    $region28: #{tpu_custom_call.1} parent=1 // pred_region
      %v1181 = vld [vmem:[%s2] sm:$0xff]
      %v1182 = vld [vmem:[%s2 + $0x8] sm:$0xff]
      %v1183 = vld [vmem:[%s2 + $0x10] sm:$0xff]
      %v1184 = vld [vmem:[%s2 + $0x18] sm:$0xff]
      %v1185 = vld [vmem:[%s2 + $0x20] sm:$0xff]
      %v1186 = vld [vmem:[%s2 + $0x28] sm:$0xff]
      %v1187 = vld [vmem:[%s2 + $0x30] sm:$0xff]
      %v1188 = vld [vmem:[%s2 + $0x38] sm:$0xff]
      %v1189 = vld [vmem:[%s2 + $0x40] sm:$0xff]
      %v1190 = vld [vmem:[%s2 + $0x48] sm:$0xff]
      %v1191 = vld [vmem:[%s2 + $0x50] sm:$0xff]
      %v1192 = vld [vmem:[%s2 + $0x58] sm:$0xff]
      %v1193 = vld [vmem:[%s2 + $0x60] sm:$0xff]
      %v1194 = vld [vmem:[%s2 + $0x68] sm:$0xff]
      %v1195 = vld [vmem:[%s2 + $0x70] sm:$0xff]
      %v1196 = vld [vmem:[%s2 + $0x78] sm:$0xff]
      %v1197 = vld [vmem:[%s3] sm:$0x1]
      %v1199 = vlaneseq
      %v1200 = vshrl.u32 %v1199, 7
      %v1201 = vsub.s32 0, %v1200
      %v1202 = vrot.slane %v1197, %v1201
      %1204 = vmatprep.subr.mxu0 0.0
      %1205 = vmatpush1.msra.mxu0 %v1196
      %1206 = vmatprep.subr.mxu0 0.0
      %1207 = vmatpush1.msra.mxu0 %v1195
      %1208 = vmatprep.subr.mxu0 0.0
      %1209 = vmatpush1.msra.mxu0 %v1194
      %1210 = vmatprep.subr.mxu0 0.0
      %1211 = vmatpush1.msra.mxu0 %v1193
      %1212 = vmatprep.subr.mxu0 0.0
      %1213 = vmatpush1.msra.mxu0 %v1192
      %1214 = vmatprep.subr.mxu0 0.0
      %1215 = vmatpush1.msra.mxu0 %v1191
      %1216 = vmatprep.subr.mxu0 0.0
      %1217 = vmatpush1.msra.mxu0 %v1190
      %1218 = vmatprep.subr.mxu0 0.0
      %1219 = vmatpush1.msra.mxu0 %v1189
      %1220 = vmatprep.subr.mxu0 0.0
      %1221 = vmatpush1.msra.mxu0 %v1188
      %1222 = vmatprep.subr.mxu0 0.0
      %1223 = vmatpush1.msra.mxu0 %v1187
      %1224 = vmatprep.subr.mxu0 0.0
      %1225 = vmatpush1.msra.mxu0 %v1186
      %1226 = vmatprep.subr.mxu0 0.0
      %1227 = vmatpush1.msra.mxu0 %v1185
      %1228 = vmatprep.subr.mxu0 0.0
      %1229 = vmatpush1.msra.mxu0 %v1184
      %1230 = vmatprep.subr.mxu0 0.0
      %1231 = vmatpush1.msra.mxu0 %v1183
      %1232 = vmatprep.subr.mxu0 0.0
      %1233 = vmatpush1.msra.mxu0 %v1182
      %1234 = vmatprep.subr.mxu0 0.0
      %1235 = vmatpush1.msra.mxu0 %v1181
      %1236 = vmatprep.subr.mxu0 0.0
      %1237 = vmatpush2.msra.mxu0 0.0
      %1238 = vmatprep.subr.mxu0 0.0
      %1239 = vmatpush2.msra.mxu0 0.0
      %1240 = vmatprep.subr.mxu0 0.0
      %1241 = vmatpush2.msra.mxu0 0.0
      %1242 = vmatprep.subr.mxu0 0.0
      %1243 = vmatpush2.msra.mxu0 0.0
      %1244 = vmatprep.subr.mxu0 0.0
      %1245 = vmatpush2.msra.mxu0 0.0
      %1246 = vmatprep.subr.mxu0 0.0
      %1247 = vmatpush2.msra.mxu0 0.0
      %1248 = vmatprep.subr.mxu0 0.0
      %1249 = vmatpush2.msra.mxu0 0.0
      %1250 = vmatprep.subr.mxu0 0.0
      %1251 = vmatpush2.msra.mxu0 0.0
      %1252 = vmatprep.subr.mxu0 0.0
      %1253 = vmatpush2.msra.mxu0 0.0
      %1254 = vmatprep.subr.mxu0 0.0
      %1255 = vmatpush2.msra.mxu0 0.0
      %1256 = vmatprep.subr.mxu0 0.0
      %1257 = vmatpush2.msra.mxu0 0.0
      %1258 = vmatprep.subr.mxu0 0.0
      %1259 = vmatpush2.msra.mxu0 0.0
      %1260 = vmatprep.subr.mxu0 0.0
      %1261 = vmatpush2.msra.mxu0 0.0
      %1262 = vmatprep.subr.mxu0 0.0
      %1263 = vmatpush2.msra.mxu0 0.0
      %1264 = vmatprep.subr.mxu0 0.0
      %1265 = vmatpush2.msra.mxu0 0.0
      %1266 = vmatprep.subr.mxu0 0.0
      %1267 = vmatpush2.msra.mxu0 0.0
      %1268 = vmatprep.mubr.f32.mxu0 0.0
      %1269 = vmatmul.mubr.f32.gmra.mxu0 %v1175
      %v1270 = vpop.f32.mrf.mxu0
      %v1271 = vadd.f32 %v1202, %v1270
      %v1272 = vpop.f32.mrf.mxu0
      %1273 = vdwg.mxu0
      %vm1274 = vcmask 64512
      %1275 = vst.msk [vmem:[#allocation7] sm:$0xff] %vm1274, %v1271
    $region29: #{tpu_custom_call.1} parent=1 // pred_fallthru
      _
    // Predicated region
    $region30: #{tpu_custom_call.1} parent=1 // pred_check
      _
    $region31: #{tpu_custom_call.1} parent=1 // pred_check_branch
      %1277 = sbr.rel (0) target = $region33
    $region32: #{tpu_custom_call.1} parent=1 // pred_region
      %s1279 = ssub.s32 128, 128
      %1280 = vsyncadd [#allocation6], %s1279
      %s1282 = sshll.u32 [#allocation7], 4
      %s1283 = int_to_ptr.vmem [resolvable:$true] %s1282
      %1285 = dma.vmem_to_hbm [thread:$0]  %s1283, 128, %s4, [#allocation6]
    $region33: #{tpu_custom_call.1} parent=1 // pred_fallthru
      _
    // Predicated region
    $region34: #{tpu_custom_call.1} parent=1 // pred_check
      _
    $region35: #{tpu_custom_call.1} parent=1 // pred_check_branch
      %1287 = sbr.rel (0) target = $region37
    $region36: #{tpu_custom_call.1} parent=1 // pred_region
      %1288 = dma.done [#allocation6], 128
    $region37: #{tpu_custom_call.1} parent=1 // pred_fallthru
      _
    %1289 = vsyncpa [#allocation5], 1
    %1290 = vsyncpa [#allocation6], 1

// kernel: tpu_custom_call.1
$region0: #{tpu_custom_call.1}
  #allocation0 [shape = 'u32[]', space=smem, size = 0x4, offset = 0x4, fixed_abs, tag = 'smem constant byte address 0x4 - core index']
  #allocation1 [shape = 'u32[144,128]{1,0:T(1,128)}', space=vmem, size = 0x12000, scoped, tag = 'internal scratch']
  #allocation2 [shape = 'f32[8,128]{1,0:T(8,128)}', space=vmem, size = 0x1000, scoped, tag = 'scratch operand']
  #allocation3 [shape = 'f32[8,128]{1,0:T(8,128)}', space=vmem, size = 0x1000, scoped, tag = 'scratch operand']
  %s0 = inlined_call_operand.vmem [shape: bf16[8,8,512], index: 0, kind: input, shape index: {}]
  %s1 = inlined_call_operand.hbm [shape: bf16[128,512], index: 1, kind: input, shape index: {}]
  %s2 = inlined_call_operand.vmem [shape: f32[128,8], index: 2, kind: input, shape index: {}]
  %s3 = inlined_call_operand.vmem [shape: f32[1,8], index: 3, kind: input, shape index: {}]
  %s4 = inlined_call_operand.hbm [shape: f32[8,8], index: 4, kind: output, shape index: {}]
  %s5 = sld [smem:[#allocation0]]
  $region38: #{tpu_custom_call.1} parent=0
    _
  %s7 = ssub.s32 1, %s5
  %s8 = scalar_select 0, %s7, %s5
  $region1: #{tpu_custom_call.1} parent=0
    #allocation4 [shape = 'u8[131072]{0}', space=vmem, size = 0x20000, scoped, tag = 'input window, operand 1, single buffered']
    #allocation5 [shape = 's32[1]{0}', space=sflag, size = 0x4, scoped, tag = 'scoped memory for tpu_custom_call.1']
    #allocation6 [shape = 's32[1]{0}', space=sflag, size = 0x4, scoped, tag = 'scoped memory for tpu_custom_call.1']
    #allocation7 [shape = 'u8[4096]{0}', space=vmem, size = 0x1000, scoped, tag = 'output window, operand 0, single buffered']
    %9 = vsyncpa [#allocation5], 0
    %10 = vsyncpa [#allocation6], 0
    // Predicated region
    $region2: #{tpu_custom_call.1} parent=1 // pred_check
      _
    $region3: #{tpu_custom_call.1} parent=1 // pred_check_branch
      %12 = sbr.rel (0) target = $region5
    $region4: #{tpu_custom_call.1} parent=1 // pred_region
      _
    $region5: #{tpu_custom_call.1} parent=1 // pred_fallthru
      _
    // Predicated region
    $region6: #{tpu_custom_call.1} parent=1 // pred_check
      _
    $region7: #{tpu_custom_call.1} parent=1 // pred_check_branch
      %14 = sbr.rel (0) target = $region9
    $region8: #{tpu_custom_call.1} parent=1 // pred_region
      %s16 = ssub.s32 4096, 4096
      %17 = vsyncadd [#allocation5], %s16
      %s18 = sshll.u32 [#allocation4], 4
      %s19 = int_to_ptr.vmem [resolvable:$true] %s18
      %24 = dma.hbm_to_vmem [thread:$0]  %s1, 4096, %s19, [#allocation5], 256, 256, 16
    $region9: #{tpu_custom_call.1} parent=1 // pred_fallthru
      _
    // Predicated region
    $region10: #{tpu_custom_call.1} parent=1 // pred_check
      _
    $region11: #{tpu_custom_call.1} parent=1 // pred_check_branch
      %26 = sbr.rel (0) target = $region13
    $region12: #{tpu_custom_call.1} parent=1 // pred_region
      _
    $region13: #{tpu_custom_call.1} parent=1 // pred_fallthru
      _
    // Predicated region
    $region14: #{tpu_custom_call.1} parent=1 // pred_check
      _
    $region15: #{tpu_custom_call.1} parent=1 // pred_check_branch
      %28 = sbr.rel (0) target = $region17
    $region16: #{tpu_custom_call.1} parent=1 // pred_region
      _
    $region17: #{tpu_custom_call.1} parent=1 // pred_fallthru
      _
    // Predicated region
    $region18: #{tpu_custom_call.1} parent=1 // pred_check
      _
    $region19: #{tpu_custom_call.1} parent=1 // pred_check_branch
      %30 = sbr.rel (0) target = $region21
    $region20: #{tpu_custom_call.1} parent=1 // pred_region
      %31 = dma.done [#allocation5], 4096
    $region21: #{tpu_custom_call.1} parent=1 // pred_fallthru
      _
    %p33 = scmp.eq.s32.totalorder 0, 0
    // Predicated region
    $region22: #{tpu_custom_call.1} parent=1 // pred_check
      %p34 = pneg %p33
    $region23: #{tpu_custom_call.1} parent=1 // pred_check_branch
      %36 = sbr.rel (%p34) target = $region25
    $region24: #{tpu_custom_call.1} parent=1 // pred_region
      %37 = vst [vmem:[#allocation2] sm:$0xff] 0.0
      %38 = vst [vmem:[#allocation3] sm:$0xff] 0.0
    $region25: #{tpu_custom_call.1} parent=1 // pred_fallthru
      _
    %v39 = vld [vmem:[#allocation4] sm:$0xff]
    %v40 = vld [vmem:[#allocation4 + $0x8] sm:$0xff]
    %v41 = vld [vmem:[#allocation4 + $0x10] sm:$0xff]
    %v42 = vld [vmem:[#allocation4 + $0x18] sm:$0xff]
    %v43 = vld [vmem:[#allocation4 + $0x20] sm:$0xff]
    %v44 = vld [vmem:[#allocation4 + $0x28] sm:$0xff]
    %v45 = vld [vmem:[#allocation4 + $0x30] sm:$0xff]
    %v46 = vld [vmem:[#allocation4 + $0x38] sm:$0xff]
    %v47 = vld [vmem:[#allocation4 + $0x40] sm:$0xff]
    %v48 = vld [vmem:[#allocation4 + $0x48] sm:$0xff]
    %v49 = vld [vmem:[#allocation4 + $0x50] sm:$0xff]
    %v50 = vld [vmem:[#allocation4 + $0x58] sm:$0xff]
    %v51 = vld [vmem:[#allocation4 + $0x60] sm:$0xff]
    %v52 = vld [vmem:[#allocation4 + $0x68] sm:$0xff]
    %v53 = vld [vmem:[#allocation4 + $0x70] sm:$0xff]
    %v54 = vld [vmem:[#allocation4 + $0x78] sm:$0xff]
    %v55 = vld [vmem:[#allocation4 + $0x80] sm:$0xff]
    %v56 = vld [vmem:[#allocation4 + $0x88] sm:$0xff]
    %v57 = vld [vmem:[#allocation4 + $0x90] sm:$0xff]
    %v58 = vld [vmem:[#allocation4 + $0x98] sm:$0xff]
    %v59 = vld [vmem:[#allocation4 + $0xa0] sm:$0xff]
    %v60 = vld [vmem:[#allocation4 + $0xa8] sm:$0xff]
    %v61 = vld [vmem:[#allocation4 + $0xb0] sm:$0xff]
    %v62 = vld [vmem:[#allocation4 + $0xb8] sm:$0xff]
    %v63 = vld [vmem:[#allocation4 + $0xc0] sm:$0xff]
    %v64 = vld [vmem:[#allocation4 + $0xc8] sm:$0xff]
    %v65 = vld [vmem:[#allocation4 + $0xd0] sm:$0xff]
    %v66 = vld [vmem:[#allocation4 + $0xd8] sm:$0xff]
    %v67 = vld [vmem:[#allocation4 + $0xe0] sm:$0xff]
    %v68 = vld [vmem:[#allocation4 + $0xe8] sm:$0xff]
    %v69 = vld [vmem:[#allocation4 + $0xf0] sm:$0xff]
    %v70 = vld [vmem:[#allocation4 + $0xf8] sm:$0xff]
    %v71 = vld [vmem:[#allocation2] sm:$0xff]
    %v72 = vld [vmem:[#allocation3] sm:$0xff]
    %v73 = vld [vmem:[%s0] sm:$0xff]
    %v74 = vld [vmem:[%s0 + $0x8] sm:$0xff]
    %v75 = vunpack.c.l.bf16 %v73
    %v76 = vunpack.c.h.bf16 %v73
    %v77 = vunpack.c.l.bf16 %v74
    %v78 = vunpack.c.h.bf16 %v74
    %v79 = vpack.c.bf16 %v71, %v71
    %v112 = vunpack.c.l.b16 %v39
    %v113 = vunpack.c.h.b16 %v39
    %v114 = vunpack.c.l.b16 %v40
    %v115 = vunpack.c.h.b16 %v40
    %v116 = vunpack.c.l.b16 %v41
    %v117 = vunpack.c.h.b16 %v41
    %v118 = vunpack.c.l.b16 %v42
    %v119 = vunpack.c.h.b16 %v42
    %v120 = vunpack.c.l.b16 %v43
    %v121 = vunpack.c.h.b16 %v43
    %v122 = vunpack.c.l.b16 %v44
    %v123 = vunpack.c.h.b16 %v44
    %v124 = vunpack.c.l.b16 %v45
    %v125 = vunpack.c.h.b16 %v45
    %v126 = vunpack.c.l.b16 %v46
    %v127 = vunpack.c.h.b16 %v46
    %v128 = vunpack.c.l.b16 %v47
    %v129 = vunpack.c.h.b16 %v47
    %v130 = vunpack.c.l.b16 %v48
    %v131 = vunpack.c.h.b16 %v48
    %v132 = vunpack.c.l.b16 %v49
    %v133 = vunpack.c.h.b16 %v49
    %v134 = vunpack.c.l.b16 %v50
    %v135 = vunpack.c.h.b16 %v50
    %v136 = vunpack.c.l.b16 %v51
    %v137 = vunpack.c.h.b16 %v51
    %v138 = vunpack.c.l.b16 %v52
    %v139 = vunpack.c.h.b16 %v52
    %v140 = vunpack.c.l.b16 %v53
    %v141 = vunpack.c.h.b16 %v53
    %v142 = vunpack.c.l.b16 %v54
    %v143 = vunpack.c.h.b16 %v54
    %v144 = vunpack.c.l.b16 %v55
    %v145 = vunpack.c.h.b16 %v55
    %v146 = vunpack.c.l.b16 %v56
    %v147 = vunpack.c.h.b16 %v56
    %v148 = vunpack.c.l.b16 %v57
    %v149 = vunpack.c.h.b16 %v57
    %v150 = vunpack.c.l.b16 %v58
    %v151 = vunpack.c.h.b16 %v58
    %v152 = vunpack.c.l.b16 %v59
    %v153 = vunpack.c.h.b16 %v59
    %v154 = vunpack.c.l.b16 %v60
    %v155 = vunpack.c.h.b16 %v60
    %v156 = vunpack.c.l.b16 %v61
    %v157 = vunpack.c.h.b16 %v61
    %v158 = vunpack.c.l.b16 %v62
    %v159 = vunpack.c.h.b16 %v62
    %v160 = vunpack.c.l.b16 %v63
    %v161 = vunpack.c.h.b16 %v63
    %v162 = vunpack.c.l.b16 %v64
    %v163 = vunpack.c.h.b16 %v64
    %v164 = vunpack.c.l.b16 %v65
    %v165 = vunpack.c.h.b16 %v65
    %v166 = vunpack.c.l.b16 %v66
    %v167 = vunpack.c.h.b16 %v66
    %v168 = vunpack.c.l.b16 %v67
    %v169 = vunpack.c.h.b16 %v67
    %v170 = vunpack.c.l.b16 %v68
    %v171 = vunpack.c.h.b16 %v68
    %v172 = vunpack.c.l.b16 %v69
    %v173 = vunpack.c.h.b16 %v69
    %v174 = vunpack.c.l.b16 %v70
    %v175 = vunpack.c.h.b16 %v70
    %v176 = vpack.c.b16 %v116, %v112
    %v177 = vpack.c.b16 %v117, %v113
    %v178 = vpack.c.b16 %v118, %v114
    %v179 = vpack.c.b16 %v119, %v115
    %v180 = vpack.c.b16 %v124, %v120
    %v181 = vpack.c.b16 %v125, %v121
    %v182 = vpack.c.b16 %v126, %v122
    %v183 = vpack.c.b16 %v127, %v123
    %v184 = vpack.c.b16 %v132, %v128
    %v185 = vpack.c.b16 %v133, %v129
    %v186 = vpack.c.b16 %v134, %v130
    %v187 = vpack.c.b16 %v135, %v131
    %v188 = vpack.c.b16 %v140, %v136
    %v189 = vpack.c.b16 %v141, %v137
    %v190 = vpack.c.b16 %v142, %v138
    %v191 = vpack.c.b16 %v143, %v139
    %v192 = vpack.c.b16 %v148, %v144
    %v193 = vpack.c.b16 %v149, %v145
    %v194 = vpack.c.b16 %v150, %v146
    %v195 = vpack.c.b16 %v151, %v147
    %v196 = vpack.c.b16 %v156, %v152
    %v197 = vpack.c.b16 %v157, %v153
    %v198 = vpack.c.b16 %v158, %v154
    %v199 = vpack.c.b16 %v159, %v155
    %v200 = vpack.c.b16 %v164, %v160
    %v201 = vpack.c.b16 %v165, %v161
    %v202 = vpack.c.b16 %v166, %v162
    %v203 = vpack.c.b16 %v167, %v163
    %v204 = vpack.c.b16 %v172, %v168
    %v205 = vpack.c.b16 %v173, %v169
    %v206 = vpack.c.b16 %v174, %v170
    %v207 = vpack.c.b16 %v175, %v171
    %240 = vmatprep.subr.bf16.mxu0 %v205
    %241 = vmatpush1.bf16.msra.mxu0 %v204
    %242 = vmatprep.subr.bf16.mxu0 %v201
    %243 = vmatpush1.bf16.msra.mxu0 %v200
    %244 = vmatprep.subr.bf16.mxu0 %v197
    %245 = vmatpush1.bf16.msra.mxu0 %v196
    %246 = vmatprep.subr.bf16.mxu0 %v193
    %247 = vmatpush1.bf16.msra.mxu0 %v192
    %248 = vmatprep.subr.bf16.mxu0 %v189
    %249 = vmatpush1.bf16.msra.mxu0 %v188
    %250 = vmatprep.subr.bf16.mxu0 %v185
    %251 = vmatpush1.bf16.msra.mxu0 %v184
    %252 = vmatprep.subr.bf16.mxu0 %v181
    %253 = vmatpush1.bf16.msra.mxu0 %v180
    %254 = vmatprep.subr.bf16.mxu0 %v177
    %255 = vmatpush1.bf16.msra.mxu0 %v176
    %256 = vmatprep.subr.bf16.mxu0 0
    %257 = vmatpush2.bf16.msra.mxu0 0
    %258 = vmatprep.subr.bf16.mxu0 0
    %259 = vmatpush2.bf16.msra.mxu0 0
    %260 = vmatprep.subr.bf16.mxu0 0
    %261 = vmatpush2.bf16.msra.mxu0 0
    %262 = vmatprep.subr.bf16.mxu0 0
    %263 = vmatpush2.bf16.msra.mxu0 0
    %264 = vmatprep.subr.bf16.mxu0 0
    %265 = vmatpush2.bf16.msra.mxu0 0
    %266 = vmatprep.subr.bf16.mxu0 0
    %267 = vmatpush2.bf16.msra.mxu0 0
    %268 = vmatprep.subr.bf16.mxu0 0
    %269 = vmatpush2.bf16.msra.mxu0 0
    %270 = vmatprep.subr.bf16.mxu0 0
    %271 = vmatpush2.bf16.msra.mxu0 0
    %272 = vmatprep.mubr.bf16.mxu0 0
    %273 = vmatmul.mubr.bf16.gmra.mxu0 %v79
    %v274 = vpop.f32.mrf.mxu0
    %v275 = vadd.f32 0.0, %v274
    %v276 = vpop.f32.mrf.mxu0
    %v277 = vadd.f32 0.0, %v276
    %v278 = vpop.f32.mrf.mxu0
    %v279 = vpop.f32.mrf.mxu0
    %280 = vdwg.mxu0
    %281 = vmatprep.subr.bf16.mxu0 %v207
    %282 = vmatpush1.bf16.msra.mxu0 %v206
    %283 = vmatprep.subr.bf16.mxu0 %v203
    %284 = vmatpush1.bf16.msra.mxu0 %v202
    %285 = vmatprep.subr.bf16.mxu0 %v199
    %286 = vmatpush1.bf16.msra.mxu0 %v198
    %287 = vmatprep.subr.bf16.mxu0 %v195
    %288 = vmatpush1.bf16.msra.mxu0 %v194
    %289 = vmatprep.subr.bf16.mxu0 %v191
    %290 = vmatpush1.bf16.msra.mxu0 %v190
    %291 = vmatprep.subr.bf16.mxu0 %v187
    %292 = vmatpush1.bf16.msra.mxu0 %v186
    %293 = vmatprep.subr.bf16.mxu0 %v183
    %294 = vmatpush1.bf16.msra.mxu0 %v182
    %295 = vmatprep.subr.bf16.mxu0 %v179
    %296 = vmatpush1.bf16.msra.mxu0 %v178
    %297 = vmatprep.subr.bf16.mxu0 0
    %298 = vmatpush2.bf16.msra.mxu0 0
    %299 = vmatprep.subr.bf16.mxu0 0
    %300 = vmatpush2.bf16.msra.mxu0 0
    %301 = vmatprep.subr.bf16.mxu0 0
    %302 = vmatpush2.bf16.msra.mxu0 0
    %303 = vmatprep.subr.bf16.mxu0 0
    %304 = vmatpush2.bf16.msra.mxu0 0
    %305 = vmatprep.subr.bf16.mxu0 0
    %306 = vmatpush2.bf16.msra.mxu0 0
    %307 = vmatprep.subr.bf16.mxu0 0
    %308 = vmatpush2.bf16.msra.mxu0 0
    %309 = vmatprep.subr.bf16.mxu0 0
    %310 = vmatpush2.bf16.msra.mxu0 0
    %311 = vmatprep.subr.bf16.mxu0 0
    %312 = vmatpush2.bf16.msra.mxu0 0
    %313 = vmatprep.mubr.bf16.mxu0 0
    %314 = vmatmul.mubr.bf16.gmra.mxu0 %v79
    %v315 = vpop.f32.mrf.mxu0
    %v316 = vadd.f32 0.0, %v315
    %v317 = vpop.f32.mrf.mxu0
    %v318 = vadd.f32 0.0, %v317
    %v319 = vpop.f32.mrf.mxu0
    %v320 = vpop.f32.mrf.mxu0
    %321 = vdwg.mxu0
    %v322 = vadd.f32 %v75, %v275
    %v323 = vadd.f32 %v76, %v277
    %v324 = vadd.f32 %v77, %v316
    %v325 = vadd.f32 %v78, %v318
    %v326 = vxor.u32 %v322, 2147483648
    %v327 = vxor.u32 %v323, 2147483648
    %v328 = vxor.u32 %v324, 2147483648
    %v329 = vmul.f32 %v326, 1.442695
    %v330 = vpow.pop %v329
    %v331 = vmul.f32 %v327, 1.442695
    %v332 = vpow.pop %v331
    %v333 = vmul.f32 %v328, 1.442695
    %v334 = vpow.pop %v333
    %v335 = vadd.f32 %v330, 1.0
    %v336 = vadd.f32 %v332, 1.0
    %v337 = vadd.f32 %v334, 1.0
    %v338 = vrcp.pop %v335
    %v339 = vmul.f32 1.0, %v338
    %v340 = vrcp.pop %v336
    %v341 = vmul.f32 1.0, %v340
    %v342 = vrcp.pop %v337
    %v343 = vmul.f32 1.0, %v342
    %v344 = vtanh.pop %v325
    %v345 = vmul.f32 %v341, %v72
    %v346 = vmul.f32 %v339, %v344
    %v347 = vadd.f32 %v345, %v346
    %v348 = vtanh.pop %v347
    %v349 = vmul.f32 %v343, %v348
    %s350 = scalar_lea.vmem %s0, 16
    %v351 = vld [vmem:[%s350] sm:$0xff]
    %v352 = vld [vmem:[%s350 + $0x8] sm:$0xff]
    %v353 = vunpack.c.l.bf16 %v351
    %v354 = vunpack.c.h.bf16 %v351
    %v355 = vunpack.c.l.bf16 %v352
    %v356 = vunpack.c.h.bf16 %v352
    %v357 = vpack.c.bf16 %v349, %v349
    %358 = vmatprep.subr.bf16.mxu0 %v205
    %359 = vmatpush1.bf16.msra.mxu0 %v204
    %360 = vmatprep.subr.bf16.mxu0 %v201
    %361 = vmatpush1.bf16.msra.mxu0 %v200
    %362 = vmatprep.subr.bf16.mxu0 %v197
    %363 = vmatpush1.bf16.msra.mxu0 %v196
    %364 = vmatprep.subr.bf16.mxu0 %v193
    %365 = vmatpush1.bf16.msra.mxu0 %v192
    %366 = vmatprep.subr.bf16.mxu0 %v189
    %367 = vmatpush1.bf16.msra.mxu0 %v188
    %368 = vmatprep.subr.bf16.mxu0 %v185
    %369 = vmatpush1.bf16.msra.mxu0 %v184
    %370 = vmatprep.subr.bf16.mxu0 %v181
    %371 = vmatpush1.bf16.msra.mxu0 %v180
    %372 = vmatprep.subr.bf16.mxu0 %v177
    %373 = vmatpush1.bf16.msra.mxu0 %v176
    %374 = vmatprep.subr.bf16.mxu0 0
    %375 = vmatpush2.bf16.msra.mxu0 0
    %376 = vmatprep.subr.bf16.mxu0 0
    %377 = vmatpush2.bf16.msra.mxu0 0
    %378 = vmatprep.subr.bf16.mxu0 0
    %379 = vmatpush2.bf16.msra.mxu0 0
    %380 = vmatprep.subr.bf16.mxu0 0
    %381 = vmatpush2.bf16.msra.mxu0 0
    %382 = vmatprep.subr.bf16.mxu0 0
    %383 = vmatpush2.bf16.msra.mxu0 0
    %384 = vmatprep.subr.bf16.mxu0 0
    %385 = vmatpush2.bf16.msra.mxu0 0
    %386 = vmatprep.subr.bf16.mxu0 0
    %387 = vmatpush2.bf16.msra.mxu0 0
    %388 = vmatprep.subr.bf16.mxu0 0
    %389 = vmatpush2.bf16.msra.mxu0 0
    %390 = vmatprep.mubr.bf16.mxu0 0
    %391 = vmatmul.mubr.bf16.gmra.mxu0 %v357
    %v392 = vpop.f32.mrf.mxu0
    %v393 = vadd.f32 0.0, %v392
    %v394 = vpop.f32.mrf.mxu0
    %v395 = vadd.f32 0.0, %v394
    %v396 = vpop.f32.mrf.mxu0
    %v397 = vpop.f32.mrf.mxu0
    %398 = vdwg.mxu0
    %399 = vmatprep.subr.bf16.mxu0 %v207
    %400 = vmatpush1.bf16.msra.mxu0 %v206
    %401 = vmatprep.subr.bf16.mxu0 %v203
    %402 = vmatpush1.bf16.msra.mxu0 %v202
    %403 = vmatprep.subr.bf16.mxu0 %v199
    %404 = vmatpush1.bf16.msra.mxu0 %v198
    %405 = vmatprep.subr.bf16.mxu0 %v195
    %406 = vmatpush1.bf16.msra.mxu0 %v194
    %407 = vmatprep.subr.bf16.mxu0 %v191
    %408 = vmatpush1.bf16.msra.mxu0 %v190
    %409 = vmatprep.subr.bf16.mxu0 %v187
    %410 = vmatpush1.bf16.msra.mxu0 %v186
    %411 = vmatprep.subr.bf16.mxu0 %v183
    %412 = vmatpush1.bf16.msra.mxu0 %v182
    %413 = vmatprep.subr.bf16.mxu0 %v179
    %414 = vmatpush1.bf16.msra.mxu0 %v178
    %415 = vmatprep.subr.bf16.mxu0 0
    %416 = vmatpush2.bf16.msra.mxu0 0
    %417 = vmatprep.subr.bf16.mxu0 0
    %418 = vmatpush2.bf16.msra.mxu0 0
    %419 = vmatprep.subr.bf16.mxu0 0
    %420 = vmatpush2.bf16.msra.mxu0 0
    %421 = vmatprep.subr.bf16.mxu0 0
    %422 = vmatpush2.bf16.msra.mxu0 0
    %423 = vmatprep.subr.bf16.mxu0 0
    %424 = vmatpush2.bf16.msra.mxu0 0
    %425 = vmatprep.subr.bf16.mxu0 0
    %426 = vmatpush2.bf16.msra.mxu0 0
    %427 = vmatprep.subr.bf16.mxu0 0
    %428 = vmatpush2.bf16.msra.mxu0 0
    %429 = vmatprep.subr.bf16.mxu0 0
    %430 = vmatpush2.bf16.msra.mxu0 0
    %431 = vmatprep.mubr.bf16.mxu0 0
    %432 = vmatmul.mubr.bf16.gmra.mxu0 %v357
    %v433 = vpop.f32.mrf.mxu0
    %v434 = vadd.f32 0.0, %v433
    %v435 = vpop.f32.mrf.mxu0
    %v436 = vadd.f32 0.0, %v435
    %v437 = vpop.f32.mrf.mxu0
    %v438 = vpop.f32.mrf.mxu0
    %439 = vdwg.mxu0
    %v440 = vadd.f32 %v353, %v393
    %v441 = vadd.f32 %v354, %v395
    %v442 = vadd.f32 %v355, %v434
    %v443 = vadd.f32 %v356, %v436
    %v444 = vxor.u32 %v440, 2147483648
    %v445 = vxor.u32 %v441, 2147483648
    %v446 = vxor.u32 %v442, 2147483648
    %v447 = vmul.f32 %v444, 1.442695
    %v448 = vpow.pop %v447
    %v449 = vmul.f32 %v445, 1.442695
    %v450 = vpow.pop %v449
    %v451 = vmul.f32 %v446, 1.442695
    %v452 = vpow.pop %v451
    %v453 = vadd.f32 %v448, 1.0
    %v454 = vadd.f32 %v450, 1.0
    %v455 = vadd.f32 %v452, 1.0
    %v456 = vrcp.pop %v453
    %v457 = vmul.f32 1.0, %v456
    %v458 = vrcp.pop %v454
    %v459 = vmul.f32 1.0, %v458
    %v460 = vrcp.pop %v455
    %v461 = vmul.f32 1.0, %v460
    %v462 = vtanh.pop %v443
    %v463 = vmul.f32 %v459, %v347
    %v464 = vmul.f32 %v457, %v462
    %v465 = vadd.f32 %v463, %v464
    %v466 = vtanh.pop %v465
    %v467 = vmul.f32 %v461, %v466
    %s468 = scalar_lea.vmem %s0, 32
    %v469 = vld [vmem:[%s468] sm:$0xff]
    %v470 = vld [vmem:[%s468 + $0x8] sm:$0xff]
    %v471 = vunpack.c.l.bf16 %v469
    %v472 = vunpack.c.h.bf16 %v469
    %v473 = vunpack.c.l.bf16 %v470
    %v474 = vunpack.c.h.bf16 %v470
    %v475 = vpack.c.bf16 %v467, %v467
    %476 = vmatprep.subr.bf16.mxu0 %v205
    %477 = vmatpush1.bf16.msra.mxu0 %v204
    %478 = vmatprep.subr.bf16.mxu0 %v201
    %479 = vmatpush1.bf16.msra.mxu0 %v200
    %480 = vmatprep.subr.bf16.mxu0 %v197
    %481 = vmatpush1.bf16.msra.mxu0 %v196
    %482 = vmatprep.subr.bf16.mxu0 %v193
    %483 = vmatpush1.bf16.msra.mxu0 %v192
    %484 = vmatprep.subr.bf16.mxu0 %v189
    %485 = vmatpush1.bf16.msra.mxu0 %v188
    %486 = vmatprep.subr.bf16.mxu0 %v185
    %487 = vmatpush1.bf16.msra.mxu0 %v184
    %488 = vmatprep.subr.bf16.mxu0 %v181
    %489 = vmatpush1.bf16.msra.mxu0 %v180
    %490 = vmatprep.subr.bf16.mxu0 %v177
    %491 = vmatpush1.bf16.msra.mxu0 %v176
    %492 = vmatprep.subr.bf16.mxu0 0
    %493 = vmatpush2.bf16.msra.mxu0 0
    %494 = vmatprep.subr.bf16.mxu0 0
    %495 = vmatpush2.bf16.msra.mxu0 0
    %496 = vmatprep.subr.bf16.mxu0 0
    %497 = vmatpush2.bf16.msra.mxu0 0
    %498 = vmatprep.subr.bf16.mxu0 0
    %499 = vmatpush2.bf16.msra.mxu0 0
    %500 = vmatprep.subr.bf16.mxu0 0
    %501 = vmatpush2.bf16.msra.mxu0 0
    %502 = vmatprep.subr.bf16.mxu0 0
    %503 = vmatpush2.bf16.msra.mxu0 0
    %504 = vmatprep.subr.bf16.mxu0 0
    %505 = vmatpush2.bf16.msra.mxu0 0
    %506 = vmatprep.subr.bf16.mxu0 0
    %507 = vmatpush2.bf16.msra.mxu0 0
    %508 = vmatprep.mubr.bf16.mxu0 0
    %509 = vmatmul.mubr.bf16.gmra.mxu0 %v475
    %v510 = vpop.f32.mrf.mxu0
    %v511 = vadd.f32 0.0, %v510
    %v512 = vpop.f32.mrf.mxu0
    %v513 = vadd.f32 0.0, %v512
    %v514 = vpop.f32.mrf.mxu0
    %v515 = vpop.f32.mrf.mxu0
    %516 = vdwg.mxu0
    %517 = vmatprep.subr.bf16.mxu0 %v207
    %518 = vmatpush1.bf16.msra.mxu0 %v206
    %519 = vmatprep.subr.bf16.mxu0 %v203
    %520 = vmatpush1.bf16.msra.mxu0 %v202
    %521 = vmatprep.subr.bf16.mxu0 %v199
    %522 = vmatpush1.bf16.msra.mxu0 %v198
    %523 = vmatprep.subr.bf16.mxu0 %v195
    %524 = vmatpush1.bf16.msra.mxu0 %v194
    %525 = vmatprep.subr.bf16.mxu0 %v191
    %526 = vmatpush1.bf16.msra.mxu0 %v190
    %527 = vmatprep.subr.bf16.mxu0 %v187
    %528 = vmatpush1.bf16.msra.mxu0 %v186
    %529 = vmatprep.subr.bf16.mxu0 %v183
    %530 = vmatpush1.bf16.msra.mxu0 %v182
    %531 = vmatprep.subr.bf16.mxu0 %v179
    %532 = vmatpush1.bf16.msra.mxu0 %v178
    %533 = vmatprep.subr.bf16.mxu0 0
    %534 = vmatpush2.bf16.msra.mxu0 0
    %535 = vmatprep.subr.bf16.mxu0 0
    %536 = vmatpush2.bf16.msra.mxu0 0
    %537 = vmatprep.subr.bf16.mxu0 0
    %538 = vmatpush2.bf16.msra.mxu0 0
    %539 = vmatprep.subr.bf16.mxu0 0
    %540 = vmatpush2.bf16.msra.mxu0 0
    %541 = vmatprep.subr.bf16.mxu0 0
    %542 = vmatpush2.bf16.msra.mxu0 0
    %543 = vmatprep.subr.bf16.mxu0 0
    %544 = vmatpush2.bf16.msra.mxu0 0
    %545 = vmatprep.subr.bf16.mxu0 0
    %546 = vmatpush2.bf16.msra.mxu0 0
    %547 = vmatprep.subr.bf16.mxu0 0
    %548 = vmatpush2.bf16.msra.mxu0 0
    %549 = vmatprep.mubr.bf16.mxu0 0
    %550 = vmatmul.mubr.bf16.gmra.mxu0 %v475
    %v551 = vpop.f32.mrf.mxu0
    %v552 = vadd.f32 0.0, %v551
    %v553 = vpop.f32.mrf.mxu0
    %v554 = vadd.f32 0.0, %v553
    %v555 = vpop.f32.mrf.mxu0
    %v556 = vpop.f32.mrf.mxu0
    %557 = vdwg.mxu0
    %v558 = vadd.f32 %v471, %v511
    %v559 = vadd.f32 %v472, %v513
    %v560 = vadd.f32 %v473, %v552
    %v561 = vadd.f32 %v474, %v554
    %v562 = vxor.u32 %v558, 2147483648
    %v563 = vxor.u32 %v559, 2147483648
    %v564 = vxor.u32 %v560, 2147483648
    %v565 = vmul.f32 %v562, 1.442695
    %v566 = vpow.pop %v565
    %v567 = vmul.f32 %v563, 1.442695
    %v568 = vpow.pop %v567
    %v569 = vmul.f32 %v564, 1.442695
    %v570 = vpow.pop %v569
    %v571 = vadd.f32 %v566, 1.0
    %v572 = vadd.f32 %v568, 1.0
    %v573 = vadd.f32 %v570, 1.0
    %v574 = vrcp.pop %v571
    %v575 = vmul.f32 1.0, %v574
    %v576 = vrcp.pop %v572
    %v577 = vmul.f32 1.0, %v576
    %v578 = vrcp.pop %v573
    %v579 = vmul.f32 1.0, %v578
    %v580 = vtanh.pop %v561
    %v581 = vmul.f32 %v577, %v465
    %v582 = vmul.f32 %v575, %v580
    %v583 = vadd.f32 %v581, %v582
    %v584 = vtanh.pop %v583
    %v585 = vmul.f32 %v579, %v584
    %s586 = scalar_lea.vmem %s0, 48
    %v587 = vld [vmem:[%s586] sm:$0xff]
    %v588 = vld [vmem:[%s586 + $0x8] sm:$0xff]
    %v589 = vunpack.c.l.bf16 %v587
    %v590 = vunpack.c.h.bf16 %v587
    %v591 = vunpack.c.l.bf16 %v588
    %v592 = vunpack.c.h.bf16 %v588
    %v593 = vpack.c.bf16 %v585, %v585
    %594 = vmatprep.subr.bf16.mxu0 %v205
    %595 = vmatpush1.bf16.msra.mxu0 %v204
    %596 = vmatprep.subr.bf16.mxu0 %v201
    %597 = vmatpush1.bf16.msra.mxu0 %v200
    %598 = vmatprep.subr.bf16.mxu0 %v197
    %599 = vmatpush1.bf16.msra.mxu0 %v196
    %600 = vmatprep.subr.bf16.mxu0 %v193
    %601 = vmatpush1.bf16.msra.mxu0 %v192
    %602 = vmatprep.subr.bf16.mxu0 %v189
    %603 = vmatpush1.bf16.msra.mxu0 %v188
    %604 = vmatprep.subr.bf16.mxu0 %v185
    %605 = vmatpush1.bf16.msra.mxu0 %v184
    %606 = vmatprep.subr.bf16.mxu0 %v181
    %607 = vmatpush1.bf16.msra.mxu0 %v180
    %608 = vmatprep.subr.bf16.mxu0 %v177
    %609 = vmatpush1.bf16.msra.mxu0 %v176
    %610 = vmatprep.subr.bf16.mxu0 0
    %611 = vmatpush2.bf16.msra.mxu0 0
    %612 = vmatprep.subr.bf16.mxu0 0
    %613 = vmatpush2.bf16.msra.mxu0 0
    %614 = vmatprep.subr.bf16.mxu0 0
    %615 = vmatpush2.bf16.msra.mxu0 0
    %616 = vmatprep.subr.bf16.mxu0 0
    %617 = vmatpush2.bf16.msra.mxu0 0
    %618 = vmatprep.subr.bf16.mxu0 0
    %619 = vmatpush2.bf16.msra.mxu0 0
    %620 = vmatprep.subr.bf16.mxu0 0
    %621 = vmatpush2.bf16.msra.mxu0 0
    %622 = vmatprep.subr.bf16.mxu0 0
    %623 = vmatpush2.bf16.msra.mxu0 0
    %624 = vmatprep.subr.bf16.mxu0 0
    %625 = vmatpush2.bf16.msra.mxu0 0
    %626 = vmatprep.mubr.bf16.mxu0 0
    %627 = vmatmul.mubr.bf16.gmra.mxu0 %v593
    %v628 = vpop.f32.mrf.mxu0
    %v629 = vadd.f32 0.0, %v628
    %v630 = vpop.f32.mrf.mxu0
    %v631 = vadd.f32 0.0, %v630
    %v632 = vpop.f32.mrf.mxu0
    %v633 = vpop.f32.mrf.mxu0
    %634 = vdwg.mxu0
    %635 = vmatprep.subr.bf16.mxu0 %v207
    %636 = vmatpush1.bf16.msra.mxu0 %v206
    %637 = vmatprep.subr.bf16.mxu0 %v203
    %638 = vmatpush1.bf16.msra.mxu0 %v202
    %639 = vmatprep.subr.bf16.mxu0 %v199
    %640 = vmatpush1.bf16.msra.mxu0 %v198
    %641 = vmatprep.subr.bf16.mxu0 %v195
    %642 = vmatpush1.bf16.msra.mxu0 %v194
    %643 = vmatprep.subr.bf16.mxu0 %v191
    %644 = vmatpush1.bf16.msra.mxu0 %v190
    %645 = vmatprep.subr.bf16.mxu0 %v187
    %646 = vmatpush1.bf16.msra.mxu0 %v186
    %647 = vmatprep.subr.bf16.mxu0 %v183
    %648 = vmatpush1.bf16.msra.mxu0 %v182
    %649 = vmatprep.subr.bf16.mxu0 %v179
    %650 = vmatpush1.bf16.msra.mxu0 %v178
    %651 = vmatprep.subr.bf16.mxu0 0
    %652 = vmatpush2.bf16.msra.mxu0 0
    %653 = vmatprep.subr.bf16.mxu0 0
    %654 = vmatpush2.bf16.msra.mxu0 0
    %655 = vmatprep.subr.bf16.mxu0 0
    %656 = vmatpush2.bf16.msra.mxu0 0
    %657 = vmatprep.subr.bf16.mxu0 0
    %658 = vmatpush2.bf16.msra.mxu0 0
    %659 = vmatprep.subr.bf16.mxu0 0
    %660 = vmatpush2.bf16.msra.mxu0 0
    %661 = vmatprep.subr.bf16.mxu0 0
    %662 = vmatpush2.bf16.msra.mxu0 0
    %663 = vmatprep.subr.bf16.mxu0 0
    %664 = vmatpush2.bf16.msra.mxu0 0
    %665 = vmatprep.subr.bf16.mxu0 0
    %666 = vmatpush2.bf16.msra.mxu0 0
    %667 = vmatprep.mubr.bf16.mxu0 0
    %668 = vmatmul.mubr.bf16.gmra.mxu0 %v593
    %v669 = vpop.f32.mrf.mxu0
    %v670 = vadd.f32 0.0, %v669
    %v671 = vpop.f32.mrf.mxu0
    %v672 = vadd.f32 0.0, %v671
    %v673 = vpop.f32.mrf.mxu0
    %v674 = vpop.f32.mrf.mxu0
    %675 = vdwg.mxu0
    %v676 = vadd.f32 %v589, %v629
    %v677 = vadd.f32 %v590, %v631
    %v678 = vadd.f32 %v591, %v670
    %v679 = vadd.f32 %v592, %v672
    %v680 = vxor.u32 %v676, 2147483648
    %v681 = vxor.u32 %v677, 2147483648
    %v682 = vxor.u32 %v678, 2147483648
    %v683 = vmul.f32 %v680, 1.442695
    %v684 = vpow.pop %v683
    %v685 = vmul.f32 %v681, 1.442695
    %v686 = vpow.pop %v685
    %v687 = vmul.f32 %v682, 1.442695
    %v688 = vpow.pop %v687
    %v689 = vadd.f32 %v684, 1.0
    %v690 = vadd.f32 %v686, 1.0
    %v691 = vadd.f32 %v688, 1.0
    %v692 = vrcp.pop %v689
    %v693 = vmul.f32 1.0, %v692
    %v694 = vrcp.pop %v690
    %v695 = vmul.f32 1.0, %v694
    %v696 = vrcp.pop %v691
    %v697 = vmul.f32 1.0, %v696
    %v698 = vtanh.pop %v679
    %v699 = vmul.f32 %v695, %v583
    %v700 = vmul.f32 %v693, %v698
    %v701 = vadd.f32 %v699, %v700
    %v702 = vtanh.pop %v701
    %v703 = vmul.f32 %v697, %v702
    %s704 = scalar_lea.vmem %s0, 64
    %v705 = vld [vmem:[%s704] sm:$0xff]
    %v706 = vld [vmem:[%s704 + $0x8] sm:$0xff]
    %v707 = vunpack.c.l.bf16 %v705
    %v708 = vunpack.c.h.bf16 %v705
    %v709 = vunpack.c.l.bf16 %v706
    %v710 = vunpack.c.h.bf16 %v706
    %v711 = vpack.c.bf16 %v703, %v703
    %712 = vmatprep.subr.bf16.mxu0 %v205
    %713 = vmatpush1.bf16.msra.mxu0 %v204
    %714 = vmatprep.subr.bf16.mxu0 %v201
    %715 = vmatpush1.bf16.msra.mxu0 %v200
    %716 = vmatprep.subr.bf16.mxu0 %v197
    %717 = vmatpush1.bf16.msra.mxu0 %v196
    %718 = vmatprep.subr.bf16.mxu0 %v193
    %719 = vmatpush1.bf16.msra.mxu0 %v192
    %720 = vmatprep.subr.bf16.mxu0 %v189
    %721 = vmatpush1.bf16.msra.mxu0 %v188
    %722 = vmatprep.subr.bf16.mxu0 %v185
    %723 = vmatpush1.bf16.msra.mxu0 %v184
    %724 = vmatprep.subr.bf16.mxu0 %v181
    %725 = vmatpush1.bf16.msra.mxu0 %v180
    %726 = vmatprep.subr.bf16.mxu0 %v177
    %727 = vmatpush1.bf16.msra.mxu0 %v176
    %728 = vmatprep.subr.bf16.mxu0 0
    %729 = vmatpush2.bf16.msra.mxu0 0
    %730 = vmatprep.subr.bf16.mxu0 0
    %731 = vmatpush2.bf16.msra.mxu0 0
    %732 = vmatprep.subr.bf16.mxu0 0
    %733 = vmatpush2.bf16.msra.mxu0 0
    %734 = vmatprep.subr.bf16.mxu0 0
    %735 = vmatpush2.bf16.msra.mxu0 0
    %736 = vmatprep.subr.bf16.mxu0 0
    %737 = vmatpush2.bf16.msra.mxu0 0
    %738 = vmatprep.subr.bf16.mxu0 0
    %739 = vmatpush2.bf16.msra.mxu0 0
    %740 = vmatprep.subr.bf16.mxu0 0
    %741 = vmatpush2.bf16.msra.mxu0 0
    %742 = vmatprep.subr.bf16.mxu0 0
    %743 = vmatpush2.bf16.msra.mxu0 0
    %744 = vmatprep.mubr.bf16.mxu0 0
    %745 = vmatmul.mubr.bf16.gmra.mxu0 %v711
    %v746 = vpop.f32.mrf.mxu0
    %v747 = vadd.f32 0.0, %v746
    %v748 = vpop.f32.mrf.mxu0
    %v749 = vadd.f32 0.0, %v748
    %v750 = vpop.f32.mrf.mxu0
    %v751 = vpop.f32.mrf.mxu0
    %752 = vdwg.mxu0
    %753 = vmatprep.subr.bf16.mxu0 %v207
    %754 = vmatpush1.bf16.msra.mxu0 %v206
    %755 = vmatprep.subr.bf16.mxu0 %v203
    %756 = vmatpush1.bf16.msra.mxu0 %v202
    %757 = vmatprep.subr.bf16.mxu0 %v199
    %758 = vmatpush1.bf16.msra.mxu0 %v198
    %759 = vmatprep.subr.bf16.mxu0 %v195
    %760 = vmatpush1.bf16.msra.mxu0 %v194
    %761 = vmatprep.subr.bf16.mxu0 %v191
    %762 = vmatpush1.bf16.msra.mxu0 %v190
    %763 = vmatprep.subr.bf16.mxu0 %v187
    %764 = vmatpush1.bf16.msra.mxu0 %v186
    %765 = vmatprep.subr.bf16.mxu0 %v183
    %766 = vmatpush1.bf16.msra.mxu0 %v182
    %767 = vmatprep.subr.bf16.mxu0 %v179
    %768 = vmatpush1.bf16.msra.mxu0 %v178
    %769 = vmatprep.subr.bf16.mxu0 0
    %770 = vmatpush2.bf16.msra.mxu0 0
    %771 = vmatprep.subr.bf16.mxu0 0
    %772 = vmatpush2.bf16.msra.mxu0 0
    %773 = vmatprep.subr.bf16.mxu0 0
    %774 = vmatpush2.bf16.msra.mxu0 0
    %775 = vmatprep.subr.bf16.mxu0 0
    %776 = vmatpush2.bf16.msra.mxu0 0
    %777 = vmatprep.subr.bf16.mxu0 0
    %778 = vmatpush2.bf16.msra.mxu0 0
    %779 = vmatprep.subr.bf16.mxu0 0
    %780 = vmatpush2.bf16.msra.mxu0 0
    %781 = vmatprep.subr.bf16.mxu0 0
    %782 = vmatpush2.bf16.msra.mxu0 0
    %783 = vmatprep.subr.bf16.mxu0 0
    %784 = vmatpush2.bf16.msra.mxu0 0
    %785 = vmatprep.mubr.bf16.mxu0 0
    %786 = vmatmul.mubr.bf16.gmra.mxu0 %v711
    %v787 = vpop.f32.mrf.mxu0
    %v788 = vadd.f32 0.0, %v787
    %v789 = vpop.f32.mrf.mxu0
    %v790 = vadd.f32 0.0, %v789
    %v791 = vpop.f32.mrf.mxu0
    %v792 = vpop.f32.mrf.mxu0
    %793 = vdwg.mxu0
    %v794 = vadd.f32 %v707, %v747
    %v795 = vadd.f32 %v708, %v749
    %v796 = vadd.f32 %v709, %v788
    %v797 = vadd.f32 %v710, %v790
    %v798 = vxor.u32 %v794, 2147483648
    %v799 = vxor.u32 %v795, 2147483648
    %v800 = vxor.u32 %v796, 2147483648
    %v801 = vmul.f32 %v798, 1.442695
    %v802 = vpow.pop %v801
    %v803 = vmul.f32 %v799, 1.442695
    %v804 = vpow.pop %v803
    %v805 = vmul.f32 %v800, 1.442695
    %v806 = vpow.pop %v805
    %v807 = vadd.f32 %v802, 1.0
    %v808 = vadd.f32 %v804, 1.0
    %v809 = vadd.f32 %v806, 1.0
    %v810 = vrcp.pop %v807
    %v811 = vmul.f32 1.0, %v810
    %v812 = vrcp.pop %v808
    %v813 = vmul.f32 1.0, %v812
    %v814 = vrcp.pop %v809
    %v815 = vmul.f32 1.0, %v814
    %v816 = vtanh.pop %v797
    %v817 = vmul.f32 %v813, %v701
    %v818 = vmul.f32 %v811, %v816
    %v819 = vadd.f32 %v817, %v818
    %v820 = vtanh.pop %v819
    %v821 = vmul.f32 %v815, %v820
    %s822 = scalar_lea.vmem %s0, 80
    %v823 = vld [vmem:[%s822] sm:$0xff]
    %v824 = vld [vmem:[%s822 + $0x8] sm:$0xff]
    %v825 = vunpack.c.l.bf16 %v823
    %v826 = vunpack.c.h.bf16 %v823
    %v827 = vunpack.c.l.bf16 %v824
    %v828 = vunpack.c.h.bf16 %v824
    %v829 = vpack.c.bf16 %v821, %v821
    %830 = vmatprep.subr.bf16.mxu0 %v205
    %831 = vmatpush1.bf16.msra.mxu0 %v204
    %832 = vmatprep.subr.bf16.mxu0 %v201
    %833 = vmatpush1.bf16.msra.mxu0 %v200
    %834 = vmatprep.subr.bf16.mxu0 %v197
    %835 = vmatpush1.bf16.msra.mxu0 %v196
    %836 = vmatprep.subr.bf16.mxu0 %v193
    %837 = vmatpush1.bf16.msra.mxu0 %v192
    %838 = vmatprep.subr.bf16.mxu0 %v189
    %839 = vmatpush1.bf16.msra.mxu0 %v188
    %840 = vmatprep.subr.bf16.mxu0 %v185
    %841 = vmatpush1.bf16.msra.mxu0 %v184
    %842 = vmatprep.subr.bf16.mxu0 %v181
    %843 = vmatpush1.bf16.msra.mxu0 %v180
    %844 = vmatprep.subr.bf16.mxu0 %v177
    %845 = vmatpush1.bf16.msra.mxu0 %v176
    %846 = vmatprep.subr.bf16.mxu0 0
    %847 = vmatpush2.bf16.msra.mxu0 0
    %848 = vmatprep.subr.bf16.mxu0 0
    %849 = vmatpush2.bf16.msra.mxu0 0
    %850 = vmatprep.subr.bf16.mxu0 0
    %851 = vmatpush2.bf16.msra.mxu0 0
    %852 = vmatprep.subr.bf16.mxu0 0
    %853 = vmatpush2.bf16.msra.mxu0 0
    %854 = vmatprep.subr.bf16.mxu0 0
    %855 = vmatpush2.bf16.msra.mxu0 0
    %856 = vmatprep.subr.bf16.mxu0 0
    %857 = vmatpush2.bf16.msra.mxu0 0
    %858 = vmatprep.subr.bf16.mxu0 0
    %859 = vmatpush2.bf16.msra.mxu0 0
    %860 = vmatprep.subr.bf16.mxu0 0
    %861 = vmatpush2.bf16.msra.mxu0 0
    %862 = vmatprep.mubr.bf16.mxu0 0
    %863 = vmatmul.mubr.bf16.gmra.mxu0 %v829
    %v864 = vpop.f32.mrf.mxu0
    %v865 = vadd.f32 0.0, %v864
    %v866 = vpop.f32.mrf.mxu0
    %v867 = vadd.f32 0.0, %v866
    %v868 = vpop.f32.mrf.mxu0
    %v869 = vpop.f32.mrf.mxu0
    %870 = vdwg.mxu0
    %871 = vmatprep.subr.bf16.mxu0 %v207
    %872 = vmatpush1.bf16.msra.mxu0 %v206
    %873 = vmatprep.subr.bf16.mxu0 %v203
    %874 = vmatpush1.bf16.msra.mxu0 %v202
    %875 = vmatprep.subr.bf16.mxu0 %v199
    %876 = vmatpush1.bf16.msra.mxu0 %v198
    %877 = vmatprep.subr.bf16.mxu0 %v195
    %878 = vmatpush1.bf16.msra.mxu0 %v194
    %879 = vmatprep.subr.bf16.mxu0 %v191
    %880 = vmatpush1.bf16.msra.mxu0 %v190
    %881 = vmatprep.subr.bf16.mxu0 %v187
    %882 = vmatpush1.bf16.msra.mxu0 %v186
    %883 = vmatprep.subr.bf16.mxu0 %v183
    %884 = vmatpush1.bf16.msra.mxu0 %v182
    %885 = vmatprep.subr.bf16.mxu0 %v179
    %886 = vmatpush1.bf16.msra.mxu0 %v178
    %887 = vmatprep.subr.bf16.mxu0 0
    %888 = vmatpush2.bf16.msra.mxu0 0
    %889 = vmatprep.subr.bf16.mxu0 0
    %890 = vmatpush2.bf16.msra.mxu0 0
    %891 = vmatprep.subr.bf16.mxu0 0
    %892 = vmatpush2.bf16.msra.mxu0 0
    %893 = vmatprep.subr.bf16.mxu0 0
    %894 = vmatpush2.bf16.msra.mxu0 0
    %895 = vmatprep.subr.bf16.mxu0 0
    %896 = vmatpush2.bf16.msra.mxu0 0
    %897 = vmatprep.subr.bf16.mxu0 0
    %898 = vmatpush2.bf16.msra.mxu0 0
    %899 = vmatprep.subr.bf16.mxu0 0
    %900 = vmatpush2.bf16.msra.mxu0 0
    %901 = vmatprep.subr.bf16.mxu0 0
    %902 = vmatpush2.bf16.msra.mxu0 0
    %903 = vmatprep.mubr.bf16.mxu0 0
    %904 = vmatmul.mubr.bf16.gmra.mxu0 %v829
    %v905 = vpop.f32.mrf.mxu0
    %v906 = vadd.f32 0.0, %v905
    %v907 = vpop.f32.mrf.mxu0
    %v908 = vadd.f32 0.0, %v907
    %v909 = vpop.f32.mrf.mxu0
    %v910 = vpop.f32.mrf.mxu0
    %911 = vdwg.mxu0
    %v912 = vadd.f32 %v825, %v865
    %v913 = vadd.f32 %v826, %v867
    %v914 = vadd.f32 %v827, %v906
    %v915 = vadd.f32 %v828, %v908
    %v916 = vxor.u32 %v912, 2147483648
    %v917 = vxor.u32 %v913, 2147483648
    %v918 = vxor.u32 %v914, 2147483648
    %v919 = vmul.f32 %v916, 1.442695
    %v920 = vpow.pop %v919
    %v921 = vmul.f32 %v917, 1.442695
    %v922 = vpow.pop %v921
    %v923 = vmul.f32 %v918, 1.442695
    %v924 = vpow.pop %v923
    %v925 = vadd.f32 %v920, 1.0
    %v926 = vadd.f32 %v922, 1.0
    %v927 = vadd.f32 %v924, 1.0
    %v928 = vrcp.pop %v925
    %v929 = vmul.f32 1.0, %v928
    %v930 = vrcp.pop %v926
    %v931 = vmul.f32 1.0, %v930
    %v932 = vrcp.pop %v927
    %v933 = vmul.f32 1.0, %v932
    %v934 = vtanh.pop %v915
    %v935 = vmul.f32 %v931, %v819
    %v936 = vmul.f32 %v929, %v934
    %v937 = vadd.f32 %v935, %v936
    %v938 = vtanh.pop %v937
    %v939 = vmul.f32 %v933, %v938
    %s940 = scalar_lea.vmem %s0, 96
    %v941 = vld [vmem:[%s940] sm:$0xff]
    %v942 = vld [vmem:[%s940 + $0x8] sm:$0xff]
    %v943 = vunpack.c.l.bf16 %v941
    %v944 = vunpack.c.h.bf16 %v941
    %v945 = vunpack.c.l.bf16 %v942
    %v946 = vunpack.c.h.bf16 %v942
    %v947 = vpack.c.bf16 %v939, %v939
    %948 = vmatprep.subr.bf16.mxu0 %v205
    %949 = vmatpush1.bf16.msra.mxu0 %v204
    %950 = vmatprep.subr.bf16.mxu0 %v201
    %951 = vmatpush1.bf16.msra.mxu0 %v200
    %952 = vmatprep.subr.bf16.mxu0 %v197
    %953 = vmatpush1.bf16.msra.mxu0 %v196
    %954 = vmatprep.subr.bf16.mxu0 %v193
    %955 = vmatpush1.bf16.msra.mxu0 %v192
    %956 = vmatprep.subr.bf16.mxu0 %v189
    %957 = vmatpush1.bf16.msra.mxu0 %v188
    %958 = vmatprep.subr.bf16.mxu0 %v185
    %959 = vmatpush1.bf16.msra.mxu0 %v184
    %960 = vmatprep.subr.bf16.mxu0 %v181
    %961 = vmatpush1.bf16.msra.mxu0 %v180
    %962 = vmatprep.subr.bf16.mxu0 %v177
    %963 = vmatpush1.bf16.msra.mxu0 %v176
    %964 = vmatprep.subr.bf16.mxu0 0
    %965 = vmatpush2.bf16.msra.mxu0 0
    %966 = vmatprep.subr.bf16.mxu0 0
    %967 = vmatpush2.bf16.msra.mxu0 0
    %968 = vmatprep.subr.bf16.mxu0 0
    %969 = vmatpush2.bf16.msra.mxu0 0
    %970 = vmatprep.subr.bf16.mxu0 0
    %971 = vmatpush2.bf16.msra.mxu0 0
    %972 = vmatprep.subr.bf16.mxu0 0
    %973 = vmatpush2.bf16.msra.mxu0 0
    %974 = vmatprep.subr.bf16.mxu0 0
    %975 = vmatpush2.bf16.msra.mxu0 0
    %976 = vmatprep.subr.bf16.mxu0 0
    %977 = vmatpush2.bf16.msra.mxu0 0
    %978 = vmatprep.subr.bf16.mxu0 0
    %979 = vmatpush2.bf16.msra.mxu0 0
    %980 = vmatprep.mubr.bf16.mxu0 0
    %981 = vmatmul.mubr.bf16.gmra.mxu0 %v947
    %v982 = vpop.f32.mrf.mxu0
    %v983 = vadd.f32 0.0, %v982
    %v984 = vpop.f32.mrf.mxu0
    %v985 = vadd.f32 0.0, %v984
    %v986 = vpop.f32.mrf.mxu0
    %v987 = vpop.f32.mrf.mxu0
    %988 = vdwg.mxu0
    %989 = vmatprep.subr.bf16.mxu0 %v207
    %990 = vmatpush1.bf16.msra.mxu0 %v206
    %991 = vmatprep.subr.bf16.mxu0 %v203
    %992 = vmatpush1.bf16.msra.mxu0 %v202
    %993 = vmatprep.subr.bf16.mxu0 %v199
    %994 = vmatpush1.bf16.msra.mxu0 %v198
    %995 = vmatprep.subr.bf16.mxu0 %v195
    %996 = vmatpush1.bf16.msra.mxu0 %v194
    %997 = vmatprep.subr.bf16.mxu0 %v191
    %998 = vmatpush1.bf16.msra.mxu0 %v190
    %999 = vmatprep.subr.bf16.mxu0 %v187
    %1000 = vmatpush1.bf16.msra.mxu0 %v186
    %1001 = vmatprep.subr.bf16.mxu0 %v183
    %1002 = vmatpush1.bf16.msra.mxu0 %v182
    %1003 = vmatprep.subr.bf16.mxu0 %v179
    %1004 = vmatpush1.bf16.msra.mxu0 %v178
    %1005 = vmatprep.subr.bf16.mxu0 0
    %1006 = vmatpush2.bf16.msra.mxu0 0
    %1007 = vmatprep.subr.bf16.mxu0 0
    %1008 = vmatpush2.bf16.msra.mxu0 0
    %1009 = vmatprep.subr.bf16.mxu0 0
    %1010 = vmatpush2.bf16.msra.mxu0 0
    %1011 = vmatprep.subr.bf16.mxu0 0
    %1012 = vmatpush2.bf16.msra.mxu0 0
    %1013 = vmatprep.subr.bf16.mxu0 0
    %1014 = vmatpush2.bf16.msra.mxu0 0
    %1015 = vmatprep.subr.bf16.mxu0 0
    %1016 = vmatpush2.bf16.msra.mxu0 0
    %1017 = vmatprep.subr.bf16.mxu0 0
    %1018 = vmatpush2.bf16.msra.mxu0 0
    %1019 = vmatprep.subr.bf16.mxu0 0
    %1020 = vmatpush2.bf16.msra.mxu0 0
    %1021 = vmatprep.mubr.bf16.mxu0 0
    %1022 = vmatmul.mubr.bf16.gmra.mxu0 %v947
    %v1023 = vpop.f32.mrf.mxu0
    %v1024 = vadd.f32 0.0, %v1023
    %v1025 = vpop.f32.mrf.mxu0
    %v1026 = vadd.f32 0.0, %v1025
    %v1027 = vpop.f32.mrf.mxu0
    %v1028 = vpop.f32.mrf.mxu0
    %1029 = vdwg.mxu0
    %v1030 = vadd.f32 %v943, %v983
    %v1031 = vadd.f32 %v944, %v985
    %v1032 = vadd.f32 %v945, %v1024
    %v1033 = vadd.f32 %v946, %v1026
    %v1034 = vxor.u32 %v1030, 2147483648
    %v1035 = vxor.u32 %v1031, 2147483648
    %v1036 = vxor.u32 %v1032, 2147483648
    %v1037 = vmul.f32 %v1034, 1.442695
    %v1038 = vpow.pop %v1037
    %v1039 = vmul.f32 %v1035, 1.442695
    %v1040 = vpow.pop %v1039
    %v1041 = vmul.f32 %v1036, 1.442695
    %v1042 = vpow.pop %v1041
    %v1043 = vadd.f32 %v1038, 1.0
    %v1044 = vadd.f32 %v1040, 1.0
    %v1045 = vadd.f32 %v1042, 1.0
    %v1046 = vrcp.pop %v1043
    %v1047 = vmul.f32 1.0, %v1046
    %v1048 = vrcp.pop %v1044
    %v1049 = vmul.f32 1.0, %v1048
    %v1050 = vrcp.pop %v1045
    %v1051 = vmul.f32 1.0, %v1050
    %v1052 = vtanh.pop %v1033
    %v1053 = vmul.f32 %v1049, %v937
    %v1054 = vmul.f32 %v1047, %v1052
    %v1055 = vadd.f32 %v1053, %v1054
    %v1056 = vtanh.pop %v1055
    %v1057 = vmul.f32 %v1051, %v1056
    %s1058 = scalar_lea.vmem %s0, 112
    %v1059 = vld [vmem:[%s1058] sm:$0xff]
    %v1060 = vld [vmem:[%s1058 + $0x8] sm:$0xff]
    %v1061 = vunpack.c.l.bf16 %v1059
    %v1062 = vunpack.c.h.bf16 %v1059
    %v1063 = vunpack.c.l.bf16 %v1060
    %v1064 = vunpack.c.h.bf16 %v1060
    %v1065 = vpack.c.bf16 %v1057, %v1057
    %1066 = vmatprep.subr.bf16.mxu0 %v205
    %1067 = vmatpush1.bf16.msra.mxu0 %v204
    %1068 = vmatprep.subr.bf16.mxu0 %v201
    %1069 = vmatpush1.bf16.msra.mxu0 %v200
    %1070 = vmatprep.subr.bf16.mxu0 %v197
    %1071 = vmatpush1.bf16.msra.mxu0 %v196
    %1072 = vmatprep.subr.bf16.mxu0 %v193
    %1073 = vmatpush1.bf16.msra.mxu0 %v192
    %1074 = vmatprep.subr.bf16.mxu0 %v189
    %1075 = vmatpush1.bf16.msra.mxu0 %v188
    %1076 = vmatprep.subr.bf16.mxu0 %v185
    %1077 = vmatpush1.bf16.msra.mxu0 %v184
    %1078 = vmatprep.subr.bf16.mxu0 %v181
    %1079 = vmatpush1.bf16.msra.mxu0 %v180
    %1080 = vmatprep.subr.bf16.mxu0 %v177
    %1081 = vmatpush1.bf16.msra.mxu0 %v176
    %1082 = vmatprep.subr.bf16.mxu0 0
    %1083 = vmatpush2.bf16.msra.mxu0 0
    %1084 = vmatprep.subr.bf16.mxu0 0
    %1085 = vmatpush2.bf16.msra.mxu0 0
    %1086 = vmatprep.subr.bf16.mxu0 0
    %1087 = vmatpush2.bf16.msra.mxu0 0
    %1088 = vmatprep.subr.bf16.mxu0 0
    %1089 = vmatpush2.bf16.msra.mxu0 0
    %1090 = vmatprep.subr.bf16.mxu0 0
    %1091 = vmatpush2.bf16.msra.mxu0 0
    %1092 = vmatprep.subr.bf16.mxu0 0
    %1093 = vmatpush2.bf16.msra.mxu0 0
    %1094 = vmatprep.subr.bf16.mxu0 0
    %1095 = vmatpush2.bf16.msra.mxu0 0
    %1096 = vmatprep.subr.bf16.mxu0 0
    %1097 = vmatpush2.bf16.msra.mxu0 0
    %1098 = vmatprep.mubr.bf16.mxu0 0
    %1099 = vmatmul.mubr.bf16.gmra.mxu0 %v1065
    %v1100 = vpop.f32.mrf.mxu0
    %v1101 = vadd.f32 0.0, %v1100
    %v1102 = vpop.f32.mrf.mxu0
    %v1103 = vadd.f32 0.0, %v1102
    %v1104 = vpop.f32.mrf.mxu0
    %v1105 = vpop.f32.mrf.mxu0
    %1106 = vdwg.mxu0
    %1107 = vmatprep.subr.bf16.mxu0 %v207
    %1108 = vmatpush1.bf16.msra.mxu0 %v206
    %1109 = vmatprep.subr.bf16.mxu0 %v203
    %1110 = vmatpush1.bf16.msra.mxu0 %v202
    %1111 = vmatprep.subr.bf16.mxu0 %v199
    %1112 = vmatpush1.bf16.msra.mxu0 %v198
    %1113 = vmatprep.subr.bf16.mxu0 %v195
    %1114 = vmatpush1.bf16.msra.mxu0 %v194
    %1115 = vmatprep.subr.bf16.mxu0 %v191
    %1116 = vmatpush1.bf16.msra.mxu0 %v190
    %1117 = vmatprep.subr.bf16.mxu0 %v187
    %1118 = vmatpush1.bf16.msra.mxu0 %v186
    %1119 = vmatprep.subr.bf16.mxu0 %v183
    %1120 = vmatpush1.bf16.msra.mxu0 %v182
    %1121 = vmatprep.subr.bf16.mxu0 %v179
    %1122 = vmatpush1.bf16.msra.mxu0 %v178
    %1123 = vmatprep.subr.bf16.mxu0 0
    %1124 = vmatpush2.bf16.msra.mxu0 0
    %1125 = vmatprep.subr.bf16.mxu0 0
    %1126 = vmatpush2.bf16.msra.mxu0 0
    %1127 = vmatprep.subr.bf16.mxu0 0
    %1128 = vmatpush2.bf16.msra.mxu0 0
    %1129 = vmatprep.subr.bf16.mxu0 0
    %1130 = vmatpush2.bf16.msra.mxu0 0
    %1131 = vmatprep.subr.bf16.mxu0 0
    %1132 = vmatpush2.bf16.msra.mxu0 0
    %1133 = vmatprep.subr.bf16.mxu0 0
    %1134 = vmatpush2.bf16.msra.mxu0 0
    %1135 = vmatprep.subr.bf16.mxu0 0
    %1136 = vmatpush2.bf16.msra.mxu0 0
    %1137 = vmatprep.subr.bf16.mxu0 0
    %1138 = vmatpush2.bf16.msra.mxu0 0
    %1139 = vmatprep.mubr.bf16.mxu0 0
    %1140 = vmatmul.mubr.bf16.gmra.mxu0 %v1065
    %v1141 = vpop.f32.mrf.mxu0
    %v1142 = vadd.f32 0.0, %v1141
    %v1143 = vpop.f32.mrf.mxu0
    %v1144 = vadd.f32 0.0, %v1143
    %v1145 = vpop.f32.mrf.mxu0
    %v1146 = vpop.f32.mrf.mxu0
    %1147 = vdwg.mxu0
    %v1148 = vadd.f32 %v1061, %v1101
    %v1149 = vadd.f32 %v1062, %v1103
    %v1150 = vadd.f32 %v1063, %v1142
    %v1151 = vadd.f32 %v1064, %v1144
    %v1152 = vxor.u32 %v1148, 2147483648
    %v1153 = vxor.u32 %v1149, 2147483648
    %v1154 = vxor.u32 %v1150, 2147483648
    %v1155 = vmul.f32 %v1152, 1.442695
    %v1156 = vpow.pop %v1155
    %v1157 = vmul.f32 %v1153, 1.442695
    %v1158 = vpow.pop %v1157
    %v1159 = vmul.f32 %v1154, 1.442695
    %v1160 = vpow.pop %v1159
    %v1161 = vadd.f32 %v1156, 1.0
    %v1162 = vadd.f32 %v1158, 1.0
    %v1163 = vadd.f32 %v1160, 1.0
    %v1164 = vrcp.pop %v1161
    %v1165 = vmul.f32 1.0, %v1164
    %v1166 = vrcp.pop %v1162
    %v1167 = vmul.f32 1.0, %v1166
    %v1168 = vrcp.pop %v1163
    %v1169 = vmul.f32 1.0, %v1168
    %v1170 = vtanh.pop %v1151
    %v1171 = vmul.f32 %v1167, %v1055
    %v1172 = vmul.f32 %v1165, %v1170
    %v1173 = vadd.f32 %v1171, %v1172
    %v1174 = vtanh.pop %v1173
    %v1175 = vmul.f32 %v1169, %v1174
    %1176 = vst [vmem:[#allocation2] sm:$0xff] %v1175
    %1177 = vst [vmem:[#allocation3] sm:$0xff] %v1173
    // Predicated region
    $region26: #{tpu_custom_call.1} parent=1 // pred_check
      %p1178 = pneg %p33
    $region27: #{tpu_custom_call.1} parent=1 // pred_check_branch
      %1180 = sbr.rel (%p1178) target = $region29
    $region28: #{tpu_custom_call.1} parent=1 // pred_region
      %v1181 = vld [vmem:[%s2] sm:$0xff]
      %v1182 = vld [vmem:[%s2 + $0x8] sm:$0xff]
      %v1183 = vld [vmem:[%s2 + $0x10] sm:$0xff]
      %v1184 = vld [vmem:[%s2 + $0x18] sm:$0xff]
      %v1185 = vld [vmem:[%s2 + $0x20] sm:$0xff]
      %v1186 = vld [vmem:[%s2 + $0x28] sm:$0xff]
      %v1187 = vld [vmem:[%s2 + $0x30] sm:$0xff]
      %v1188 = vld [vmem:[%s2 + $0x38] sm:$0xff]
      %v1189 = vld [vmem:[%s2 + $0x40] sm:$0xff]
      %v1190 = vld [vmem:[%s2 + $0x48] sm:$0xff]
      %v1191 = vld [vmem:[%s2 + $0x50] sm:$0xff]
      %v1192 = vld [vmem:[%s2 + $0x58] sm:$0xff]
      %v1193 = vld [vmem:[%s2 + $0x60] sm:$0xff]
      %v1194 = vld [vmem:[%s2 + $0x68] sm:$0xff]
      %v1195 = vld [vmem:[%s2 + $0x70] sm:$0xff]
      %v1196 = vld [vmem:[%s2 + $0x78] sm:$0xff]
      %v1197 = vld [vmem:[%s3] sm:$0x1]
      %v1199 = vlaneseq
      %v1200 = vshrl.u32 %v1199, 7
      %v1201 = vsub.s32 0, %v1200
      %v1202 = vrot.slane %v1197, %v1201
      %1204 = vmatprep.subr.mxu0 0.0
      %1205 = vmatpush1.msra.mxu0 %v1196
      %1206 = vmatprep.subr.mxu0 0.0
      %1207 = vmatpush1.msra.mxu0 %v1195
      %1208 = vmatprep.subr.mxu0 0.0
      %1209 = vmatpush1.msra.mxu0 %v1194
      %1210 = vmatprep.subr.mxu0 0.0
      %1211 = vmatpush1.msra.mxu0 %v1193
      %1212 = vmatprep.subr.mxu0 0.0
      %1213 = vmatpush1.msra.mxu0 %v1192
      %1214 = vmatprep.subr.mxu0 0.0
      %1215 = vmatpush1.msra.mxu0 %v1191
      %1216 = vmatprep.subr.mxu0 0.0
      %1217 = vmatpush1.msra.mxu0 %v1190
      %1218 = vmatprep.subr.mxu0 0.0
      %1219 = vmatpush1.msra.mxu0 %v1189
      %1220 = vmatprep.subr.mxu0 0.0
      %1221 = vmatpush1.msra.mxu0 %v1188
      %1222 = vmatprep.subr.mxu0 0.0
      %1223 = vmatpush1.msra.mxu0 %v1187
      %1224 = vmatprep.subr.mxu0 0.0
      %1225 = vmatpush1.msra.mxu0 %v1186
      %1226 = vmatprep.subr.mxu0 0.0
      %1227 = vmatpush1.msra.mxu0 %v1185
      %1228 = vmatprep.subr.mxu0 0.0
      %1229 = vmatpush1.msra.mxu0 %v1184
      %1230 = vmatprep.subr.mxu0 0.0
      %1231 = vmatpush1.msra.mxu0 %v1183
      %1232 = vmatprep.subr.mxu0 0.0
      %1233 = vmatpush1.msra.mxu0 %v1182
      %1234 = vmatprep.subr.mxu0 0.0
      %1235 = vmatpush1.msra.mxu0 %v1181
      %1236 = vmatprep.subr.mxu0 0.0
      %1237 = vmatpush2.msra.mxu0 0.0
      %1238 = vmatprep.subr.mxu0 0.0
      %1239 = vmatpush2.msra.mxu0 0.0
      %1240 = vmatprep.subr.mxu0 0.0
      %1241 = vmatpush2.msra.mxu0 0.0
      %1242 = vmatprep.subr.mxu0 0.0
      %1243 = vmatpush2.msra.mxu0 0.0
      %1244 = vmatprep.subr.mxu0 0.0
      %1245 = vmatpush2.msra.mxu0 0.0
      %1246 = vmatprep.subr.mxu0 0.0
      %1247 = vmatpush2.msra.mxu0 0.0
      %1248 = vmatprep.subr.mxu0 0.0
      %1249 = vmatpush2.msra.mxu0 0.0
      %1250 = vmatprep.subr.mxu0 0.0
      %1251 = vmatpush2.msra.mxu0 0.0
      %1252 = vmatprep.subr.mxu0 0.0
      %1253 = vmatpush2.msra.mxu0 0.0
      %1254 = vmatprep.subr.mxu0 0.0
      %1255 = vmatpush2.msra.mxu0 0.0
      %1256 = vmatprep.subr.mxu0 0.0
      %1257 = vmatpush2.msra.mxu0 0.0
      %1258 = vmatprep.subr.mxu0 0.0
      %1259 = vmatpush2.msra.mxu0 0.0
      %1260 = vmatprep.subr.mxu0 0.0
      %1261 = vmatpush2.msra.mxu0 0.0
      %1262 = vmatprep.subr.mxu0 0.0
      %1263 = vmatpush2.msra.mxu0 0.0
      %1264 = vmatprep.subr.mxu0 0.0
      %1265 = vmatpush2.msra.mxu0 0.0
      %1266 = vmatprep.subr.mxu0 0.0
      %1267 = vmatpush2.msra.mxu0 0.0
      %1268 = vmatprep.mubr.f32.mxu0 0.0
      %1269 = vmatmul.mubr.f32.gmra.mxu0 %v1175
      %v1270 = vpop.f32.mrf.mxu0
      %v1271 = vadd.f32 %v1202, %v1270
      %v1272 = vpop.f32.mrf.mxu0
      %1273 = vdwg.mxu0
      %vm1274 = vcmask 64512
      %1275 = vst.msk [vmem:[#allocation7] sm:$0xff] %vm1274, %v1271
    $region29: #{tpu_custom_call.1} parent=1 // pred_fallthru
      _
    // Predicated region
    $region30: #{tpu_custom_call.1} parent=1 // pred_check
      _
    $region31: #{tpu_custom_call.1} parent=1 // pred_check_branch
      %1277 = sbr.rel (0) target = $region33
    $region32: #{tpu_custom_call.1} parent=1 // pred_region
      %s1279 = ssub.s32 128, 128
      %1280 = vsyncadd [#allocation6], %s1279
      %s1282 = sshll.u32 [#allocation7], 4
      %s1283 = int_to_ptr.vmem [resolvable:$true] %s1282
      %1285 = dma.vmem_to_hbm [thread:$0]  %s1283, 128, %s4, [#allocation6]
    $region33: #{tpu_custom_call.1} parent=1 // pred_fallthru
      _
    // Predicated region
    $region34: #{tpu_custom_call.1} parent=1 // pred_check
      _
    $region35: #{tpu_custom_call.1} parent=1 // pred_check_branch
      %1287 = sbr.rel (0) target = $region37
    $region36: #{tpu_custom_call.1} parent=1 // pred_region
      %1288 = dma.done [#allocation6], 128
    $region37: #{tpu_custom_call.1} parent=1 // pred_fallthru
      _
    %1289 = vsyncpa [#allocation5], 1
    %1290 = vsyncpa [#allocation6], 1

</llo_original>
